<compile_context>
chip_gen: v7x
topology: tpu7x:2x2x1
jax: 0.10.0
libtpu: 0.0.40
codegen_flags: <defaults>
</compile_context>

<pallas_src>
import jax
import jax.numpy as jnp
from jax.experimental import pallas as pl
from jax.experimental.pallas import tpu as pltpu

# ---------------------------------------------------------------- model sizes
B, S, H = 2, 8, 32          # batch, seq len, hidden
NUM_HEADS = 4
D_HEAD = H // NUM_HEADS
FFN = 4 * H
VOCAB = 64
VPAD = 128                  # lane-dense padded LM-head width
N_SEG = 3
N_LAYERS = 2
LN_EPS = 1e-6
SCALE = 1.0 / (D_HEAD ** 0.5)
T = B * S                   # flattened (batch * seq) rows


# ---------------------------------------------------------------- kernel utils
def _layernorm(x, g, b):
    mu = jnp.mean(x, axis=-1, keepdims=True)
    var = jnp.mean(jnp.square(x - mu), axis=-1, keepdims=True)
    return (x - mu) * jax.lax.rsqrt(var + LN_EPS) * g + b


def _log_softmax(x):
    m = jnp.max(x, axis=-1, keepdims=True)
    lse = jnp.log(jnp.sum(jnp.exp(x - m), axis=-1, keepdims=True)) + m
    return x - lse


# ---------------------------------------------------------------- fused kernel
def bert_encoder_kernel(x_ref, bias_ref,
                        wqkv_ref, bqkv_ref, wo_ref, bo_ref, ln1g_ref, ln1b_ref,
                        w1_ref, b1_ref, w2_ref, b2_ref, ln2g_ref, ln2b_ref,
                        wlm_ref, blm_ref,
                        h_out_ref, lm_ref,
                        h_acc):
    """One grid step == one transformer layer; LM head fused into the last step."""
    l = pl.program_id(0)

    @pl.when(l == 0)
    def _():
        h_acc[...] = x_ref[...]                      # [T, H] f32 embedding

    h = h_acc[...]                                   # carried activation (VMEM)
    bias = bias_ref[...]                             # [B, S, S] additive key mask

    # ---- multi-head self-attention sub-layer (pre-LN residual) ----
    xn = _layernorm(h, ln1g_ref[...], ln1b_ref[...])
    # Single fused QKV projection; attention scale already folded into Q weights.
    qkv = jnp.dot(xn.astype(jnp.bfloat16), wqkv_ref[...],
                  preferred_element_type=jnp.float32) + bqkv_ref[...]   # [T, 3H]
    ctx_heads = []
    for hd in range(NUM_HEADS):                      # tiny S x S work only; no matmuls
        q = qkv[:, hd * D_HEAD:(hd + 1) * D_HEAD].reshape(B, S, D_HEAD)
        k = qkv[:, H + hd * D_HEAD: H + (hd + 1) * D_HEAD].reshape(B, S, D_HEAD)
        v = qkv[:, 2 * H + hd * D_HEAD: 2 * H + (hd + 1) * D_HEAD].reshape(B, S, D_HEAD)
        sc = jnp.einsum('bqd,bkd->bqk', q, k,
                        preferred_element_type=jnp.float32) + bias
        sc = sc - jnp.max(sc, axis=-1, keepdims=True)
        p = jnp.exp(sc)
        p = p * pl.reciprocal(jnp.sum(p, axis=-1, keepdims=True), approx=True)
        ctx = jnp.einsum('bqk,bkd->bqd', p, v, preferred_element_type=jnp.float32)
        ctx_heads.append(ctx.reshape(T, D_HEAD))
    # Concat heads -> one full-width output projection dot (K = H).
    ctx_all = jnp.concatenate(ctx_heads, axis=-1).astype(jnp.bfloat16)  # [T, H]
    h = h + jnp.dot(ctx_all, wo_ref[...],
                    preferred_element_type=jnp.float32) + bo_ref[...]

    # ---- position-wise feed-forward sub-layer (pre-LN residual, tanh-GELU) ----
    xn2 = _layernorm(h, ln2g_ref[...], ln2b_ref[...])
    ff = jax.nn.gelu(jnp.dot(xn2.astype(jnp.bfloat16), w1_ref[...],
                             preferred_element_type=jnp.float32) + b1_ref[...],
                     approximate=True)
    h = h + jnp.dot(ff.astype(jnp.bfloat16), w2_ref[...],
                    preferred_element_type=jnp.float32) + b2_ref[...]

    h_acc[...] = h

    # ---- final layer: emit encoder output + BERTMaskLM (padded, lane-dense) ----
    @pl.when(l == N_LAYERS - 1)
    def _():
        h_out_ref[...] = h
        logits = jnp.dot(h.astype(jnp.bfloat16), wlm_ref[...],
                         preferred_element_type=jnp.float32) + blm_ref[...]
        lm_ref[...] = _log_softmax(logits)           # pad cols carry -1e30 bias


# ---------------------------------------------------------------- param plumbing
def _linear(key, fan_in, fan_out):
    kw, kb = jax.random.split(key)
    bound = 1.0 / (fan_in ** 0.5)
    w = jax.random.uniform(kw, (fan_in, fan_out), jnp.float32, -bound, bound)
    b = jax.random.uniform(kb, (1, fan_out), jnp.float32, -bound, bound)
    return w, b


def init_params(key):
    keys = jax.random.split(key, 8 + 8 * N_LAYERS)
    p = {
        "tok_emb": 0.02 * jax.random.normal(keys[0], (VOCAB, H), jnp.float32),
        "seg_emb": 0.02 * jax.random.normal(keys[1], (N_SEG, H), jnp.float32),
        "pos_emb": 0.02 * jax.random.normal(keys[2], (S, H), jnp.float32),
    }
    layers = []
    for l in range(N_LAYERS):
        k = keys[8 + 8 * l: 8 + 8 * (l + 1)]
        wq, bq = _linear(k[0], H, H)
        wk, bk = _linear(k[1], H, H)
        wv, bv = _linear(k[2], H, H)
        wo, bo = _linear(k[3], H, H)
        w1, b1 = _linear(k[4], H, FFN)
        w2, b2 = _linear(k[5], FFN, H)
        ln1g, ln1b = jnp.ones((1, H), jnp.float32), jnp.zeros((1, H), jnp.float32)
        ln2g, ln2b = jnp.ones((1, H), jnp.float32), jnp.zeros((1, H), jnp.float32)
        layers.append((wq, bq, wk, bk, wv, bv, wo, bo,
                       ln1g, ln1b, w1, b1, w2, b2, ln2g, ln2b))
    p["layers"] = layers
    p["wlm"], p["blm"] = _linear(keys[3], H, VOCAB)    # BERTMaskLM.linear
    p["wns"], p["bns"] = _linear(keys[4], H, 2)        # BERTNextSentence.linear
    return p


def _pack_params(params):
    """Host-side (free) repacking: fused bf16 QKV, bf16 matmul weights, stacked
    per-layer slabs for the layer grid, lane-dense padded LM head."""
    layers = params["layers"]

    def stack(idx):
        return jnp.stack([lp[idx] for lp in layers], axis=0)

    wq, bq, wk, bk, wv, bv, wo, bo = (stack(i) for i in range(8))
    ln1g, ln1b, w1, b1, w2, b2, ln2g, ln2b = (stack(i) for i in range(8, 16))

    # Fused QKV, attention scale folded into the Q columns (scores = (x Wq s) k^T).
    wqkv = jnp.concatenate([wq * SCALE, wk, wv], axis=-1).astype(jnp.bfloat16)  # [L,H,3H]
    bqkv = jnp.concatenate([bq * SCALE, bk, bv], axis=-1)                        # [L,1,3H]

    # LM head padded to 128 lanes: zero pad-weights, -1e30 pad-bias (masked softmax).
    wlm = (jnp.zeros((H, VPAD), jnp.float32).at[:, :VOCAB]
           .set(params["wlm"]).astype(jnp.bfloat16))
    blm = jnp.full((1, VPAD), -1e30, jnp.float32).at[:, :VOCAB].set(params["blm"])

    return (wqkv, bqkv, wo.astype(jnp.bfloat16), bo, ln1g, ln1b,
            w1.astype(jnp.bfloat16), b1, w2.astype(jnp.bfloat16), b2, ln2g, ln2b,
            wlm, blm)


# ---------------------------------------------------------------- full forward
def bert_lm_forward(tokens, segment_label, params):
    # Embedding gathers stay in plain JAX (data-dependent gather = glue).
    emb = (params["tok_emb"][tokens]
           + params["pos_emb"][None, :, :]
           + params["seg_emb"][segment_label]).astype(jnp.float32)   # [B, S, H]
    x2d = emb.reshape(T, H)

    # Additive key-padding mask, pre-broadcast ONCE to its in-kernel add shape.
    key_mask = (tokens > 0).astype(jnp.float32)                      # [B, S]
    bias = jnp.broadcast_to(((key_mask - 1.0) * 1e9)[:, None, :], (B, S, S))

    packed = _pack_params(params)

    def rep2(shape):   # whole-array input, fetched once (constant block index)
        return pl.BlockSpec(shape, lambda l: (0,) * len(shape))

    def layer3(shape):  # per-layer slab from a [L, ...] stack (leading dim squeezed)
        return pl.BlockSpec((None,) + shape, lambda l: (l, 0, 0))

    in_specs = [
        rep2((T, H)),              # x2d
        rep2((B, S, S)),           # attention mask bias
        layer3((H, 3 * H)),        # wqkv (bf16)
        layer3((1, 3 * H)),        # bqkv
        layer3((H, H)),            # wo   (bf16)
        layer3((1, H)),            # bo
        layer3((1, H)),            # ln1g
        layer3((1, H)),            # ln1b
        layer3((H, FFN)),          # w1   (bf16)
        layer3((1, FFN)),          # b1
        layer3((FFN, H)),          # w2   (bf16)
        layer3((1, H)),            # b2
        layer3((1, H)),            # ln2g
        layer3((1, H)),            # ln2b
        rep2((H, VPAD)),           # wlm (padded, bf16)
        rep2((1, VPAD)),           # blm (padded, -1e30 on pad cols)
    ]
    out_specs = (pl.BlockSpec((T, H), lambda l: (0, 0)),
                 pl.BlockSpec((T, VPAD), lambda l: (0, 0)))
    out_shape = (jax.ShapeDtypeStruct((T, H), jnp.float32),
                 jax.ShapeDtypeStruct((T, VPAD), jnp.float32))

    h_final, lm_pad = pl.pallas_call(
        bert_encoder_kernel,
        out_shape=out_shape,
        grid=(N_LAYERS,),
        in_specs=in_specs,
        out_specs=out_specs,
        scratch_shapes=[pltpu.VMEM((T, H), jnp.float32)],   # layer-to-layer carry
        compiler_params=pltpu.CompilerParams(
            dimension_semantics=("arbitrary",),
            vmem_limit_bytes=32 * 1024 * 1024),
    )(x2d, bias, *packed)

    # BERTMaskLM output: drop the lane-padding columns.
    lm_logprobs = lm_pad.reshape(B, S, VPAD)[:, :, :VOCAB]

    # BERTNextSentence: tiny [B,H]x[H,2] head on the CLS rows only, in plain XLA
    # (avoids S-times redundant compute and a 2-lane masked store in the kernel).
    cls = h_final.reshape(B, S, H)[:, 0, :]
    ns_logprobs = jax.nn.log_softmax(cls @ params["wns"] + params["bns"], axis=-1)
    return ns_logprobs, lm_logprobs


# ---------------------------------------------------------------- main
if __name__ == "__main__":
    key = jax.random.PRNGKey(0)
    k_tok, k_param = jax.random.split(key)

    tokens = jax.random.randint(k_tok, (B, S), 1, VOCAB, dtype=jnp.int32)
    tokens = tokens.at[0, -2:].set(0)                  # some padding to exercise mask
    segment_label = jnp.concatenate(
        [jnp.ones((B, S // 2), jnp.int32), 2 * jnp.ones((B, S // 2), jnp.int32)],
        axis=-1)

    params = init_params(k_param)

    fwd = jax.jit(bert_lm_forward)
    ns_out, lm_out = fwd(tokens, segment_label, params)
    ns_out = jax.block_until_ready(ns_out)
    lm_out = jax.block_until_ready(lm_out)

    assert ns_out.shape == (B, 2) and lm_out.shape == (B, S, VOCAB)
    assert bool(jnp.all(jnp.isfinite(ns_out))) and bool(jnp.all(jnp.isfinite(lm_out)))
    # log-softmax rows should sum (in prob space) to ~1
    assert bool(jnp.allclose(jnp.sum(jnp.exp(ns_out), -1), 1.0, atol=1e-4))
    assert bool(jnp.allclose(jnp.sum(jnp.exp(lm_out), -1), 1.0, atol=1e-4))
    print("KERNEL_OK")
</pallas_src>

<mosaic_0001>
module attributes {stable_mosaic.version = 11 : i64} {
  func.func @bert_encoder_kernel(%arg0: i32, %arg1: memref<16x32xf32, #tpu.memory_space<vmem>>, %arg2: memref<2x8x8xf32, #tpu.memory_space<vmem>>, %arg3: memref<1x32x96xbf16, #tpu.memory_space<vmem>>, %arg4: memref<1x1x96xf32, #tpu.memory_space<vmem>>, %arg5: memref<1x32x32xbf16, #tpu.memory_space<vmem>>, %arg6: memref<1x1x32xf32, #tpu.memory_space<vmem>>, %arg7: memref<1x1x32xf32, #tpu.memory_space<vmem>>, %arg8: memref<1x1x32xf32, #tpu.memory_space<vmem>>, %arg9: memref<1x32x128xbf16, #tpu.memory_space<vmem>>, %arg10: memref<1x1x128xf32, #tpu.memory_space<vmem>>, %arg11: memref<1x128x32xbf16, #tpu.memory_space<vmem>>, %arg12: memref<1x1x32xf32, #tpu.memory_space<vmem>>, %arg13: memref<1x1x32xf32, #tpu.memory_space<vmem>>, %arg14: memref<1x1x32xf32, #tpu.memory_space<vmem>>, %arg15: memref<32x128xbf16, #tpu.memory_space<vmem>>, %arg16: memref<1x128xf32, #tpu.memory_space<vmem>>, %arg17: memref<16x32xf32, #tpu.memory_space<vmem>>, %arg18: memref<16x128xf32, #tpu.memory_space<vmem>>, %arg19: memref<16x32xf32, #tpu.memory_space<vmem>>) attributes {dimension_semantics = [#tpu.dimension_semantics<arbitrary>], iteration_bounds = array<i64: 2>, scalar_prefetch = 0 : i64, scratch_operands = 1 : i64, tpu.core_type = #tpu.core_type<tc>, window_params = [{pipeline_mode = #tpu.pipeline_mode<synchronous>, transform_indices = @transform_0, window_bounds = array<i64: 16, 32>}, {pipeline_mode = #tpu.pipeline_mode<synchronous>, transform_indices = @transform_1, window_bounds = array<i64: 2, 8, 8>}, {transform_indices = @transform_2, window_bounds = array<i64: 1, 32, 96>}, {transform_indices = @transform_3, window_bounds = array<i64: 1, 1, 96>}, {transform_indices = @transform_4, window_bounds = array<i64: 1, 32, 32>}, {transform_indices = @transform_5, window_bounds = array<i64: 1, 1, 32>}, {transform_indices = @transform_6, window_bounds = array<i64: 1, 1, 32>}, {transform_indices = @transform_7, window_bounds = array<i64: 1, 1, 32>}, {transform_indices = @transform_8, window_bounds = array<i64: 1, 32, 128>}, {transform_indices = @transform_9, window_bounds = array<i64: 1, 1, 128>}, {transform_indices = @transform_10, window_bounds = array<i64: 1, 128, 32>}, {transform_indices = @transform_11, window_bounds = array<i64: 1, 1, 32>}, {transform_indices = @transform_12, window_bounds = array<i64: 1, 1, 32>}, {transform_indices = @transform_13, window_bounds = array<i64: 1, 1, 32>}, {pipeline_mode = #tpu.pipeline_mode<synchronous>, transform_indices = @transform_14, window_bounds = array<i64: 32, 128>}, {pipeline_mode = #tpu.pipeline_mode<synchronous>, transform_indices = @transform_15, window_bounds = array<i64: 1, 128>}, {pipeline_mode = #tpu.pipeline_mode<synchronous>, transform_indices = @transform_16, window_bounds = array<i64: 16, 32>}, {pipeline_mode = #tpu.pipeline_mode<synchronous>, transform_indices = @transform_17, window_bounds = array<i64: 16, 128>}]} {
    %c0_i32 = arith.constant 0 : i32
    %0 = arith.cmpi eq, %arg0, %c0_i32 : i32
    %1 = arith.extui %0 : i1 to i32
    %c0_i32_0 = arith.constant 0 : i32
    %2 = arith.cmpi ne, %1, %c0_i32_0 : i32
    scf.if %2 {
      %c0_77 = arith.constant 0 : index
      %c0_78 = arith.constant 0 : index
      %189 = vector.load %arg1[%c0_77, %c0_78] : memref<16x32xf32, #tpu.memory_space<vmem>>, vector<16x32xf32>
      %c0_79 = arith.constant 0 : index
      %c0_80 = arith.constant 0 : index
      %190 = vector.load %arg19[%c0_79, %c0_80] : memref<16x32xf32, #tpu.memory_space<vmem>>, vector<16x32xf32>
      tpu.vector_store %arg19[%c0_79, %c0_80], %189 {strides = array<i32>} : memref<16x32xf32, #tpu.memory_space<vmem>>, vector<16x32xf32>,
    } else {
    }
    %c0 = arith.constant 0 : index
    %c0_1 = arith.constant 0 : index
    %3 = vector.load %arg19[%c0, %c0_1] : memref<16x32xf32, #tpu.memory_space<vmem>>, vector<16x32xf32>
    %c0_2 = arith.constant 0 : index
    %c0_3 = arith.constant 0 : index
    %c0_4 = arith.constant 0 : index
    %4 = vector.load %arg2[%c0_2, %c0_3, %c0_4] : memref<2x8x8xf32, #tpu.memory_space<vmem>>, vector<2x8x8xf32>
    %c0_5 = arith.constant 0 : index
    %c0_6 = arith.constant 0 : index
    %c0_7 = arith.constant 0 : index
    %5 = vector.load %arg7[%c0_5, %c0_6, %c0_7] : memref<1x1x32xf32, #tpu.memory_space<vmem>>, vector<1x1x32xf32>
    %6 = vector.shape_cast %5 : vector<1x1x32xf32> to vector<1x32xf32>
    %c0_8 = arith.constant 0 : index
    %c0_9 = arith.constant 0 : index
    %c0_10 = arith.constant 0 : index
    %7 = vector.load %arg8[%c0_8, %c0_9, %c0_10] : memref<1x1x32xf32, #tpu.memory_space<vmem>>, vector<1x1x32xf32>
    %8 = vector.shape_cast %7 : vector<1x1x32xf32> to vector<1x32xf32>
    %cst = arith.constant dense<0.000000e+00> : vector<16xf32>
    %9 = vector.multi_reduction <add>, %3, %cst [1] : vector<16x32xf32> to vector<16xf32>
    %10 = vector.shape_cast %9 : vector<16xf32> to vector<16x1xf32>
    %cst_11 = arith.constant 3.200000e+01 : f32
    %11 = vector.broadcast %cst_11 : f32 to vector<16x1xf32>
    %12 = arith.divf %10, %11 : vector<16x1xf32>
    %13 = vector.broadcast %12 : vector<16x1xf32> to vector<16x32xf32>
    %14 = arith.subf %3, %13 : vector<16x32xf32>
    %15 = arith.mulf %14, %14 : vector<16x32xf32>
    %cst_12 = arith.constant dense<0.000000e+00> : vector<16xf32>
    %16 = vector.multi_reduction <add>, %15, %cst_12 [1] : vector<16x32xf32> to vector<16xf32>
    %17 = vector.shape_cast %16 : vector<16xf32> to vector<16x1xf32>
    %cst_13 = arith.constant 3.200000e+01 : f32
    %18 = vector.broadcast %cst_13 : f32 to vector<16x1xf32>
    %19 = arith.divf %17, %18 : vector<16x1xf32>
    %20 = vector.broadcast %12 : vector<16x1xf32> to vector<16x32xf32>
    %21 = arith.subf %3, %20 : vector<16x32xf32>
    %cst_14 = arith.constant 9.99999997E-7 : f32
    %22 = vector.broadcast %cst_14 : f32 to vector<16x1xf32>
    %23 = arith.addf %19, %22 : vector<16x1xf32>
    %24 = math.rsqrt %23 : vector<16x1xf32>
    %25 = vector.broadcast %24 : vector<16x1xf32> to vector<16x32xf32>
    %26 = arith.mulf %21, %25 : vector<16x32xf32>
    %27 = vector.broadcast %6 : vector<1x32xf32> to vector<16x32xf32>
    %28 = arith.mulf %26, %27 : vector<16x32xf32>
    %29 = vector.broadcast %8 : vector<1x32xf32> to vector<16x32xf32>
    %30 = arith.addf %28, %29 : vector<16x32xf32>
    %31 = arith.truncf %30 : vector<16x32xf32> to vector<16x32xbf16>
    %c0_15 = arith.constant 0 : index
    %c0_16 = arith.constant 0 : index
    %c0_17 = arith.constant 0 : index
    %32 = vector.load %arg3[%c0_15, %c0_16, %c0_17] : memref<1x32x96xbf16, #tpu.memory_space<vmem>>, vector<1x32x96xbf16>
    %33 = vector.shape_cast %32 : vector<1x32x96xbf16> to vector<32x96xbf16>
    %cst_18 = arith.constant dense<0.000000e+00> : vector<16x96xf32>
    %34 = tpu.matmul %31, %33, %cst_18 {dimension_numbers = #tpu.dot_dimension_numbers<[1], [0], [0], [1], [0, 0, 1, 1], [], []>} : vector<16x32xbf16>, vector<32x96xbf16>, vector<16x96xf32> -> vector<16x96xf32>
    %c0_19 = arith.constant 0 : index
    %c0_20 = arith.constant 0 : index
    %c0_21 = arith.constant 0 : index
    %35 = vector.load %arg4[%c0_19, %c0_20, %c0_21] : memref<1x1x96xf32, #tpu.memory_space<vmem>>, vector<1x1x96xf32>
    %36 = vector.shape_cast %35 : vector<1x1x96xf32> to vector<1x96xf32>
    %37 = vector.broadcast %36 : vector<1x96xf32> to vector<16x96xf32>
    %38 = arith.addf %34, %37 : vector<16x96xf32>
    %39 = vector.extract_strided_slice %38 {offsets = [0, 0], sizes = [16, 8], strides = [1, 1]} : vector<16x96xf32> to vector<16x8xf32>
    %40 = vector.shape_cast %39 : vector<16x8xf32> to vector<2x8x8xf32>
    %41 = vector.extract_strided_slice %38 {offsets = [0, 32], sizes = [16, 8], strides = [1, 1]} : vector<16x96xf32> to vector<16x8xf32>
    %42 = vector.shape_cast %41 : vector<16x8xf32> to vector<2x8x8xf32>
    %43 = vector.extract_strided_slice %38 {offsets = [0, 64], sizes = [16, 8], strides = [1, 1]} : vector<16x96xf32> to vector<16x8xf32>
    %44 = vector.shape_cast %43 : vector<16x8xf32> to vector<2x8x8xf32>
    "tpu.trace_start"() <{level = 10 : i32, message = "bqd,bkd->bqk"}> : () -> ()
    %cst_22 = arith.constant dense<0.000000e+00> : vector<2x8x8xf32>
    %45 = tpu.matmul %40, %42, %cst_22 {dimension_numbers = #tpu.dot_dimension_numbers<[2], [2], [1], [1], [0, 0, 0, 1, 1, 1], [0], [0]>} : vector<2x8x8xf32>, vector<2x8x8xf32>, vector<2x8x8xf32> -> vector<2x8x8xf32>
    "tpu.trace_stop"() : () -> ()
    %46 = arith.addf %45, %4 : vector<2x8x8xf32>
    %cst_23 = arith.constant dense<0xFF800000> : vector<2x8xf32>
    %47 = vector.multi_reduction <maximumf>, %46, %cst_23 [2] : vector<2x8x8xf32> to vector<2x8xf32>
    %48 = vector.shape_cast %47 : vector<2x8xf32> to vector<2x8x1xf32>
    %49 = vector.broadcast %48 : vector<2x8x1xf32> to vector<2x8x8xf32>
    %50 = arith.subf %46, %49 : vector<2x8x8xf32>
    %51 = math.exp %50 : vector<2x8x8xf32>
    %cst_24 = arith.constant dense<0.000000e+00> : vector<2x8xf32>
    %52 = vector.multi_reduction <add>, %51, %cst_24 [2] : vector<2x8x8xf32> to vector<2x8xf32>
    %53 = vector.shape_cast %52 : vector<2x8xf32> to vector<2x8x1xf32>
    %54 = tpu.reciprocal %53 {approx = true} : vector<2x8x1xf32> -> vector<2x8x1xf32>
    %55 = vector.broadcast %54 : vector<2x8x1xf32> to vector<2x8x8xf32>
    %56 = arith.mulf %51, %55 : vector<2x8x8xf32>
    "tpu.trace_start"() <{level = 10 : i32, message = "bqk,bkd->bqd"}> : () -> ()
    %cst_25 = arith.constant dense<0.000000e+00> : vector<2x8x8xf32>
    %57 = tpu.matmul %56, %44, %cst_25 {dimension_numbers = #tpu.dot_dimension_numbers<[2], [1], [1], [2], [0, 0, 0, 1, 1, 2], [0], [0]>} : vector<2x8x8xf32>, vector<2x8x8xf32>, vector<2x8x8xf32> -> vector<2x8x8xf32>
    "tpu.trace_stop"() : () -> ()
    %58 = vector.shape_cast %57 : vector<2x8x8xf32> to vector<16x8xf32>
    %59 = vector.extract_strided_slice %38 {offsets = [0, 8], sizes = [16, 8], strides = [1, 1]} : vector<16x96xf32> to vector<16x8xf32>
    %60 = vector.shape_cast %59 : vector<16x8xf32> to vector<2x8x8xf32>
    %61 = vector.extract_strided_slice %38 {offsets = [0, 40], sizes = [16, 8], strides = [1, 1]} : vector<16x96xf32> to vector<16x8xf32>
    %62 = vector.shape_cast %61 : vector<16x8xf32> to vector<2x8x8xf32>
    %63 = vector.extract_strided_slice %38 {offsets = [0, 72], sizes = [16, 8], strides = [1, 1]} : vector<16x96xf32> to vector<16x8xf32>
    %64 = vector.shape_cast %63 : vector<16x8xf32> to vector<2x8x8xf32>
    "tpu.trace_start"() <{level = 10 : i32, message = "bqd,bkd->bqk"}> : () -> ()
    %cst_26 = arith.constant dense<0.000000e+00> : vector<2x8x8xf32>
    %65 = tpu.matmul %60, %62, %cst_26 {dimension_numbers = #tpu.dot_dimension_numbers<[2], [2], [1], [1], [0, 0, 0, 1, 1, 1], [0], [0]>} : vector<2x8x8xf32>, vector<2x8x8xf32>, vector<2x8x8xf32> -> vector<2x8x8xf32>
    "tpu.trace_stop"() : () -> ()
    %66 = arith.addf %65, %4 : vector<2x8x8xf32>
    %cst_27 = arith.constant dense<0xFF800000> : vector<2x8xf32>
    %67 = vector.multi_reduction <maximumf>, %66, %cst_27 [2] : vector<2x8x8xf32> to vector<2x8xf32>
    %68 = vector.shape_cast %67 : vector<2x8xf32> to vector<2x8x1xf32>
    %69 = vector.broadcast %68 : vector<2x8x1xf32> to vector<2x8x8xf32>
    %70 = arith.subf %66, %69 : vector<2x8x8xf32>
    %71 = math.exp %70 : vector<2x8x8xf32>
    %cst_28 = arith.constant dense<0.000000e+00> : vector<2x8xf32>
    %72 = vector.multi_reduction <add>, %71, %cst_28 [2] : vector<2x8x8xf32> to vector<2x8xf32>
    %73 = vector.shape_cast %72 : vector<2x8xf32> to vector<2x8x1xf32>
    %74 = tpu.reciprocal %73 {approx = true} : vector<2x8x1xf32> -> vector<2x8x1xf32>
    %75 = vector.broadcast %74 : vector<2x8x1xf32> to vector<2x8x8xf32>
    %76 = arith.mulf %71, %75 : vector<2x8x8xf32>
    "tpu.trace_start"() <{level = 10 : i32, message = "bqk,bkd->bqd"}> : () -> ()
    %cst_29 = arith.constant dense<0.000000e+00> : vector<2x8x8xf32>
    %77 = tpu.matmul %76, %64, %cst_29 {dimension_numbers = #tpu.dot_dimension_numbers<[2], [1], [1], [2], [0, 0, 0, 1, 1, 2], [0], [0]>} : vector<2x8x8xf32>, vector<2x8x8xf32>, vector<2x8x8xf32> -> vector<2x8x8xf32>
    "tpu.trace_stop"() : () -> ()
    %78 = vector.shape_cast %77 : vector<2x8x8xf32> to vector<16x8xf32>
    %79 = vector.extract_strided_slice %38 {offsets = [0, 16], sizes = [16, 8], strides = [1, 1]} : vector<16x96xf32> to vector<16x8xf32>
    %80 = vector.shape_cast %79 : vector<16x8xf32> to vector<2x8x8xf32>
    %81 = vector.extract_strided_slice %38 {offsets = [0, 48], sizes = [16, 8], strides = [1, 1]} : vector<16x96xf32> to vector<16x8xf32>
    %82 = vector.shape_cast %81 : vector<16x8xf32> to vector<2x8x8xf32>
    %83 = vector.extract_strided_slice %38 {offsets = [0, 80], sizes = [16, 8], strides = [1, 1]} : vector<16x96xf32> to vector<16x8xf32>
    %84 = vector.shape_cast %83 : vector<16x8xf32> to vector<2x8x8xf32>
    "tpu.trace_start"() <{level = 10 : i32, message = "bqd,bkd->bqk"}> : () -> ()
    %cst_30 = arith.constant dense<0.000000e+00> : vector<2x8x8xf32>
    %85 = tpu.matmul %80, %82, %cst_30 {dimension_numbers = #tpu.dot_dimension_numbers<[2], [2], [1], [1], [0, 0, 0, 1, 1, 1], [0], [0]>} : vector<2x8x8xf32>, vector<2x8x8xf32>, vector<2x8x8xf32> -> vector<2x8x8xf32>
    "tpu.trace_stop"() : () -> ()
    %86 = arith.addf %85, %4 : vector<2x8x8xf32>
    %cst_31 = arith.constant dense<0xFF800000> : vector<2x8xf32>
    %87 = vector.multi_reduction <maximumf>, %86, %cst_31 [2] : vector<2x8x8xf32> to vector<2x8xf32>
    %88 = vector.shape_cast %87 : vector<2x8xf32> to vector<2x8x1xf32>
    %89 = vector.broadcast %88 : vector<2x8x1xf32> to vector<2x8x8xf32>
    %90 = arith.subf %86, %89 : vector<2x8x8xf32>
    %91 = math.exp %90 : vector<2x8x8xf32>
    %cst_32 = arith.constant dense<0.000000e+00> : vector<2x8xf32>
    %92 = vector.multi_reduction <add>, %91, %cst_32 [2] : vector<2x8x8xf32> to vector<2x8xf32>
    %93 = vector.shape_cast %92 : vector<2x8xf32> to vector<2x8x1xf32>
    %94 = tpu.reciprocal %93 {approx = true} : vector<2x8x1xf32> -> vector<2x8x1xf32>
    %95 = vector.broadcast %94 : vector<2x8x1xf32> to vector<2x8x8xf32>
    %96 = arith.mulf %91, %95 : vector<2x8x8xf32>
    "tpu.trace_start"() <{level = 10 : i32, message = "bqk,bkd->bqd"}> : () -> ()
    %cst_33 = arith.constant dense<0.000000e+00> : vector<2x8x8xf32>
    %97 = tpu.matmul %96, %84, %cst_33 {dimension_numbers = #tpu.dot_dimension_numbers<[2], [1], [1], [2], [0, 0, 0, 1, 1, 2], [0], [0]>} : vector<2x8x8xf32>, vector<2x8x8xf32>, vector<2x8x8xf32> -> vector<2x8x8xf32>
    "tpu.trace_stop"() : () -> ()
    %98 = vector.shape_cast %97 : vector<2x8x8xf32> to vector<16x8xf32>
    %99 = vector.extract_strided_slice %38 {offsets = [0, 24], sizes = [16, 8], strides = [1, 1]} : vector<16x96xf32> to vector<16x8xf32>
    %100 = vector.shape_cast %99 : vector<16x8xf32> to vector<2x8x8xf32>
    %101 = vector.extract_strided_slice %38 {offsets = [0, 56], sizes = [16, 8], strides = [1, 1]} : vector<16x96xf32> to vector<16x8xf32>
    %102 = vector.shape_cast %101 : vector<16x8xf32> to vector<2x8x8xf32>
    %103 = vector.extract_strided_slice %38 {offsets = [0, 88], sizes = [16, 8], strides = [1, 1]} : vector<16x96xf32> to vector<16x8xf32>
    %104 = vector.shape_cast %103 : vector<16x8xf32> to vector<2x8x8xf32>
    "tpu.trace_start"() <{level = 10 : i32, message = "bqd,bkd->bqk"}> : () -> ()
    %cst_34 = arith.constant dense<0.000000e+00> : vector<2x8x8xf32>
    %105 = tpu.matmul %100, %102, %cst_34 {dimension_numbers = #tpu.dot_dimension_numbers<[2], [2], [1], [1], [0, 0, 0, 1, 1, 1], [0], [0]>} : vector<2x8x8xf32>, vector<2x8x8xf32>, vector<2x8x8xf32> -> vector<2x8x8xf32>
    "tpu.trace_stop"() : () -> ()
    %106 = arith.addf %105, %4 : vector<2x8x8xf32>
    %cst_35 = arith.constant dense<0xFF800000> : vector<2x8xf32>
    %107 = vector.multi_reduction <maximumf>, %106, %cst_35 [2] : vector<2x8x8xf32> to vector<2x8xf32>
    %108 = vector.shape_cast %107 : vector<2x8xf32> to vector<2x8x1xf32>
    %109 = vector.broadcast %108 : vector<2x8x1xf32> to vector<2x8x8xf32>
    %110 = arith.subf %106, %109 : vector<2x8x8xf32>
    %111 = math.exp %110 : vector<2x8x8xf32>
    %cst_36 = arith.constant dense<0.000000e+00> : vector<2x8xf32>
    %112 = vector.multi_reduction <add>, %111, %cst_36 [2] : vector<2x8x8xf32> to vector<2x8xf32>
    %113 = vector.shape_cast %112 : vector<2x8xf32> to vector<2x8x1xf32>
    %114 = tpu.reciprocal %113 {approx = true} : vector<2x8x1xf32> -> vector<2x8x1xf32>
    %115 = vector.broadcast %114 : vector<2x8x1xf32> to vector<2x8x8xf32>
    %116 = arith.mulf %111, %115 : vector<2x8x8xf32>
    "tpu.trace_start"() <{level = 10 : i32, message = "bqk,bkd->bqd"}> : () -> ()
    %cst_37 = arith.constant dense<0.000000e+00> : vector<2x8x8xf32>
    %117 = tpu.matmul %116, %104, %cst_37 {dimension_numbers = #tpu.dot_dimension_numbers<[2], [1], [1], [2], [0, 0, 0, 1, 1, 2], [0], [0]>} : vector<2x8x8xf32>, vector<2x8x8xf32>, vector<2x8x8xf32> -> vector<2x8x8xf32>
    "tpu.trace_stop"() : () -> ()
    %118 = vector.shape_cast %117 : vector<2x8x8xf32> to vector<16x8xf32>
    %119 = tpu.concatenate %58, %78, %98, %118 in 1 : vector<16x8xf32>, vector<16x8xf32>, vector<16x8xf32>, vector<16x8xf32> -> vector<16x32xf32>
    %120 = arith.truncf %119 : vector<16x32xf32> to vector<16x32xbf16>
    %c0_38 = arith.constant 0 : index
    %c0_39 = arith.constant 0 : index
    %c0_40 = arith.constant 0 : index
    %121 = vector.load %arg5[%c0_38, %c0_39, %c0_40] : memref<1x32x32xbf16, #tpu.memory_space<vmem>>, vector<1x32x32xbf16>
    %122 = vector.shape_cast %121 : vector<1x32x32xbf16> to vector<32x32xbf16>
    %cst_41 = arith.constant dense<0.000000e+00> : vector<16x32xf32>
    %123 = tpu.matmul %120, %122, %cst_41 {dimension_numbers = #tpu.dot_dimension_numbers<[1], [0], [0], [1], [0, 0, 1, 1], [], []>} : vector<16x32xbf16>, vector<32x32xbf16>, vector<16x32xf32> -> vector<16x32xf32>
    %124 = arith.addf %3, %123 : vector<16x32xf32>
    %c0_42 = arith.constant 0 : index
    %c0_43 = arith.constant 0 : index
    %c0_44 = arith.constant 0 : index
    %125 = vector.load %arg6[%c0_42, %c0_43, %c0_44] : memref<1x1x32xf32, #tpu.memory_space<vmem>>, vector<1x1x32xf32>
    %126 = vector.shape_cast %125 : vector<1x1x32xf32> to vector<1x32xf32>
    %127 = vector.broadcast %126 : vector<1x32xf32> to vector<16x32xf32>
    %128 = arith.addf %124, %127 : vector<16x32xf32>
    %c0_45 = arith.constant 0 : index
    %c0_46 = arith.constant 0 : index
    %c0_47 = arith.constant 0 : index
    %129 = vector.load %arg13[%c0_45, %c0_46, %c0_47] : memref<1x1x32xf32, #tpu.memory_space<vmem>>, vector<1x1x32xf32>
    %130 = vector.shape_cast %129 : vector<1x1x32xf32> to vector<1x32xf32>
    %c0_48 = arith.constant 0 : index
    %c0_49 = arith.constant 0 : index
    %c0_50 = arith.constant 0 : index
    %131 = vector.load %arg14[%c0_48, %c0_49, %c0_50] : memref<1x1x32xf32, #tpu.memory_space<vmem>>, vector<1x1x32xf32>
    %132 = vector.shape_cast %131 : vector<1x1x32xf32> to vector<1x32xf32>
    %cst_51 = arith.constant dense<0.000000e+00> : vector<16xf32>
    %133 = vector.multi_reduction <add>, %128, %cst_51 [1] : vector<16x32xf32> to vector<16xf32>
    %134 = vector.shape_cast %133 : vector<16xf32> to vector<16x1xf32>
    %cst_52 = arith.constant 3.200000e+01 : f32
    %135 = vector.broadcast %cst_52 : f32 to vector<16x1xf32>
    %136 = arith.divf %134, %135 : vector<16x1xf32>
    %137 = vector.broadcast %136 : vector<16x1xf32> to vector<16x32xf32>
    %138 = arith.subf %128, %137 : vector<16x32xf32>
    %139 = arith.mulf %138, %138 : vector<16x32xf32>
    %cst_53 = arith.constant dense<0.000000e+00> : vector<16xf32>
    %140 = vector.multi_reduction <add>, %139, %cst_53 [1] : vector<16x32xf32> to vector<16xf32>
    %141 = vector.shape_cast %140 : vector<16xf32> to vector<16x1xf32>
    %cst_54 = arith.constant 3.200000e+01 : f32
    %142 = vector.broadcast %cst_54 : f32 to vector<16x1xf32>
    %143 = arith.divf %141, %142 : vector<16x1xf32>
    %144 = vector.broadcast %136 : vector<16x1xf32> to vector<16x32xf32>
    %145 = arith.subf %128, %144 : vector<16x32xf32>
    %cst_55 = arith.constant 9.99999997E-7 : f32
    %146 = vector.broadcast %cst_55 : f32 to vector<16x1xf32>
    %147 = arith.addf %143, %146 : vector<16x1xf32>
    %148 = math.rsqrt %147 : vector<16x1xf32>
    %149 = vector.broadcast %148 : vector<16x1xf32> to vector<16x32xf32>
    %150 = arith.mulf %145, %149 : vector<16x32xf32>
    %151 = vector.broadcast %130 : vector<1x32xf32> to vector<16x32xf32>
    %152 = arith.mulf %150, %151 : vector<16x32xf32>
    %153 = vector.broadcast %132 : vector<1x32xf32> to vector<16x32xf32>
    %154 = arith.addf %152, %153 : vector<16x32xf32>
    %155 = arith.truncf %154 : vector<16x32xf32> to vector<16x32xbf16>
    %c0_56 = arith.constant 0 : index
    %c0_57 = arith.constant 0 : index
    %c0_58 = arith.constant 0 : index
    %156 = vector.load %arg9[%c0_56, %c0_57, %c0_58] : memref<1x32x128xbf16, #tpu.memory_space<vmem>>, vector<1x32x128xbf16>
    %157 = vector.shape_cast %156 : vector<1x32x128xbf16> to vector<32x128xbf16>
    %cst_59 = arith.constant dense<0.000000e+00> : vector<16x128xf32>
    %158 = tpu.matmul %155, %157, %cst_59 {dimension_numbers = #tpu.dot_dimension_numbers<[1], [0], [0], [1], [0, 0, 1, 1], [], []>} : vector<16x32xbf16>, vector<32x128xbf16>, vector<16x128xf32> -> vector<16x128xf32>
    %c0_60 = arith.constant 0 : index
    %c0_61 = arith.constant 0 : index
    %c0_62 = arith.constant 0 : index
    %159 = vector.load %arg10[%c0_60, %c0_61, %c0_62] : memref<1x1x128xf32, #tpu.memory_space<vmem>>, vector<1x1x128xf32>
    %160 = vector.shape_cast %159 : vector<1x1x128xf32> to vector<1x128xf32>
    %161 = vector.broadcast %160 : vector<1x128xf32> to vector<16x128xf32>
    %162 = arith.addf %158, %161 : vector<16x128xf32>
    %163 = arith.mulf %162, %162 : vector<16x128xf32>
    %164 = arith.mulf %162, %163 : vector<16x128xf32>
    %cst_63 = arith.constant 4.471500e-02 : f32
    %165 = vector.broadcast %cst_63 : f32 to vector<16x128xf32>
    %166 = arith.mulf %165, %164 : vector<16x128xf32>
    %167 = arith.addf %162, %166 : vector<16x128xf32>
    %cst_64 = arith.constant 0.797884583 : f32
    %168 = vector.broadcast %cst_64 : f32 to vector<16x128xf32>
    %169 = arith.mulf %168, %167 : vector<16x128xf32>
    %170 = math.tanh %169 : vector<16x128xf32>
    %cst_65 = arith.constant 1.000000e+00 : f32
    %171 = vector.broadcast %cst_65 : f32 to vector<16x128xf32>
    %172 = arith.addf %171, %170 : vector<16x128xf32>
    %cst_66 = arith.constant 5.000000e-01 : f32
    %173 = vector.broadcast %cst_66 : f32 to vector<16x128xf32>
    %174 = arith.mulf %173, %172 : vector<16x128xf32>
    %175 = arith.mulf %162, %174 : vector<16x128xf32>
    %176 = arith.truncf %175 : vector<16x128xf32> to vector<16x128xbf16>
    %c0_67 = arith.constant 0 : index
    %c0_68 = arith.constant 0 : index
    %c0_69 = arith.constant 0 : index
    %177 = vector.load %arg11[%c0_67, %c0_68, %c0_69] : memref<1x128x32xbf16, #tpu.memory_space<vmem>>, vector<1x128x32xbf16>
    %178 = vector.shape_cast %177 : vector<1x128x32xbf16> to vector<128x32xbf16>
    %cst_70 = arith.constant dense<0.000000e+00> : vector<16x32xf32>
    %179 = tpu.matmul %176, %178, %cst_70 {dimension_numbers = #tpu.dot_dimension_numbers<[1], [0], [0], [1], [0, 0, 1, 1], [], []>} : vector<16x128xbf16>, vector<128x32xbf16>, vector<16x32xf32> -> vector<16x32xf32>
    %180 = arith.addf %128, %179 : vector<16x32xf32>
    %c0_71 = arith.constant 0 : index
    %c0_72 = arith.constant 0 : index
    %c0_73 = arith.constant 0 : index
    %181 = vector.load %arg12[%c0_71, %c0_72, %c0_73] : memref<1x1x32xf32, #tpu.memory_space<vmem>>, vector<1x1x32xf32>
    %182 = vector.shape_cast %181 : vector<1x1x32xf32> to vector<1x32xf32>
    %183 = vector.broadcast %182 : vector<1x32xf32> to vector<16x32xf32>
    %184 = arith.addf %180, %183 : vector<16x32xf32>
    %c0_74 = arith.constant 0 : index
    %c0_75 = arith.constant 0 : index
    %185 = vector.load %arg19[%c0_74, %c0_75] : memref<16x32xf32, #tpu.memory_space<vmem>>, vector<16x32xf32>
    tpu.vector_store %arg19[%c0_74, %c0_75], %184 {strides = array<i32>} : memref<16x32xf32, #tpu.memory_space<vmem>>, vector<16x32xf32>,
    %c1_i32 = arith.constant 1 : i32
    %186 = arith.cmpi eq, %arg0, %c1_i32 : i32
    %187 = arith.extui %186 : i1 to i32
    %c0_i32_76 = arith.constant 0 : i32
    %188 = arith.cmpi ne, %187, %c0_i32_76 : i32
    scf.if %188 {
      %c0_77 = arith.constant 0 : index
      %c0_78 = arith.constant 0 : index
      %189 = vector.load %arg17[%c0_77, %c0_78] : memref<16x32xf32, #tpu.memory_space<vmem>>, vector<16x32xf32>
      tpu.vector_store %arg17[%c0_77, %c0_78], %184 {strides = array<i32>} : memref<16x32xf32, #tpu.memory_space<vmem>>, vector<16x32xf32>,
      %190 = arith.truncf %184 : vector<16x32xf32> to vector<16x32xbf16>
      %c0_79 = arith.constant 0 : index
      %c0_80 = arith.constant 0 : index
      %191 = vector.load %arg15[%c0_79, %c0_80] : memref<32x128xbf16, #tpu.memory_space<vmem>>, vector<32x128xbf16>
      %cst_81 = arith.constant dense<0.000000e+00> : vector<16x128xf32>
      %192 = tpu.matmul %190, %191, %cst_81 {dimension_numbers = #tpu.dot_dimension_numbers<[1], [0], [0], [1], [0, 0, 1, 1], [], []>} : vector<16x32xbf16>, vector<32x128xbf16>, vector<16x128xf32> -> vector<16x128xf32>
      %c0_82 = arith.constant 0 : index
      %c0_83 = arith.constant 0 : index
      %193 = vector.load %arg16[%c0_82, %c0_83] : memref<1x128xf32, #tpu.memory_space<vmem>>, vector<1x128xf32>
      %194 = vector.broadcast %193 : vector<1x128xf32> to vector<16x128xf32>
      %195 = arith.addf %192, %194 : vector<16x128xf32>
      %cst_84 = arith.constant dense<0xFF800000> : vector<16xf32>
      %196 = vector.multi_reduction <maximumf>, %195, %cst_84 [1] : vector<16x128xf32> to vector<16xf32>
      %197 = vector.shape_cast %196 : vector<16xf32> to vector<16x1xf32>
      %198 = vector.broadcast %197 : vector<16x1xf32> to vector<16x128xf32>
      %199 = arith.subf %195, %198 : vector<16x128xf32>
      %200 = math.exp %199 : vector<16x128xf32>
      %cst_85 = arith.constant dense<0.000000e+00> : vector<16xf32>
      %201 = vector.multi_reduction <add>, %200, %cst_85 [1] : vector<16x128xf32> to vector<16xf32>
      %202 = vector.shape_cast %201 : vector<16xf32> to vector<16x1xf32>
      %203 = math.log %202 : vector<16x1xf32>
      %204 = arith.addf %203, %197 : vector<16x1xf32>
      %205 = vector.broadcast %204 : vector<16x1xf32> to vector<16x128xf32>
      %206 = arith.subf %195, %205 : vector<16x128xf32>
      %c0_86 = arith.constant 0 : index
      %c0_87 = arith.constant 0 : index
      %207 = vector.load %arg18[%c0_86, %c0_87] : memref<16x128xf32, #tpu.memory_space<vmem>>, vector<16x128xf32>
      tpu.vector_store %arg18[%c0_86, %c0_87], %206 {strides = array<i32>} : memref<16x128xf32, #tpu.memory_space<vmem>>, vector<16x128xf32>,
    } else {
    }
    return
  }
  func.func @transform_0(%arg0: i32) -> (i32, i32) {
    %c0_i32 = arith.constant 0 : i32
    %c0_i32_0 = arith.constant 0 : i32
    %c0_i32_1 = arith.constant 0 : i32
    return %c0_i32, %c0_i32_0 : i32, i32
  }
  func.func @transform_1(%arg0: i32) -> (i32, i32, i32) {
    %c0_i32 = arith.constant 0 : i32
    %c0_i32_0 = arith.constant 0 : i32
    %c0_i32_1 = arith.constant 0 : i32
    %c0_i32_2 = arith.constant 0 : i32
    return %c0_i32, %c0_i32_0, %c0_i32_1 : i32, i32, i32
  }
  func.func @transform_2(%arg0: i32) -> (i32, i32, i32) {
    %c0_i32 = arith.constant 0 : i32
    %c0_i32_0 = arith.constant 0 : i32
    %c0_i32_1 = arith.constant 0 : i32
    return %arg0, %c0_i32, %c0_i32_0 : i32, i32, i32
  }
  func.func @transform_3(%arg0: i32) -> (i32, i32, i32) {
    %c0_i32 = arith.constant 0 : i32
    %c0_i32_0 = arith.constant 0 : i32
    %c0_i32_1 = arith.constant 0 : i32
    return %arg0, %c0_i32, %c0_i32_0 : i32, i32, i32
  }
  func.func @transform_4(%arg0: i32) -> (i32, i32, i32) {
    %c0_i32 = arith.constant 0 : i32
    %c0_i32_0 = arith.constant 0 : i32
    %c0_i32_1 = arith.constant 0 : i32
    return %arg0, %c0_i32, %c0_i32_0 : i32, i32, i32
  }
  func.func @transform_5(%arg0: i32) -> (i32, i32, i32) {
    %c0_i32 = arith.constant 0 : i32
    %c0_i32_0 = arith.constant 0 : i32
    %c0_i32_1 = arith.constant 0 : i32
    return %arg0, %c0_i32, %c0_i32_0 : i32, i32, i32
  }
  func.func @transform_6(%arg0: i32) -> (i32, i32, i32) {
    %c0_i32 = arith.constant 0 : i32
    %c0_i32_0 = arith.constant 0 : i32
    %c0_i32_1 = arith.constant 0 : i32
    return %arg0, %c0_i32, %c0_i32_0 : i32, i32, i32
  }
  func.func @transform_7(%arg0: i32) -> (i32, i32, i32) {
    %c0_i32 = arith.constant 0 : i32
    %c0_i32_0 = arith.constant 0 : i32
    %c0_i32_1 = arith.constant 0 : i32
    return %arg0, %c0_i32, %c0_i32_0 : i32, i32, i32
  }
  func.func @transform_8(%arg0: i32) -> (i32, i32, i32) {
    %c0_i32 = arith.constant 0 : i32
    %c0_i32_0 = arith.constant 0 : i32
    %c0_i32_1 = arith.constant 0 : i32
    return %arg0, %c0_i32, %c0_i32_0 : i32, i32, i32
  }
  func.func @transform_9(%arg0: i32) -> (i32, i32, i32) {
    %c0_i32 = arith.constant 0 : i32
    %c0_i32_0 = arith.constant 0 : i32
    %c0_i32_1 = arith.constant 0 : i32
    return %arg0, %c0_i32, %c0_i32_0 : i32, i32, i32
  }
  func.func @transform_10(%arg0: i32) -> (i32, i32, i32) {
    %c0_i32 = arith.constant 0 : i32
    %c0_i32_0 = arith.constant 0 : i32
    %c0_i32_1 = arith.constant 0 : i32
    return %arg0, %c0_i32, %c0_i32_0 : i32, i32, i32
  }
  func.func @transform_11(%arg0: i32) -> (i32, i32, i32) {
    %c0_i32 = arith.constant 0 : i32
    %c0_i32_0 = arith.constant 0 : i32
    %c0_i32_1 = arith.constant 0 : i32
    return %arg0, %c0_i32, %c0_i32_0 : i32, i32, i32
  }
  func.func @transform_12(%arg0: i32) -> (i32, i32, i32) {
    %c0_i32 = arith.constant 0 : i32
    %c0_i32_0 = arith.constant 0 : i32
    %c0_i32_1 = arith.constant 0 : i32
    return %arg0, %c0_i32, %c0_i32_0 : i32, i32, i32
  }
  func.func @transform_13(%arg0: i32) -> (i32, i32, i32) {
    %c0_i32 = arith.constant 0 : i32
    %c0_i32_0 = arith.constant 0 : i32
    %c0_i32_1 = arith.constant 0 : i32
    return %arg0, %c0_i32, %c0_i32_0 : i32, i32, i32
  }
  func.func @transform_14(%arg0: i32) -> (i32, i32) {
    %c0_i32 = arith.constant 0 : i32
    %c0_i32_0 = arith.constant 0 : i32
    %c0_i32_1 = arith.constant 0 : i32
    return %c0_i32, %c0_i32_0 : i32, i32
  }
  func.func @transform_15(%arg0: i32) -> (i32, i32) {
    %c0_i32 = arith.constant 0 : i32
    %c0_i32_0 = arith.constant 0 : i32
    %c0_i32_1 = arith.constant 0 : i32
    return %c0_i32, %c0_i32_0 : i32, i32
  }
  func.func @transform_16(%arg0: i32) -> (i32, i32) {
    %c0_i32 = arith.constant 0 : i32
    %c0_i32_0 = arith.constant 0 : i32
    %c0_i32_1 = arith.constant 0 : i32
    return %c0_i32, %c0_i32_0 : i32, i32
  }
  func.func @transform_17(%arg0: i32) -> (i32, i32) {
    %c0_i32 = arith.constant 0 : i32
    %c0_i32_0 = arith.constant 0 : i32
    %c0_i32_1 = arith.constant 0 : i32
    return %c0_i32, %c0_i32_0 : i32, i32
  }
}

</mosaic_0001>

<llo_original>
// kernel: bert_lm_forward.1
$region0: #{bert_lm_forward.1}
  #allocation0 [shape = 'u32[]', space=smem, size = 0x4, offset = 0x4, fixed_abs, tag = 'smem constant byte address 0x4 - core index']
  #allocation1 [shape = 'u32[144,128]{1,0:T(1,128)}', space=vmem, size = 0x12000, scoped, tag = 'internal scratch']
  #allocation2 [shape = 'f32[16,32]{1,0:T(8,128)}', space=vmem, size = 0x2000, scoped, tag = 'scratch operand']
  %s0 = inlined_call_operand.vmem [shape: f32[16,32], index: 0, kind: input, shape index: {}]
  %s1 = inlined_call_operand.vmem [shape: f32[2,8,8], index: 1, kind: input, shape index: {}]
  %s2 = inlined_call_operand.vmem [shape: bf16[2,32,96], index: 2, kind: input, shape index: {}]
  %s3 = inlined_call_operand.vmem [shape: f32[2,1,96], index: 3, kind: input, shape index: {}]
  %s4 = inlined_call_operand.vmem [shape: bf16[2,32,32], index: 4, kind: input, shape index: {}]
  %s5 = inlined_call_operand.vmem [shape: f32[2,1,32], index: 5, kind: input, shape index: {}]
  %s6 = inlined_call_operand.vmem [shape: f32[2,1,32], index: 6, kind: input, shape index: {}]
  %s7 = inlined_call_operand.vmem [shape: f32[2,1,32], index: 7, kind: input, shape index: {}]
  %s8 = inlined_call_operand.vmem [shape: bf16[2,32,128], index: 8, kind: input, shape index: {}]
  %s9 = inlined_call_operand.vmem [shape: f32[2,1,128], index: 9, kind: input, shape index: {}]
  %s10 = inlined_call_operand.vmem [shape: bf16[2,128,32], index: 10, kind: input, shape index: {}]
  %s11 = inlined_call_operand.vmem [shape: f32[2,1,32], index: 11, kind: input, shape index: {}]
  %s12 = inlined_call_operand.vmem [shape: f32[2,1,32], index: 12, kind: input, shape index: {}]
  %s13 = inlined_call_operand.vmem [shape: f32[2,1,32], index: 13, kind: input, shape index: {}]
  %s14 = inlined_call_operand.vmem [shape: bf16[32,128], index: 14, kind: input, shape index: {}]
  %s15 = inlined_call_operand.vmem [shape: f32[1,128], index: 15, kind: input, shape index: {}]
  %s16 = inlined_call_operand.vmem [shape: f32[16,32], index: 16, kind: output, shape index: {0}]
  %s17 = inlined_call_operand.hbm [shape: f32[16,128], index: 17, kind: output, shape index: {1}]
  %18 = xla_tuple %s16, %s17
  %s19 = sld [smem:[#allocation0]]
  $region113: #{bert_lm_forward.1} parent=0
    _
  %s21 = ssub.s32 1, %s19
  %s22 = scalar_select 0, %s21, %s19
  $region1: #{bert_lm_forward.1} parent=0
    #allocation3 [shape = 'u8[8192]{0}', space=vmem, size = 0x2000, scoped, tag = 'output window, operand 1, single buffered']
    #allocation4 [shape = 's32[2]{0}', space=sflag, size = 0x8, scoped, tag = 'scoped memory for bert_lm_forward.1']
    %23 = vsyncpa [#allocation4], 0
    loop: start=0, step=1, limit=4
    $region2: #{bert_lm_forward.1} parent=1 // loop_pre_header
      _
    $region3: #{bert_lm_forward.1} parent=1 // loop_header
      %s25 = sphi 0, %s29
      %p26 = scmp.ge.s32.totalorder %s25, 4
      %s33 = sphi 0, %s33
      %s35 = sphi 0, %s33
      %s36 = sphi 0, %s35
      %s50 = sphi 0, %s36
      %s54 = sphi 0, %s54
      %s56 = sphi 0, %s54
      %s57 = sphi 0, %s56
      %s71 = sphi 0, %s57
      %s77 = sphi 0, %s79
      %s80 = sphi 0, %s77
      %s81 = sphi 0, %s80
      %s97 = sphi 0, %s81
      %s103 = sphi 0, %s105
      %s106 = sphi 0, %s103
      %s107 = sphi 0, %s106
      %s123 = sphi 0, %s107
      %s129 = sphi 0, %s131
      %s132 = sphi 0, %s129
      %s133 = sphi 0, %s132
      %s149 = sphi 0, %s133
      %s155 = sphi 0, %s157
      %s158 = sphi 0, %s155
      %s159 = sphi 0, %s158
      %s175 = sphi 0, %s159
      %s181 = sphi 0, %s183
      %s184 = sphi 0, %s181
      %s185 = sphi 0, %s184
      %s201 = sphi 0, %s185
      %s207 = sphi 0, %s209
      %s210 = sphi 0, %s207
      %s211 = sphi 0, %s210
      %s227 = sphi 0, %s211
      %s233 = sphi 0, %s235
      %s236 = sphi 0, %s233
      %s237 = sphi 0, %s236
      %s253 = sphi 0, %s237
      %s259 = sphi 0, %s261
      %s262 = sphi 0, %s259
      %s263 = sphi 0, %s262
      %s279 = sphi 0, %s263
      %s285 = sphi 0, %s287
      %s288 = sphi 0, %s285
      %s289 = sphi 0, %s288
      %s305 = sphi 0, %s289
      %s311 = sphi 0, %s313
      %s314 = sphi 0, %s311
      %s315 = sphi 0, %s314
      %s331 = sphi 0, %s315
      %s337 = sphi 0, %s339
      %s340 = sphi 0, %s337
      %s341 = sphi 0, %s340
      %s357 = sphi 0, %s341
      %s363 = sphi 0, %s365
      %s366 = sphi 0, %s363
      %s367 = sphi 0, %s366
      %s383 = sphi 0, %s367
      %s387 = sphi 0, %s387
      %s389 = sphi 0, %s387
      %s390 = sphi 0, %s389
      %s404 = sphi 0, %s390
      %s408 = sphi 0, %s408
      %s410 = sphi 0, %s408
      %s411 = sphi 0, %s410
      %s425 = sphi 0, %s411
      %s429 = sphi 0, %s429
      %s431 = sphi 0, %s429
      %s432 = sphi 0, %s431
      %s446 = sphi 0, %s432
      %s450 = sphi 0, %s450
      %s452 = sphi 0, %s450
      %s453 = sphi 0, %s452
      %s467 = sphi 0, %s453
    $region4: #{bert_lm_forward.1} parent=1 // loop_header_branch
      %28 = sbr.rel (%p26) target = $region8
    $region5: #{bert_lm_forward.1} parent=1 // loop_body
      %s30 = ssub.s32 %s25, 1
      %s31 = ssub.s32 %s25, 2
      %s32 = sadd.s32 %s25, 1
      %s34 = sadd.s32 %s33, 1
      %p37 = scmp.eq.s32.totalorder %s25, 1
      %p38 = scmp.ne.s32.totalorder %s33, %s35
      %p39 = scmp.eq.s32.totalorder %s25, 0
      %p40 = por %p38, %p39
      %p41 = scmp.ne.s32.totalorder %s33, %s35
      %p42 = scmp.eq.s32.totalorder %s30, 1
      %p43 = por %p41, %p42
      %p44 = scmp.ne.s32.totalorder %s35, %s36
      %p45 = scmp.eq.s32.totalorder %s30, 0
      %p46 = por %p44, %p45
      %p47 = scmp.ne.s32.totalorder %s35, %s36
      %p48 = scmp.eq.s32.totalorder %s31, 1
      %p49 = por %p47, %p48
      %p51 = scmp.ne.s32.totalorder %s36, %s50
      %p52 = scmp.eq.s32.totalorder %s31, 0
      %p53 = por %p51, %p52
      %s55 = sadd.s32 %s54, 1
      %p58 = scmp.eq.s32.totalorder %s25, 1
      %p59 = scmp.ne.s32.totalorder %s54, %s56
      %p60 = scmp.eq.s32.totalorder %s25, 0
      %p61 = por %p59, %p60
      %p62 = scmp.ne.s32.totalorder %s54, %s56
      %p63 = scmp.eq.s32.totalorder %s30, 1
      %p64 = por %p62, %p63
      %p65 = scmp.ne.s32.totalorder %s56, %s57
      %p66 = scmp.eq.s32.totalorder %s30, 0
      %p67 = por %p65, %p66
      %p68 = scmp.ne.s32.totalorder %s56, %s57
      %p69 = scmp.eq.s32.totalorder %s31, 1
      %p70 = por %p68, %p69
      %p72 = scmp.ne.s32.totalorder %s57, %s71
      %p73 = scmp.eq.s32.totalorder %s31, 0
      %p74 = por %p72, %p73
      %s75 = ssub.s32 %s25, %s32
      %p76 = scmp.eq.s32.totalorder %s75, 0
      %s78 = sadd.s32 %s77, 1
      %s79 = scalar_select %p76, %s77, %s78
      %p82 = pneg %p76
      %p83 = scmp.eq.s32.totalorder %s25, 1
      %p84 = por %p82, %p83
      %p85 = scmp.ne.s32.totalorder %s77, %s80
      %p86 = scmp.eq.s32.totalorder %s25, 0
      %p87 = por %p85, %p86
      %p88 = scmp.ne.s32.totalorder %s77, %s80
      %p89 = scmp.eq.s32.totalorder %s30, 1
      %p90 = por %p88, %p89
      %p91 = scmp.ne.s32.totalorder %s80, %s81
      %p92 = scmp.eq.s32.totalorder %s30, 0
      %p93 = por %p91, %p92
      %p94 = scmp.ne.s32.totalorder %s80, %s81
      %p95 = scmp.eq.s32.totalorder %s31, 1
      %p96 = por %p94, %p95
      %p98 = scmp.ne.s32.totalorder %s81, %s97
      %p99 = scmp.eq.s32.totalorder %s31, 0
      %p100 = por %p98, %p99
      %s101 = ssub.s32 %s25, %s32
      %p102 = scmp.eq.s32.totalorder %s101, 0
      %s104 = sadd.s32 %s103, 1
      %s105 = scalar_select %p102, %s103, %s104
      %p108 = pneg %p102
      %p109 = scmp.eq.s32.totalorder %s25, 1
      %p110 = por %p108, %p109
      %p111 = scmp.ne.s32.totalorder %s103, %s106
      %p112 = scmp.eq.s32.totalorder %s25, 0
      %p113 = por %p111, %p112
      %p114 = scmp.ne.s32.totalorder %s103, %s106
      %p115 = scmp.eq.s32.totalorder %s30, 1
      %p116 = por %p114, %p115
      %p117 = scmp.ne.s32.totalorder %s106, %s107
      %p118 = scmp.eq.s32.totalorder %s30, 0
      %p119 = por %p117, %p118
      %p120 = scmp.ne.s32.totalorder %s106, %s107
      %p121 = scmp.eq.s32.totalorder %s31, 1
      %p122 = por %p120, %p121
      %p124 = scmp.ne.s32.totalorder %s107, %s123
      %p125 = scmp.eq.s32.totalorder %s31, 0
      %p126 = por %p124, %p125
      %s127 = ssub.s32 %s25, %s32
      %p128 = scmp.eq.s32.totalorder %s127, 0
      %s130 = sadd.s32 %s129, 1
      %s131 = scalar_select %p128, %s129, %s130
      %p134 = pneg %p128
      %p135 = scmp.eq.s32.totalorder %s25, 1
      %p136 = por %p134, %p135
      %p137 = scmp.ne.s32.totalorder %s129, %s132
      %p138 = scmp.eq.s32.totalorder %s25, 0
      %p139 = por %p137, %p138
      %p140 = scmp.ne.s32.totalorder %s129, %s132
      %p141 = scmp.eq.s32.totalorder %s30, 1
      %p142 = por %p140, %p141
      %p143 = scmp.ne.s32.totalorder %s132, %s133
      %p144 = scmp.eq.s32.totalorder %s30, 0
      %p145 = por %p143, %p144
      %p146 = scmp.ne.s32.totalorder %s132, %s133
      %p147 = scmp.eq.s32.totalorder %s31, 1
      %p148 = por %p146, %p147
      %p150 = scmp.ne.s32.totalorder %s133, %s149
      %p151 = scmp.eq.s32.totalorder %s31, 0
      %p152 = por %p150, %p151
      %s153 = ssub.s32 %s25, %s32
      %p154 = scmp.eq.s32.totalorder %s153, 0
      %s156 = sadd.s32 %s155, 1
      %s157 = scalar_select %p154, %s155, %s156
      %p160 = pneg %p154
      %p161 = scmp.eq.s32.totalorder %s25, 1
      %p162 = por %p160, %p161
      %p163 = scmp.ne.s32.totalorder %s155, %s158
      %p164 = scmp.eq.s32.totalorder %s25, 0
      %p165 = por %p163, %p164
      %p166 = scmp.ne.s32.totalorder %s155, %s158
      %p167 = scmp.eq.s32.totalorder %s30, 1
      %p168 = por %p166, %p167
      %p169 = scmp.ne.s32.totalorder %s158, %s159
      %p170 = scmp.eq.s32.totalorder %s30, 0
      %p171 = por %p169, %p170
      %p172 = scmp.ne.s32.totalorder %s158, %s159
      %p173 = scmp.eq.s32.totalorder %s31, 1
      %p174 = por %p172, %p173
      %p176 = scmp.ne.s32.totalorder %s159, %s175
      %p177 = scmp.eq.s32.totalorder %s31, 0
      %p178 = por %p176, %p177
      %s179 = ssub.s32 %s25, %s32
      %p180 = scmp.eq.s32.totalorder %s179, 0
      %s182 = sadd.s32 %s181, 1
      %s183 = scalar_select %p180, %s181, %s182
      %p186 = pneg %p180
      %p187 = scmp.eq.s32.totalorder %s25, 1
      %p188 = por %p186, %p187
      %p189 = scmp.ne.s32.totalorder %s181, %s184
      %p190 = scmp.eq.s32.totalorder %s25, 0
      %p191 = por %p189, %p190
      %p192 = scmp.ne.s32.totalorder %s181, %s184
      %p193 = scmp.eq.s32.totalorder %s30, 1
      %p194 = por %p192, %p193
      %p195 = scmp.ne.s32.totalorder %s184, %s185
      %p196 = scmp.eq.s32.totalorder %s30, 0
      %p197 = por %p195, %p196
      %p198 = scmp.ne.s32.totalorder %s184, %s185
      %p199 = scmp.eq.s32.totalorder %s31, 1
      %p200 = por %p198, %p199
      %p202 = scmp.ne.s32.totalorder %s185, %s201
      %p203 = scmp.eq.s32.totalorder %s31, 0
      %p204 = por %p202, %p203
      %s205 = ssub.s32 %s25, %s32
      %p206 = scmp.eq.s32.totalorder %s205, 0
      %s208 = sadd.s32 %s207, 1
      %s209 = scalar_select %p206, %s207, %s208
      %p212 = pneg %p206
      %p213 = scmp.eq.s32.totalorder %s25, 1
      %p214 = por %p212, %p213
      %p215 = scmp.ne.s32.totalorder %s207, %s210
      %p216 = scmp.eq.s32.totalorder %s25, 0
      %p217 = por %p215, %p216
      %p218 = scmp.ne.s32.totalorder %s207, %s210
      %p219 = scmp.eq.s32.totalorder %s30, 1
      %p220 = por %p218, %p219
      %p221 = scmp.ne.s32.totalorder %s210, %s211
      %p222 = scmp.eq.s32.totalorder %s30, 0
      %p223 = por %p221, %p222
      %p224 = scmp.ne.s32.totalorder %s210, %s211
      %p225 = scmp.eq.s32.totalorder %s31, 1
      %p226 = por %p224, %p225
      %p228 = scmp.ne.s32.totalorder %s211, %s227
      %p229 = scmp.eq.s32.totalorder %s31, 0
      %p230 = por %p228, %p229
      %s231 = ssub.s32 %s25, %s32
      %p232 = scmp.eq.s32.totalorder %s231, 0
      %s234 = sadd.s32 %s233, 1
      %s235 = scalar_select %p232, %s233, %s234
      %p238 = pneg %p232
      %p239 = scmp.eq.s32.totalorder %s25, 1
      %p240 = por %p238, %p239
      %p241 = scmp.ne.s32.totalorder %s233, %s236
      %p242 = scmp.eq.s32.totalorder %s25, 0
      %p243 = por %p241, %p242
      %p244 = scmp.ne.s32.totalorder %s233, %s236
      %p245 = scmp.eq.s32.totalorder %s30, 1
      %p246 = por %p244, %p245
      %p247 = scmp.ne.s32.totalorder %s236, %s237
      %p248 = scmp.eq.s32.totalorder %s30, 0
      %p249 = por %p247, %p248
      %p250 = scmp.ne.s32.totalorder %s236, %s237
      %p251 = scmp.eq.s32.totalorder %s31, 1
      %p252 = por %p250, %p251
      %p254 = scmp.ne.s32.totalorder %s237, %s253
      %p255 = scmp.eq.s32.totalorder %s31, 0
      %p256 = por %p254, %p255
      %s257 = ssub.s32 %s25, %s32
      %p258 = scmp.eq.s32.totalorder %s257, 0
      %s260 = sadd.s32 %s259, 1
      %s261 = scalar_select %p258, %s259, %s260
      %p264 = pneg %p258
      %p265 = scmp.eq.s32.totalorder %s25, 1
      %p266 = por %p264, %p265
      %p267 = scmp.ne.s32.totalorder %s259, %s262
      %p268 = scmp.eq.s32.totalorder %s25, 0
      %p269 = por %p267, %p268
      %p270 = scmp.ne.s32.totalorder %s259, %s262
      %p271 = scmp.eq.s32.totalorder %s30, 1
      %p272 = por %p270, %p271
      %p273 = scmp.ne.s32.totalorder %s262, %s263
      %p274 = scmp.eq.s32.totalorder %s30, 0
      %p275 = por %p273, %p274
      %p276 = scmp.ne.s32.totalorder %s262, %s263
      %p277 = scmp.eq.s32.totalorder %s31, 1
      %p278 = por %p276, %p277
      %p280 = scmp.ne.s32.totalorder %s263, %s279
      %p281 = scmp.eq.s32.totalorder %s31, 0
      %p282 = por %p280, %p281
      %s283 = ssub.s32 %s25, %s32
      %p284 = scmp.eq.s32.totalorder %s283, 0
      %s286 = sadd.s32 %s285, 1
      %s287 = scalar_select %p284, %s285, %s286
      %p290 = pneg %p284
      %p291 = scmp.eq.s32.totalorder %s25, 1
      %p292 = por %p290, %p291
      %p293 = scmp.ne.s32.totalorder %s285, %s288
      %p294 = scmp.eq.s32.totalorder %s25, 0
      %p295 = por %p293, %p294
      %p296 = scmp.ne.s32.totalorder %s285, %s288
      %p297 = scmp.eq.s32.totalorder %s30, 1
      %p298 = por %p296, %p297
      %p299 = scmp.ne.s32.totalorder %s288, %s289
      %p300 = scmp.eq.s32.totalorder %s30, 0
      %p301 = por %p299, %p300
      %p302 = scmp.ne.s32.totalorder %s288, %s289
      %p303 = scmp.eq.s32.totalorder %s31, 1
      %p304 = por %p302, %p303
      %p306 = scmp.ne.s32.totalorder %s289, %s305
      %p307 = scmp.eq.s32.totalorder %s31, 0
      %p308 = por %p306, %p307
      %s309 = ssub.s32 %s25, %s32
      %p310 = scmp.eq.s32.totalorder %s309, 0
      %s312 = sadd.s32 %s311, 1
      %s313 = scalar_select %p310, %s311, %s312
      %p316 = pneg %p310
      %p317 = scmp.eq.s32.totalorder %s25, 1
      %p318 = por %p316, %p317
      %p319 = scmp.ne.s32.totalorder %s311, %s314
      %p320 = scmp.eq.s32.totalorder %s25, 0
      %p321 = por %p319, %p320
      %p322 = scmp.ne.s32.totalorder %s311, %s314
      %p323 = scmp.eq.s32.totalorder %s30, 1
      %p324 = por %p322, %p323
      %p325 = scmp.ne.s32.totalorder %s314, %s315
      %p326 = scmp.eq.s32.totalorder %s30, 0
      %p327 = por %p325, %p326
      %p328 = scmp.ne.s32.totalorder %s314, %s315
      %p329 = scmp.eq.s32.totalorder %s31, 1
      %p330 = por %p328, %p329
      %p332 = scmp.ne.s32.totalorder %s315, %s331
      %p333 = scmp.eq.s32.totalorder %s31, 0
      %p334 = por %p332, %p333
      %s335 = ssub.s32 %s25, %s32
      %p336 = scmp.eq.s32.totalorder %s335, 0
      %s338 = sadd.s32 %s337, 1
      %s339 = scalar_select %p336, %s337, %s338
      %p342 = pneg %p336
      %p343 = scmp.eq.s32.totalorder %s25, 1
      %p344 = por %p342, %p343
      %p345 = scmp.ne.s32.totalorder %s337, %s340
      %p346 = scmp.eq.s32.totalorder %s25, 0
      %p347 = por %p345, %p346
      %p348 = scmp.ne.s32.totalorder %s337, %s340
      %p349 = scmp.eq.s32.totalorder %s30, 1
      %p350 = por %p348, %p349
      %p351 = scmp.ne.s32.totalorder %s340, %s341
      %p352 = scmp.eq.s32.totalorder %s30, 0
      %p353 = por %p351, %p352
      %p354 = scmp.ne.s32.totalorder %s340, %s341
      %p355 = scmp.eq.s32.totalorder %s31, 1
      %p356 = por %p354, %p355
      %p358 = scmp.ne.s32.totalorder %s341, %s357
      %p359 = scmp.eq.s32.totalorder %s31, 0
      %p360 = por %p358, %p359
      %s361 = ssub.s32 %s25, %s32
      %p362 = scmp.eq.s32.totalorder %s361, 0
      %s364 = sadd.s32 %s363, 1
      %s365 = scalar_select %p362, %s363, %s364
      %p368 = pneg %p362
      %p369 = scmp.eq.s32.totalorder %s25, 1
      %p370 = por %p368, %p369
      %p371 = scmp.ne.s32.totalorder %s363, %s366
      %p372 = scmp.eq.s32.totalorder %s25, 0
      %p373 = por %p371, %p372
      %p374 = scmp.ne.s32.totalorder %s363, %s366
      %p375 = scmp.eq.s32.totalorder %s30, 1
      %p376 = por %p374, %p375
      %p377 = scmp.ne.s32.totalorder %s366, %s367
      %p378 = scmp.eq.s32.totalorder %s30, 0
      %p379 = por %p377, %p378
      %p380 = scmp.ne.s32.totalorder %s366, %s367
      %p381 = scmp.eq.s32.totalorder %s31, 1
      %p382 = por %p380, %p381
      %p384 = scmp.ne.s32.totalorder %s367, %s383
      %p385 = scmp.eq.s32.totalorder %s31, 0
      %p386 = por %p384, %p385
      %s388 = sadd.s32 %s387, 1
      %p391 = scmp.eq.s32.totalorder %s25, 1
      %p392 = scmp.ne.s32.totalorder %s387, %s389
      %p393 = scmp.eq.s32.totalorder %s25, 0
      %p394 = por %p392, %p393
      %p395 = scmp.ne.s32.totalorder %s387, %s389
      %p396 = scmp.eq.s32.totalorder %s30, 1
      %p397 = por %p395, %p396
      %p398 = scmp.ne.s32.totalorder %s389, %s390
      %p399 = scmp.eq.s32.totalorder %s30, 0
      %p400 = por %p398, %p399
      %p401 = scmp.ne.s32.totalorder %s389, %s390
      %p402 = scmp.eq.s32.totalorder %s31, 1
      %p403 = por %p401, %p402
      %p405 = scmp.ne.s32.totalorder %s390, %s404
      %p406 = scmp.eq.s32.totalorder %s31, 0
      %p407 = por %p405, %p406
      %s409 = sadd.s32 %s408, 1
      %p412 = scmp.eq.s32.totalorder %s25, 1
      %p413 = scmp.ne.s32.totalorder %s408, %s410
      %p414 = scmp.eq.s32.totalorder %s25, 0
      %p415 = por %p413, %p414
      %p416 = scmp.ne.s32.totalorder %s408, %s410
      %p417 = scmp.eq.s32.totalorder %s30, 1
      %p418 = por %p416, %p417
      %p419 = scmp.ne.s32.totalorder %s410, %s411
      %p420 = scmp.eq.s32.totalorder %s30, 0
      %p421 = por %p419, %p420
      %p422 = scmp.ne.s32.totalorder %s410, %s411
      %p423 = scmp.eq.s32.totalorder %s31, 1
      %p424 = por %p422, %p423
      %p426 = scmp.ne.s32.totalorder %s411, %s425
      %p427 = scmp.eq.s32.totalorder %s31, 0
      %p428 = por %p426, %p427
      %s430 = sadd.s32 %s429, 1
      %p433 = scmp.eq.s32.totalorder %s25, 1
      %p434 = scmp.ne.s32.totalorder %s429, %s431
      %p435 = scmp.eq.s32.totalorder %s25, 0
      %p436 = por %p434, %p435
      %p437 = scmp.ne.s32.totalorder %s429, %s431
      %p438 = scmp.eq.s32.totalorder %s30, 1
      %p439 = por %p437, %p438
      %p440 = scmp.ne.s32.totalorder %s431, %s432
      %p441 = scmp.eq.s32.totalorder %s30, 0
      %p442 = por %p440, %p441
      %p443 = scmp.ne.s32.totalorder %s431, %s432
      %p444 = scmp.eq.s32.totalorder %s31, 1
      %p445 = por %p443, %p444
      %p447 = scmp.ne.s32.totalorder %s432, %s446
      %p448 = scmp.eq.s32.totalorder %s31, 0
      %p449 = por %p447, %p448
      %s451 = sadd.s32 %s450, 1
      %p454 = scmp.eq.s32.totalorder %s25, 1
      %p455 = scmp.ne.s32.totalorder %s450, %s452
      %p456 = scmp.eq.s32.totalorder %s25, 0
      %p457 = por %p455, %p456
      %p458 = scmp.ne.s32.totalorder %s450, %s452
      %p459 = scmp.eq.s32.totalorder %s30, 1
      %p460 = por %p458, %p459
      %p461 = scmp.ne.s32.totalorder %s452, %s453
      %p462 = scmp.eq.s32.totalorder %s30, 0
      %p463 = por %p461, %p462
      %p464 = scmp.ne.s32.totalorder %s452, %s453
      %p465 = scmp.eq.s32.totalorder %s31, 1
      %p466 = por %p464, %p465
      %p468 = scmp.ne.s32.totalorder %s453, %s467
      %p469 = scmp.eq.s32.totalorder %s31, 0
      %p470 = por %p468, %p469
      %p471 = scmp.le.s32.totalorder 1, %s25
      %p472 = scmp.lt.s32.totalorder %s25, 3
      %p473 = pnand %p471, %p472
      %p474 = pneg %p473
      // Predicated region
      $region9: #{bert_lm_forward.1} parent=5 // pred_check
        _
      $region10: #{bert_lm_forward.1} parent=5 // pred_check_branch
        %476 = sbr.rel (%p473) target = $region12
      $region11: #{bert_lm_forward.1} parent=5 // pred_region
        %s477 = ssub.s32 %s25, 1
        // Predicated region
        $region13: #{bert_lm_forward.1} parent=11 // pred_check
          %p478 = pneg %p46
        $region14: #{bert_lm_forward.1} parent=11 // pred_check_branch
          %480 = sbr.rel (%p478) target = $region16
        $region15: #{bert_lm_forward.1} parent=11 // pred_region
          _
        $region16: #{bert_lm_forward.1} parent=11 // pred_fallthru
          _
        // Predicated region
        $region17: #{bert_lm_forward.1} parent=11 // pred_check
          %p481 = pneg %p67
        $region18: #{bert_lm_forward.1} parent=11 // pred_check_branch
          %483 = sbr.rel (%p481) target = $region20
        $region19: #{bert_lm_forward.1} parent=11 // pred_region
          _
        $region20: #{bert_lm_forward.1} parent=11 // pred_fallthru
          _
        // Predicated region
        $region21: #{bert_lm_forward.1} parent=11 // pred_check
          %p484 = pneg %p400
        $region22: #{bert_lm_forward.1} parent=11 // pred_check_branch
          %486 = sbr.rel (%p484) target = $region24
        $region23: #{bert_lm_forward.1} parent=11 // pred_region
          _
        $region24: #{bert_lm_forward.1} parent=11 // pred_fallthru
          _
        // Predicated region
        $region25: #{bert_lm_forward.1} parent=11 // pred_check
          %p487 = pneg %p421
        $region26: #{bert_lm_forward.1} parent=11 // pred_check_branch
          %489 = sbr.rel (%p487) target = $region28
        $region27: #{bert_lm_forward.1} parent=11 // pred_region
          _
        $region28: #{bert_lm_forward.1} parent=11 // pred_fallthru
          _
      $region12: #{bert_lm_forward.1} parent=5 // pred_fallthru
        _
      %p490 = scmp.lt.s32.totalorder %s25, 2
      // Predicated region
      $region29: #{bert_lm_forward.1} parent=5 // pred_check
        %p491 = pneg %p490
      $region30: #{bert_lm_forward.1} parent=5 // pred_check_branch
        %493 = sbr.rel (%p491) target = $region32
      $region31: #{bert_lm_forward.1} parent=5 // pred_region
        // Predicated region
        $region33: #{bert_lm_forward.1} parent=31 // pred_check
          %p494 = pneg %p87
        $region34: #{bert_lm_forward.1} parent=31 // pred_check_branch
          %496 = sbr.rel (%p494) target = $region36
        $region35: #{bert_lm_forward.1} parent=31 // pred_region
          %p497 = scmp.lt.s32.totalorder %s25, 1
          %s498 = scalar_select %p497, %s25, 1
          %s499 = smul.addr %s498, 4
          %s500 = smul.addr %s499, 4
          %s501 = scalar_lea.vmem %s2, %s500
        $region36: #{bert_lm_forward.1} parent=31 // pred_fallthru
          _
        // Predicated region
        $region37: #{bert_lm_forward.1} parent=31 // pred_check
          %p502 = pneg %p113
        $region38: #{bert_lm_forward.1} parent=31 // pred_check_branch
          %504 = sbr.rel (%p502) target = $region40
        $region39: #{bert_lm_forward.1} parent=31 // pred_region
          %p505 = scmp.lt.s32.totalorder %s25, 1
          %s506 = scalar_select %p505, %s25, 1
          %s507 = scalar_lea.vmem %s3, %s506
        $region40: #{bert_lm_forward.1} parent=31 // pred_fallthru
          _
        // Predicated region
        $region41: #{bert_lm_forward.1} parent=31 // pred_check
          %p508 = pneg %p139
        $region42: #{bert_lm_forward.1} parent=31 // pred_check_branch
          %510 = sbr.rel (%p508) target = $region44
        $region43: #{bert_lm_forward.1} parent=31 // pred_region
          %p511 = scmp.lt.s32.totalorder %s25, 1
          %s512 = scalar_select %p511, %s25, 1
          %s513 = smul.addr %s512, 4
          %s514 = smul.addr %s513, 4
          %s515 = scalar_lea.vmem %s4, %s514
        $region44: #{bert_lm_forward.1} parent=31 // pred_fallthru
          _
        // Predicated region
        $region45: #{bert_lm_forward.1} parent=31 // pred_check
          %p516 = pneg %p165
        $region46: #{bert_lm_forward.1} parent=31 // pred_check_branch
          %518 = sbr.rel (%p516) target = $region48
        $region47: #{bert_lm_forward.1} parent=31 // pred_region
          %p519 = scmp.lt.s32.totalorder %s25, 1
          %s520 = scalar_select %p519, %s25, 1
          %s521 = scalar_lea.vmem %s5, %s520
        $region48: #{bert_lm_forward.1} parent=31 // pred_fallthru
          _
        // Predicated region
        $region49: #{bert_lm_forward.1} parent=31 // pred_check
          %p522 = pneg %p191
        $region50: #{bert_lm_forward.1} parent=31 // pred_check_branch
          %524 = sbr.rel (%p522) target = $region52
        $region51: #{bert_lm_forward.1} parent=31 // pred_region
          %p525 = scmp.lt.s32.totalorder %s25, 1
          %s526 = scalar_select %p525, %s25, 1
          %s527 = scalar_lea.vmem %s6, %s526
        $region52: #{bert_lm_forward.1} parent=31 // pred_fallthru
          _
        // Predicated region
        $region53: #{bert_lm_forward.1} parent=31 // pred_check
          %p528 = pneg %p217
        $region54: #{bert_lm_forward.1} parent=31 // pred_check_branch
          %530 = sbr.rel (%p528) target = $region56
        $region55: #{bert_lm_forward.1} parent=31 // pred_region
          %p531 = scmp.lt.s32.totalorder %s25, 1
          %s532 = scalar_select %p531, %s25, 1
          %s533 = scalar_lea.vmem %s7, %s532
        $region56: #{bert_lm_forward.1} parent=31 // pred_fallthru
          _
        // Predicated region
        $region57: #{bert_lm_forward.1} parent=31 // pred_check
          %p534 = pneg %p243
        $region58: #{bert_lm_forward.1} parent=31 // pred_check_branch
          %536 = sbr.rel (%p534) target = $region60
        $region59: #{bert_lm_forward.1} parent=31 // pred_region
          %p537 = scmp.lt.s32.totalorder %s25, 1
          %s538 = scalar_select %p537, %s25, 1
          %s539 = smul.addr %s538, 4
          %s540 = smul.addr %s539, 4
          %s541 = scalar_lea.vmem %s8, %s540
        $region60: #{bert_lm_forward.1} parent=31 // pred_fallthru
          _
        // Predicated region
        $region61: #{bert_lm_forward.1} parent=31 // pred_check
          %p542 = pneg %p269
        $region62: #{bert_lm_forward.1} parent=31 // pred_check_branch
          %544 = sbr.rel (%p542) target = $region64
        $region63: #{bert_lm_forward.1} parent=31 // pred_region
          %p545 = scmp.lt.s32.totalorder %s25, 1
          %s546 = scalar_select %p545, %s25, 1
          %s547 = scalar_lea.vmem %s9, %s546
        $region64: #{bert_lm_forward.1} parent=31 // pred_fallthru
          _
        // Predicated region
        $region65: #{bert_lm_forward.1} parent=31 // pred_check
          %p548 = pneg %p295
        $region66: #{bert_lm_forward.1} parent=31 // pred_check_branch
          %550 = sbr.rel (%p548) target = $region68
        $region67: #{bert_lm_forward.1} parent=31 // pred_region
          %p551 = scmp.lt.s32.totalorder %s25, 1
          %s552 = scalar_select %p551, %s25, 1
          %s553 = smul.addr %s552, 16
          %s554 = smul.addr %s553, 4
          %s555 = scalar_lea.vmem %s10, %s554
        $region68: #{bert_lm_forward.1} parent=31 // pred_fallthru
          _
        // Predicated region
        $region69: #{bert_lm_forward.1} parent=31 // pred_check
          %p556 = pneg %p321
        $region70: #{bert_lm_forward.1} parent=31 // pred_check_branch
          %558 = sbr.rel (%p556) target = $region72
        $region71: #{bert_lm_forward.1} parent=31 // pred_region
          %p559 = scmp.lt.s32.totalorder %s25, 1
          %s560 = scalar_select %p559, %s25, 1
          %s561 = scalar_lea.vmem %s11, %s560
        $region72: #{bert_lm_forward.1} parent=31 // pred_fallthru
          _
        // Predicated region
        $region73: #{bert_lm_forward.1} parent=31 // pred_check
          %p562 = pneg %p347
        $region74: #{bert_lm_forward.1} parent=31 // pred_check_branch
          %564 = sbr.rel (%p562) target = $region76
        $region75: #{bert_lm_forward.1} parent=31 // pred_region
          %p565 = scmp.lt.s32.totalorder %s25, 1
          %s566 = scalar_select %p565, %s25, 1
          %s567 = scalar_lea.vmem %s12, %s566
        $region76: #{bert_lm_forward.1} parent=31 // pred_fallthru
          _
        // Predicated region
        $region77: #{bert_lm_forward.1} parent=31 // pred_check
          %p568 = pneg %p373
        $region78: #{bert_lm_forward.1} parent=31 // pred_check_branch
          %570 = sbr.rel (%p568) target = $region80
        $region79: #{bert_lm_forward.1} parent=31 // pred_region
          %p571 = scmp.lt.s32.totalorder %s25, 1
          %s572 = scalar_select %p571, %s25, 1
          %s573 = scalar_lea.vmem %s13, %s572
        $region80: #{bert_lm_forward.1} parent=31 // pred_fallthru
          _
      $region32: #{bert_lm_forward.1} parent=5 // pred_fallthru
        _
      %p574 = scmp.le.s32.totalorder 1, %s25
      %p575 = scmp.lt.s32.totalorder %s25, 3
      %p576 = pnand %p574, %p575
      %p577 = pneg %p576
      // Predicated region
      $region81: #{bert_lm_forward.1} parent=5 // pred_check
        _
      $region82: #{bert_lm_forward.1} parent=5 // pred_check_branch
        %579 = sbr.rel (%p576) target = $region84
      $region83: #{bert_lm_forward.1} parent=5 // pred_region
        %s580 = ssub.s32 %s25, 1
        %p581 = pneg %p46
        %p582 = pneg %p43
        %p583 = pneg %p67
        %p584 = pneg %p64
        %p585 = scmp.lt.s32.totalorder %s30, 1
        %s586 = scalar_select %p585, %s30, 1
        %s587 = smul.addr %s586, 4
        %s588 = smul.addr %s587, 4
        %s589 = scalar_lea.vmem %s2, %s588
        %p590 = pneg %p93
        %p591 = pneg %p90
        %p592 = scmp.lt.s32.totalorder %s30, 1
        %s593 = scalar_select %p592, %s30, 1
        %s594 = scalar_lea.vmem %s3, %s593
        %p595 = pneg %p119
        %p596 = pneg %p116
        %p597 = scmp.lt.s32.totalorder %s30, 1
        %s598 = scalar_select %p597, %s30, 1
        %s599 = smul.addr %s598, 4
        %s600 = smul.addr %s599, 4
        %s601 = scalar_lea.vmem %s4, %s600
        %p602 = pneg %p145
        %p603 = pneg %p142
        %p604 = scmp.lt.s32.totalorder %s30, 1
        %s605 = scalar_select %p604, %s30, 1
        %s606 = scalar_lea.vmem %s5, %s605
        %p607 = pneg %p171
        %p608 = pneg %p168
        %p609 = scmp.lt.s32.totalorder %s30, 1
        %s610 = scalar_select %p609, %s30, 1
        %s611 = scalar_lea.vmem %s6, %s610
        %p612 = pneg %p197
        %p613 = pneg %p194
        %p614 = scmp.lt.s32.totalorder %s30, 1
        %s615 = scalar_select %p614, %s30, 1
        %s616 = scalar_lea.vmem %s7, %s615
        %p617 = pneg %p223
        %p618 = pneg %p220
        %p619 = scmp.lt.s32.totalorder %s30, 1
        %s620 = scalar_select %p619, %s30, 1
        %s621 = smul.addr %s620, 4
        %s622 = smul.addr %s621, 4
        %s623 = scalar_lea.vmem %s8, %s622
        %p624 = pneg %p249
        %p625 = pneg %p246
        %p626 = scmp.lt.s32.totalorder %s30, 1
        %s627 = scalar_select %p626, %s30, 1
        %s628 = scalar_lea.vmem %s9, %s627
        %p629 = pneg %p275
        %p630 = pneg %p272
        %p631 = scmp.lt.s32.totalorder %s30, 1
        %s632 = scalar_select %p631, %s30, 1
        %s633 = smul.addr %s632, 16
        %s634 = smul.addr %s633, 4
        %s635 = scalar_lea.vmem %s10, %s634
        %p636 = pneg %p301
        %p637 = pneg %p298
        %p638 = scmp.lt.s32.totalorder %s30, 1
        %s639 = scalar_select %p638, %s30, 1
        %s640 = scalar_lea.vmem %s11, %s639
        %p641 = pneg %p327
        %p642 = pneg %p324
        %p643 = scmp.lt.s32.totalorder %s30, 1
        %s644 = scalar_select %p643, %s30, 1
        %s645 = scalar_lea.vmem %s12, %s644
        %p646 = pneg %p353
        %p647 = pneg %p350
        %p648 = scmp.lt.s32.totalorder %s30, 1
        %s649 = scalar_select %p648, %s30, 1
        %s650 = scalar_lea.vmem %s13, %s649
        %p651 = pneg %p379
        %p652 = pneg %p376
        %p653 = pneg %p400
        %p654 = pneg %p397
        %p655 = pneg %p421
        %p656 = pneg %p418
        %p657 = pneg %p442
        %p658 = pneg %p439
        %p659 = pneg %p463
        %p660 = pneg %p460
        %p661 = scmp.lt.s32.totalorder %s30, 1
        %s662 = scalar_select %p661, %s30, 1
        %s663 = smul.addr %s662, 4
        %s664 = smul.addr %s663, 4
        %s665 = scalar_lea.vmem %s2, %s664
        %p666 = scmp.lt.s32.totalorder %s30, 1
        %s667 = scalar_select %p666, %s30, 1
        %s668 = scalar_lea.vmem %s3, %s667
        %p669 = scmp.lt.s32.totalorder %s30, 1
        %s670 = scalar_select %p669, %s30, 1
        %s671 = smul.addr %s670, 4
        %s672 = smul.addr %s671, 4
        %s673 = scalar_lea.vmem %s4, %s672
        %p674 = scmp.lt.s32.totalorder %s30, 1
        %s675 = scalar_select %p674, %s30, 1
        %s676 = scalar_lea.vmem %s5, %s675
        %p677 = scmp.lt.s32.totalorder %s30, 1
        %s678 = scalar_select %p677, %s30, 1
        %s679 = scalar_lea.vmem %s6, %s678
        %p680 = scmp.lt.s32.totalorder %s30, 1
        %s681 = scalar_select %p680, %s30, 1
        %s682 = scalar_lea.vmem %s7, %s681
        %p683 = scmp.lt.s32.totalorder %s30, 1
        %s684 = scalar_select %p683, %s30, 1
        %s685 = smul.addr %s684, 4
        %s686 = smul.addr %s685, 4
        %s687 = scalar_lea.vmem %s8, %s686
        %p688 = scmp.lt.s32.totalorder %s30, 1
        %s689 = scalar_select %p688, %s30, 1
        %s690 = scalar_lea.vmem %s9, %s689
        %p691 = scmp.lt.s32.totalorder %s30, 1
        %s692 = scalar_select %p691, %s30, 1
        %s693 = smul.addr %s692, 16
        %s694 = smul.addr %s693, 4
        %s695 = scalar_lea.vmem %s10, %s694
        %p696 = scmp.lt.s32.totalorder %s30, 1
        %s697 = scalar_select %p696, %s30, 1
        %s698 = scalar_lea.vmem %s11, %s697
        %p699 = scmp.lt.s32.totalorder %s30, 1
        %s700 = scalar_select %p699, %s30, 1
        %s701 = scalar_lea.vmem %s12, %s700
        %p702 = scmp.lt.s32.totalorder %s30, 1
        %s703 = scalar_select %p702, %s30, 1
        %s704 = scalar_lea.vmem %s13, %s703
        %p706 = scmp.eq.s32.totalorder %s30, 0
        // Predicated region
        $region85: #{bert_lm_forward.1} parent=83 // pred_check
          %p707 = pneg %p706
        $region86: #{bert_lm_forward.1} parent=83 // pred_check_branch
          %709 = sbr.rel (%p707) target = $region88
        $region87: #{bert_lm_forward.1} parent=83 // pred_region
          %v710 = vld [vmem:[%s0] sm:$0xff]
          %v711 = vld [vmem:[%s0 + $0x8] sm:$0xff]
          %vm712 = vcmask 261120
          %713 = vst.msk [vmem:[#allocation2] sm:$0xff] %vm712, %v710
          %714 = vst.msk [vmem:[#allocation2 + $0x8] sm:$0xff] %vm712, %v711
        $region88: #{bert_lm_forward.1} parent=83 // pred_fallthru
          _
        %v715 = vld [vmem:[#allocation2] sm:$0xff]
        %v716 = vld [vmem:[#allocation2 + $0x8] sm:$0xff]
        %v717 = vld [vmem:[%s1] sm:$0xff]
        %v718 = vld [vmem:[%s1 + $0x8] sm:$0xff]
        %v719 = vld [vmem:[%s679] sm:$0x1]
        %v720 = vld [vmem:[%s682] sm:$0x1]
        %vm721 = vcmask 261120
        %v722 = vsel %vm721, %v715, 0.0
        %723 = vadd.xlane.f32.xlu0 %v722
        %v724 = vpop.xlane.xlu0 %723
        %v725 = vsel %vm721, %v716, 0.0
        %726 = vadd.xlane.f32.xlu0 %v725
        %v727 = vpop.xlane.xlu0 %726
        %v728 = vrcp.pop 32.0
        %v729 = vmul.f32 %v724, %v728
        %v730 = vmul.f32 %v727, %v728
        %v731 = vsub.f32 %v715, %v729
        %v732 = vsub.f32 %v716, %v730
        %v733 = vmul.f32 %v731, %v731
        %v734 = vmul.f32 %v732, %v732
        %v735 = vsel %vm721, %v733, 0.0
        %736 = vadd.xlane.f32.xlu0 %v735
        %v737 = vpop.xlane.xlu0 %736
        %v738 = vsel %vm721, %v734, 0.0
        %739 = vadd.xlane.f32.xlu0 %v738
        %v740 = vpop.xlane.xlu0 %739
        %v741 = vmul.f32 %v737, %v728
        %v742 = vmul.f32 %v740, %v728
        %v743 = vadd.f32 %v741, 1e-06
        %v744 = vadd.f32 %v742, 1e-06
        %v745 = vrsqrt.pop %v743
        %v746 = vrsqrt.pop %v744
        %v747 = vmul.f32 %v731, %v745
        %v748 = vmul.f32 %v732, %v746
        %v750 = vlaneseq
        %v751 = vshrl.u32 %v750, 7
        %v752 = vsub.s32 0, %v751
        %v753 = vrot.slane %v719, %v752
        %v755 = vmul.f32 %v747, %v753
        %v756 = vmul.f32 %v748, %v753
        %v758 = vlaneseq
        %v759 = vshrl.u32 %v758, 7
        %v760 = vsub.s32 0, %v759
        %v761 = vrot.slane %v720, %v760
        %v763 = vadd.f32 %v755, %v761
        %v764 = vadd.f32 %v756, %v761
        %v765 = vpack.c.bf16 %v764, %v763
        %v766 = vld [vmem:[%s665] sm:$0xf]
        %v767 = vld [vmem:[%s665 + $0x4] sm:$0xf]
        %v768 = vld [vmem:[%s665 + $0x8] sm:$0xf]
        %v769 = vld [vmem:[%s665 + $0xc] sm:$0xf]
        %v770 = vld [vmem:[%s668] sm:$0x1]
        %v772 = vlaneseq
        %v773 = vshrl.u32 %v772, 7
        %v774 = vsub.s32 0, %v773
        %v775 = vrot.slane %v770, %v774
        %v781 = vunpack.c.l.b16 %v766
        %v782 = vunpack.c.l.b16 %v767
        %v783 = vunpack.c.l.b16 %v768
        %v784 = vunpack.c.l.b16 %v769
        %v785 = vpack.c.b16 %v782, %v781
        %v786 = vpack.c.b16 %v784, %v783
        %v790 = vsel %vm721, %v765, 0
        %792 = vmatprep.subr.bf16.mxu0 0
        %793 = vmatpush1.bf16.msra.mxu0 %v785
        %794 = vmatprep.subr.bf16.mxu0 0
        %795 = vmatpush1.bf16.msra.mxu0 %v786
        %796 = vmatprep.subr.bf16.mxu0 0
        %797 = vmatpush1.bf16.msra.mxu0 0
        %798 = vmatprep.subr.bf16.mxu0 0
        %799 = vmatpush1.bf16.msra.mxu0 0
        %800 = vmatprep.subr.bf16.mxu0 0
        %801 = vmatpush1.bf16.msra.mxu0 0
        %802 = vmatprep.subr.bf16.mxu0 0
        %803 = vmatpush1.bf16.msra.mxu0 0
        %804 = vmatprep.subr.bf16.mxu0 0
        %805 = vmatpush1.bf16.msra.mxu0 0
        %806 = vmatprep.subr.bf16.mxu0 0
        %807 = vmatpush1.bf16.msra.mxu0 0
        %808 = vmatprep.subr.bf16.mxu0 0
        %809 = vmatpush1.bf16.msra.mxu0 0
        %810 = vmatprep.subr.bf16.mxu0 0
        %811 = vmatpush1.bf16.msra.mxu0 0
        %812 = vmatprep.subr.bf16.mxu0 0
        %813 = vmatpush1.bf16.msra.mxu0 0
        %814 = vmatprep.subr.bf16.mxu0 0
        %815 = vmatpush1.bf16.msra.mxu0 0
        %816 = vmatprep.subr.bf16.mxu0 0
        %817 = vmatpush1.bf16.msra.mxu0 0
        %818 = vmatprep.subr.bf16.mxu0 0
        %819 = vmatpush1.bf16.msra.mxu0 0
        %820 = vmatprep.subr.bf16.mxu0 0
        %821 = vmatpush1.bf16.msra.mxu0 0
        %822 = vmatprep.subr.bf16.mxu0 0
        %823 = vmatpush1.bf16.msra.mxu0 0
        %824 = vmatprep.mubr.bf16.mxu0 0
        %825 = vmatmul.mubr.bf16.gmra.mrb[0].mxu0 %v790
        %v826 = vpop.f32.mrb[0].mxu0
        %v827 = vadd.f32 %v775, %v826
        %v828 = vpop.f32.mrb[0].mxu0
        %v829 = vpop.f32.mrb[0].mxu0
        %v830 = vadd.f32 %v775, %v829
        %v831 = vpop.f32.mrb[0].mxu0
        %832 = vdwg.mxu0
        %834 = vrot.lane.b32.xlu0 %v827, 96
        %v835 = vpop.permute.xlu0 %834
        %vm836 = vcmask 64512
        %v837 = vsel %vm836, %v827, 0
        %v839 = vsel %vm836, %v835, 0
        %841 = vmatprep.subr.mxu0 0.0
        %842 = vmatpush1.xpose.msra.mxu0 %v839
        %843 = vmatprep.subr.mxu0 0.0
        %844 = vmatpush1.xpose.msra.mxu0 0.0
        %845 = vmatprep.subr.mxu0 0.0
        %846 = vmatpush1.xpose.msra.mxu0 0.0
        %847 = vmatprep.subr.mxu0 0.0
        %848 = vmatpush1.xpose.msra.mxu0 0.0
        %849 = vmatprep.subr.mxu0 0.0
        %850 = vmatpush1.xpose.msra.mxu0 0.0
        %851 = vmatprep.subr.mxu0 0.0
        %852 = vmatpush1.xpose.msra.mxu0 0.0
        %853 = vmatprep.subr.mxu0 0.0
        %854 = vmatpush1.xpose.msra.mxu0 0.0
        %855 = vmatprep.subr.mxu0 0.0
        %856 = vmatpush1.xpose.msra.mxu0 0.0
        %857 = vmatprep.subr.mxu0 0.0
        %858 = vmatpush1.xpose.msra.mxu0 0.0
        %859 = vmatprep.subr.mxu0 0.0
        %860 = vmatpush1.xpose.msra.mxu0 0.0
        %861 = vmatprep.subr.mxu0 0.0
        %862 = vmatpush1.xpose.msra.mxu0 0.0
        %863 = vmatprep.subr.mxu0 0.0
        %864 = vmatpush1.xpose.msra.mxu0 0.0
        %865 = vmatprep.subr.mxu0 0.0
        %866 = vmatpush1.xpose.msra.mxu0 0.0
        %867 = vmatprep.subr.mxu0 0.0
        %868 = vmatpush1.xpose.msra.mxu0 0.0
        %869 = vmatprep.subr.mxu0 0.0
        %870 = vmatpush1.xpose.msra.mxu0 0.0
        %871 = vmatprep.subr.mxu0 0.0
        %872 = vmatpush1.xpose.msra.mxu0 0.0
        %873 = vmatprep.subr.mxu0 0.0
        %874 = vmatpush1.xpose.msra.mxu0 0.0
        %875 = vmatprep.subr.mxu0 0.0
        %876 = vmatpush1.xpose.msra.mxu0 0.0
        %877 = vmatprep.subr.mxu0 0.0
        %878 = vmatpush1.xpose.msra.mxu0 0.0
        %879 = vmatprep.subr.mxu0 0.0
        %880 = vmatpush1.xpose.msra.mxu0 0.0
        %881 = vmatprep.subr.mxu0 0.0
        %882 = vmatpush1.xpose.msra.mxu0 0.0
        %883 = vmatprep.subr.mxu0 0.0
        %884 = vmatpush1.xpose.msra.mxu0 0.0
        %885 = vmatprep.subr.mxu0 0.0
        %886 = vmatpush1.xpose.msra.mxu0 0.0
        %887 = vmatprep.subr.mxu0 0.0
        %888 = vmatpush1.xpose.msra.mxu0 0.0
        %889 = vmatprep.subr.mxu0 0.0
        %890 = vmatpush1.xpose.msra.mxu0 0.0
        %891 = vmatprep.subr.mxu0 0.0
        %892 = vmatpush1.xpose.msra.mxu0 0.0
        %893 = vmatprep.subr.mxu0 0.0
        %894 = vmatpush1.xpose.msra.mxu0 0.0
        %895 = vmatprep.subr.mxu0 0.0
        %896 = vmatpush1.xpose.msra.mxu0 0.0
        %897 = vmatprep.subr.mxu0 0.0
        %898 = vmatpush1.xpose.msra.mxu0 0.0
        %899 = vmatprep.subr.mxu0 0.0
        %900 = vmatpush1.xpose.msra.mxu0 0.0
        %901 = vmatprep.subr.mxu0 0.0
        %902 = vmatpush1.xpose.msra.mxu0 0.0
        %903 = vmatprep.subr.mxu0 0.0
        %904 = vmatpush1.xpose.msra.mxu0 0.0
        %905 = vmatprep.mubr.f32.mxu0 0.0
        %906 = vmatmul.mubr.f32.gmra.mrb[0].mxu0 %v837
        %v907 = vpop.f32.mrb[0].mxu0
        %v908 = vadd.f32 %v717, %v907
        %v909 = vpop.f32.mrb[0].mxu0
        %910 = vdwg.mxu0
        %912 = vrot.lane.b32.xlu0 %v830, 96
        %v913 = vpop.permute.xlu0 %912
        %v914 = vsel %vm836, %v830, 0
        %v916 = vsel %vm836, %v913, 0
        %918 = vmatprep.subr.mxu0 0.0
        %919 = vmatpush1.xpose.msra.mxu0 %v916
        %920 = vmatprep.subr.mxu0 0.0
        %921 = vmatpush1.xpose.msra.mxu0 0.0
        %922 = vmatprep.subr.mxu0 0.0
        %923 = vmatpush1.xpose.msra.mxu0 0.0
        %924 = vmatprep.subr.mxu0 0.0
        %925 = vmatpush1.xpose.msra.mxu0 0.0
        %926 = vmatprep.subr.mxu0 0.0
        %927 = vmatpush1.xpose.msra.mxu0 0.0
        %928 = vmatprep.subr.mxu0 0.0
        %929 = vmatpush1.xpose.msra.mxu0 0.0
        %930 = vmatprep.subr.mxu0 0.0
        %931 = vmatpush1.xpose.msra.mxu0 0.0
        %932 = vmatprep.subr.mxu0 0.0
        %933 = vmatpush1.xpose.msra.mxu0 0.0
        %934 = vmatprep.subr.mxu0 0.0
        %935 = vmatpush1.xpose.msra.mxu0 0.0
        %936 = vmatprep.subr.mxu0 0.0
        %937 = vmatpush1.xpose.msra.mxu0 0.0
        %938 = vmatprep.subr.mxu0 0.0
        %939 = vmatpush1.xpose.msra.mxu0 0.0
        %940 = vmatprep.subr.mxu0 0.0
        %941 = vmatpush1.xpose.msra.mxu0 0.0
        %942 = vmatprep.subr.mxu0 0.0
        %943 = vmatpush1.xpose.msra.mxu0 0.0
        %944 = vmatprep.subr.mxu0 0.0
        %945 = vmatpush1.xpose.msra.mxu0 0.0
        %946 = vmatprep.subr.mxu0 0.0
        %947 = vmatpush1.xpose.msra.mxu0 0.0
        %948 = vmatprep.subr.mxu0 0.0
        %949 = vmatpush1.xpose.msra.mxu0 0.0
        %950 = vmatprep.subr.mxu0 0.0
        %951 = vmatpush1.xpose.msra.mxu0 0.0
        %952 = vmatprep.subr.mxu0 0.0
        %953 = vmatpush1.xpose.msra.mxu0 0.0
        %954 = vmatprep.subr.mxu0 0.0
        %955 = vmatpush1.xpose.msra.mxu0 0.0
        %956 = vmatprep.subr.mxu0 0.0
        %957 = vmatpush1.xpose.msra.mxu0 0.0
        %958 = vmatprep.subr.mxu0 0.0
        %959 = vmatpush1.xpose.msra.mxu0 0.0
        %960 = vmatprep.subr.mxu0 0.0
        %961 = vmatpush1.xpose.msra.mxu0 0.0
        %962 = vmatprep.subr.mxu0 0.0
        %963 = vmatpush1.xpose.msra.mxu0 0.0
        %964 = vmatprep.subr.mxu0 0.0
        %965 = vmatpush1.xpose.msra.mxu0 0.0
        %966 = vmatprep.subr.mxu0 0.0
        %967 = vmatpush1.xpose.msra.mxu0 0.0
        %968 = vmatprep.subr.mxu0 0.0
        %969 = vmatpush1.xpose.msra.mxu0 0.0
        %970 = vmatprep.subr.mxu0 0.0
        %971 = vmatpush1.xpose.msra.mxu0 0.0
        %972 = vmatprep.subr.mxu0 0.0
        %973 = vmatpush1.xpose.msra.mxu0 0.0
        %974 = vmatprep.subr.mxu0 0.0
        %975 = vmatpush1.xpose.msra.mxu0 0.0
        %976 = vmatprep.subr.mxu0 0.0
        %977 = vmatpush1.xpose.msra.mxu0 0.0
        %978 = vmatprep.subr.mxu0 0.0
        %979 = vmatpush1.xpose.msra.mxu0 0.0
        %980 = vmatprep.subr.mxu0 0.0
        %981 = vmatpush1.xpose.msra.mxu0 0.0
        %982 = vmatprep.mubr.f32.mxu0 0.0
        %983 = vmatmul.mubr.f32.gmra.mrb[0].mxu0 %v914
        %v984 = vpop.f32.mrb[0].mxu0
        %v985 = vadd.f32 %v718, %v984
        %v986 = vpop.f32.mrb[0].mxu0
        %987 = vdwg.mxu0
        %v988 = vsel %vm836, %v908, -inf
        %989 = vmax.xlane.f32.xlu0 %v988
        %v990 = vpop.xlane.xlu0 %989
        %v991 = vsel %vm836, %v985, -inf
        %992 = vmax.xlane.f32.xlu0 %v991
        %v993 = vpop.xlane.xlu0 %992
        %v994 = vsub.f32 %v908, %v990
        %v995 = vsub.f32 %v985, %v993
        %v996 = vmul.f32 %v994, 1.442695
        %v997 = vpow.pop %v996
        %v998 = vmul.f32 %v995, 1.442695
        %v999 = vpow.pop %v998
        %v1000 = vsel %vm836, %v997, 0.0
        %1001 = vadd.xlane.f32.xlu0 %v1000
        %v1002 = vpop.xlane.xlu0 %1001
        %v1003 = vsel %vm836, %v999, 0.0
        %1004 = vadd.xlane.f32.xlu0 %v1003
        %v1005 = vpop.xlane.xlu0 %1004
        %v1006 = vrcp.pop %v1002
        %v1007 = vrcp.pop %v1005
        %v1008 = vmul.f32 %v997, %v1006
        %v1009 = vmul.f32 %v999, %v1007
        %1010 = vrot.lane.b32.xlu0 %v827, 64
        %v1011 = vpop.permute.xlu0 %1010
        %v1014 = vsel %vm836, %v1008, 0
        %1016 = vmatprep.subr.mxu0 0.0
        %1017 = vmatpush1.msra.mxu0 %v1011
        %1018 = vmatprep.subr.mxu0 0.0
        %1019 = vmatpush1.msra.mxu0 0.0
        %1020 = vmatprep.subr.mxu0 0.0
        %1021 = vmatpush1.msra.mxu0 0.0
        %1022 = vmatprep.subr.mxu0 0.0
        %1023 = vmatpush1.msra.mxu0 0.0
        %1024 = vmatprep.subr.mxu0 0.0
        %1025 = vmatpush1.msra.mxu0 0.0
        %1026 = vmatprep.subr.mxu0 0.0
        %1027 = vmatpush1.msra.mxu0 0.0
        %1028 = vmatprep.subr.mxu0 0.0
        %1029 = vmatpush1.msra.mxu0 0.0
        %1030 = vmatprep.subr.mxu0 0.0
        %1031 = vmatpush1.msra.mxu0 0.0
        %1032 = vmatprep.subr.mxu0 0.0
        %1033 = vmatpush1.msra.mxu0 0.0
        %1034 = vmatprep.subr.mxu0 0.0
        %1035 = vmatpush1.msra.mxu0 0.0
        %1036 = vmatprep.subr.mxu0 0.0
        %1037 = vmatpush1.msra.mxu0 0.0
        %1038 = vmatprep.subr.mxu0 0.0
        %1039 = vmatpush1.msra.mxu0 0.0
        %1040 = vmatprep.subr.mxu0 0.0
        %1041 = vmatpush1.msra.mxu0 0.0
        %1042 = vmatprep.subr.mxu0 0.0
        %1043 = vmatpush1.msra.mxu0 0.0
        %1044 = vmatprep.subr.mxu0 0.0
        %1045 = vmatpush1.msra.mxu0 0.0
        %1046 = vmatprep.subr.mxu0 0.0
        %1047 = vmatpush1.msra.mxu0 0.0
        %1048 = vmatprep.subr.mxu0 0.0
        %1049 = vmatpush1.msra.mxu0 0.0
        %1050 = vmatprep.subr.mxu0 0.0
        %1051 = vmatpush1.msra.mxu0 0.0
        %1052 = vmatprep.subr.mxu0 0.0
        %1053 = vmatpush1.msra.mxu0 0.0
        %1054 = vmatprep.subr.mxu0 0.0
        %1055 = vmatpush1.msra.mxu0 0.0
        %1056 = vmatprep.subr.mxu0 0.0
        %1057 = vmatpush1.msra.mxu0 0.0
        %1058 = vmatprep.subr.mxu0 0.0
        %1059 = vmatpush1.msra.mxu0 0.0
        %1060 = vmatprep.subr.mxu0 0.0
        %1061 = vmatpush1.msra.mxu0 0.0
        %1062 = vmatprep.subr.mxu0 0.0
        %1063 = vmatpush1.msra.mxu0 0.0
        %1064 = vmatprep.subr.mxu0 0.0
        %1065 = vmatpush1.msra.mxu0 0.0
        %1066 = vmatprep.subr.mxu0 0.0
        %1067 = vmatpush1.msra.mxu0 0.0
        %1068 = vmatprep.subr.mxu0 0.0
        %1069 = vmatpush1.msra.mxu0 0.0
        %1070 = vmatprep.subr.mxu0 0.0
        %1071 = vmatpush1.msra.mxu0 0.0
        %1072 = vmatprep.subr.mxu0 0.0
        %1073 = vmatpush1.msra.mxu0 0.0
        %1074 = vmatprep.subr.mxu0 0.0
        %1075 = vmatpush1.msra.mxu0 0.0
        %1076 = vmatprep.subr.mxu0 0.0
        %1077 = vmatpush1.msra.mxu0 0.0
        %1078 = vmatprep.subr.mxu0 0.0
        %1079 = vmatpush1.msra.mxu0 0.0
        %1080 = vmatprep.mubr.f32.mxu0 0.0
        %1081 = vmatmul.mubr.f32.gmra.mrb[0].mxu0 %v1014
        %v1082 = vpop.f32.mrb[0].mxu0
        %v1083 = vadd.f32 0.0, %v1082
        %v1084 = vpop.f32.mrb[0].mxu0
        %1085 = vdwg.mxu0
        %1086 = vrot.lane.b32.xlu0 %v830, 64
        %v1087 = vpop.permute.xlu0 %1086
        %v1090 = vsel %vm836, %v1009, 0
        %1092 = vmatprep.subr.mxu0 0.0
        %1093 = vmatpush1.msra.mxu0 %v1087
        %1094 = vmatprep.subr.mxu0 0.0
        %1095 = vmatpush1.msra.mxu0 0.0
        %1096 = vmatprep.subr.mxu0 0.0
        %1097 = vmatpush1.msra.mxu0 0.0
        %1098 = vmatprep.subr.mxu0 0.0
        %1099 = vmatpush1.msra.mxu0 0.0
        %1100 = vmatprep.subr.mxu0 0.0
        %1101 = vmatpush1.msra.mxu0 0.0
        %1102 = vmatprep.subr.mxu0 0.0
        %1103 = vmatpush1.msra.mxu0 0.0
        %1104 = vmatprep.subr.mxu0 0.0
        %1105 = vmatpush1.msra.mxu0 0.0
        %1106 = vmatprep.subr.mxu0 0.0
        %1107 = vmatpush1.msra.mxu0 0.0
        %1108 = vmatprep.subr.mxu0 0.0
        %1109 = vmatpush1.msra.mxu0 0.0
        %1110 = vmatprep.subr.mxu0 0.0
        %1111 = vmatpush1.msra.mxu0 0.0
        %1112 = vmatprep.subr.mxu0 0.0
        %1113 = vmatpush1.msra.mxu0 0.0
        %1114 = vmatprep.subr.mxu0 0.0
        %1115 = vmatpush1.msra.mxu0 0.0
        %1116 = vmatprep.subr.mxu0 0.0
        %1117 = vmatpush1.msra.mxu0 0.0
        %1118 = vmatprep.subr.mxu0 0.0
        %1119 = vmatpush1.msra.mxu0 0.0
        %1120 = vmatprep.subr.mxu0 0.0
        %1121 = vmatpush1.msra.mxu0 0.0
        %1122 = vmatprep.subr.mxu0 0.0
        %1123 = vmatpush1.msra.mxu0 0.0
        %1124 = vmatprep.subr.mxu0 0.0
        %1125 = vmatpush1.msra.mxu0 0.0
        %1126 = vmatprep.subr.mxu0 0.0
        %1127 = vmatpush1.msra.mxu0 0.0
        %1128 = vmatprep.subr.mxu0 0.0
        %1129 = vmatpush1.msra.mxu0 0.0
        %1130 = vmatprep.subr.mxu0 0.0
        %1131 = vmatpush1.msra.mxu0 0.0
        %1132 = vmatprep.subr.mxu0 0.0
        %1133 = vmatpush1.msra.mxu0 0.0
        %1134 = vmatprep.subr.mxu0 0.0
        %1135 = vmatpush1.msra.mxu0 0.0
        %1136 = vmatprep.subr.mxu0 0.0
        %1137 = vmatpush1.msra.mxu0 0.0
        %1138 = vmatprep.subr.mxu0 0.0
        %1139 = vmatpush1.msra.mxu0 0.0
        %1140 = vmatprep.subr.mxu0 0.0
        %1141 = vmatpush1.msra.mxu0 0.0
        %1142 = vmatprep.subr.mxu0 0.0
        %1143 = vmatpush1.msra.mxu0 0.0
        %1144 = vmatprep.subr.mxu0 0.0
        %1145 = vmatpush1.msra.mxu0 0.0
        %1146 = vmatprep.subr.mxu0 0.0
        %1147 = vmatpush1.msra.mxu0 0.0
        %1148 = vmatprep.subr.mxu0 0.0
        %1149 = vmatpush1.msra.mxu0 0.0
        %1150 = vmatprep.subr.mxu0 0.0
        %1151 = vmatpush1.msra.mxu0 0.0
        %1152 = vmatprep.subr.mxu0 0.0
        %1153 = vmatpush1.msra.mxu0 0.0
        %1154 = vmatprep.subr.mxu0 0.0
        %1155 = vmatpush1.msra.mxu0 0.0
        %1156 = vmatprep.mubr.f32.mxu0 0.0
        %1157 = vmatmul.mubr.f32.gmra.mrb[0].mxu0 %v1090
        %v1158 = vpop.f32.mrb[0].mxu0
        %v1159 = vadd.f32 0.0, %v1158
        %v1160 = vpop.f32.mrb[0].mxu0
        %1161 = vdwg.mxu0
        %1162 = vrot.lane.b32.xlu0 %v827, 120
        %v1163 = vpop.permute.xlu0 %1162
        %1164 = vrot.lane.b32.xlu0 %v827, 88
        %v1165 = vpop.permute.xlu0 %1164
        %v1166 = vsel %vm836, %v1163, 0
        %v1168 = vsel %vm836, %v1165, 0
        %1170 = vmatprep.subr.mxu0 0.0
        %1171 = vmatpush1.xpose.msra.mxu0 %v1168
        %1172 = vmatprep.subr.mxu0 0.0
        %1173 = vmatpush1.xpose.msra.mxu0 0.0
        %1174 = vmatprep.subr.mxu0 0.0
        %1175 = vmatpush1.xpose.msra.mxu0 0.0
        %1176 = vmatprep.subr.mxu0 0.0
        %1177 = vmatpush1.xpose.msra.mxu0 0.0
        %1178 = vmatprep.subr.mxu0 0.0
        %1179 = vmatpush1.xpose.msra.mxu0 0.0
        %1180 = vmatprep.subr.mxu0 0.0
        %1181 = vmatpush1.xpose.msra.mxu0 0.0
        %1182 = vmatprep.subr.mxu0 0.0
        %1183 = vmatpush1.xpose.msra.mxu0 0.0
        %1184 = vmatprep.subr.mxu0 0.0
        %1185 = vmatpush1.xpose.msra.mxu0 0.0
        %1186 = vmatprep.subr.mxu0 0.0
        %1187 = vmatpush1.xpose.msra.mxu0 0.0
        %1188 = vmatprep.subr.mxu0 0.0
        %1189 = vmatpush1.xpose.msra.mxu0 0.0
        %1190 = vmatprep.subr.mxu0 0.0
        %1191 = vmatpush1.xpose.msra.mxu0 0.0
        %1192 = vmatprep.subr.mxu0 0.0
        %1193 = vmatpush1.xpose.msra.mxu0 0.0
        %1194 = vmatprep.subr.mxu0 0.0
        %1195 = vmatpush1.xpose.msra.mxu0 0.0
        %1196 = vmatprep.subr.mxu0 0.0
        %1197 = vmatpush1.xpose.msra.mxu0 0.0
        %1198 = vmatprep.subr.mxu0 0.0
        %1199 = vmatpush1.xpose.msra.mxu0 0.0
        %1200 = vmatprep.subr.mxu0 0.0
        %1201 = vmatpush1.xpose.msra.mxu0 0.0
        %1202 = vmatprep.subr.mxu0 0.0
        %1203 = vmatpush1.xpose.msra.mxu0 0.0
        %1204 = vmatprep.subr.mxu0 0.0
        %1205 = vmatpush1.xpose.msra.mxu0 0.0
        %1206 = vmatprep.subr.mxu0 0.0
        %1207 = vmatpush1.xpose.msra.mxu0 0.0
        %1208 = vmatprep.subr.mxu0 0.0
        %1209 = vmatpush1.xpose.msra.mxu0 0.0
        %1210 = vmatprep.subr.mxu0 0.0
        %1211 = vmatpush1.xpose.msra.mxu0 0.0
        %1212 = vmatprep.subr.mxu0 0.0
        %1213 = vmatpush1.xpose.msra.mxu0 0.0
        %1214 = vmatprep.subr.mxu0 0.0
        %1215 = vmatpush1.xpose.msra.mxu0 0.0
        %1216 = vmatprep.subr.mxu0 0.0
        %1217 = vmatpush1.xpose.msra.mxu0 0.0
        %1218 = vmatprep.subr.mxu0 0.0
        %1219 = vmatpush1.xpose.msra.mxu0 0.0
        %1220 = vmatprep.subr.mxu0 0.0
        %1221 = vmatpush1.xpose.msra.mxu0 0.0
        %1222 = vmatprep.subr.mxu0 0.0
        %1223 = vmatpush1.xpose.msra.mxu0 0.0
        %1224 = vmatprep.subr.mxu0 0.0
        %1225 = vmatpush1.xpose.msra.mxu0 0.0
        %1226 = vmatprep.subr.mxu0 0.0
        %1227 = vmatpush1.xpose.msra.mxu0 0.0
        %1228 = vmatprep.subr.mxu0 0.0
        %1229 = vmatpush1.xpose.msra.mxu0 0.0
        %1230 = vmatprep.subr.mxu0 0.0
        %1231 = vmatpush1.xpose.msra.mxu0 0.0
        %1232 = vmatprep.subr.mxu0 0.0
        %1233 = vmatpush1.xpose.msra.mxu0 0.0
        %1234 = vmatprep.mubr.f32.mxu0 0.0
        %1235 = vmatmul.mubr.f32.gmra.mrb[0].mxu0 %v1166
        %v1236 = vpop.f32.mrb[0].mxu0
        %v1237 = vadd.f32 %v717, %v1236
        %v1238 = vpop.f32.mrb[0].mxu0
        %1239 = vdwg.mxu0
        %1240 = vrot.lane.b32.xlu0 %v830, 120
        %v1241 = vpop.permute.xlu0 %1240
        %1242 = vrot.lane.b32.xlu0 %v830, 88
        %v1243 = vpop.permute.xlu0 %1242
        %v1244 = vsel %vm836, %v1241, 0
        %v1246 = vsel %vm836, %v1243, 0
        %1248 = vmatprep.subr.mxu0 0.0
        %1249 = vmatpush1.xpose.msra.mxu0 %v1246
        %1250 = vmatprep.subr.mxu0 0.0
        %1251 = vmatpush1.xpose.msra.mxu0 0.0
        %1252 = vmatprep.subr.mxu0 0.0
        %1253 = vmatpush1.xpose.msra.mxu0 0.0
        %1254 = vmatprep.subr.mxu0 0.0
        %1255 = vmatpush1.xpose.msra.mxu0 0.0
        %1256 = vmatprep.subr.mxu0 0.0
        %1257 = vmatpush1.xpose.msra.mxu0 0.0
        %1258 = vmatprep.subr.mxu0 0.0
        %1259 = vmatpush1.xpose.msra.mxu0 0.0
        %1260 = vmatprep.subr.mxu0 0.0
        %1261 = vmatpush1.xpose.msra.mxu0 0.0
        %1262 = vmatprep.subr.mxu0 0.0
        %1263 = vmatpush1.xpose.msra.mxu0 0.0
        %1264 = vmatprep.subr.mxu0 0.0
        %1265 = vmatpush1.xpose.msra.mxu0 0.0
        %1266 = vmatprep.subr.mxu0 0.0
        %1267 = vmatpush1.xpose.msra.mxu0 0.0
        %1268 = vmatprep.subr.mxu0 0.0
        %1269 = vmatpush1.xpose.msra.mxu0 0.0
        %1270 = vmatprep.subr.mxu0 0.0
        %1271 = vmatpush1.xpose.msra.mxu0 0.0
        %1272 = vmatprep.subr.mxu0 0.0
        %1273 = vmatpush1.xpose.msra.mxu0 0.0
        %1274 = vmatprep.subr.mxu0 0.0
        %1275 = vmatpush1.xpose.msra.mxu0 0.0
        %1276 = vmatprep.subr.mxu0 0.0
        %1277 = vmatpush1.xpose.msra.mxu0 0.0
        %1278 = vmatprep.subr.mxu0 0.0
        %1279 = vmatpush1.xpose.msra.mxu0 0.0
        %1280 = vmatprep.subr.mxu0 0.0
        %1281 = vmatpush1.xpose.msra.mxu0 0.0
        %1282 = vmatprep.subr.mxu0 0.0
        %1283 = vmatpush1.xpose.msra.mxu0 0.0
        %1284 = vmatprep.subr.mxu0 0.0
        %1285 = vmatpush1.xpose.msra.mxu0 0.0
        %1286 = vmatprep.subr.mxu0 0.0
        %1287 = vmatpush1.xpose.msra.mxu0 0.0
        %1288 = vmatprep.subr.mxu0 0.0
        %1289 = vmatpush1.xpose.msra.mxu0 0.0
        %1290 = vmatprep.subr.mxu0 0.0
        %1291 = vmatpush1.xpose.msra.mxu0 0.0
        %1292 = vmatprep.subr.mxu0 0.0
        %1293 = vmatpush1.xpose.msra.mxu0 0.0
        %1294 = vmatprep.subr.mxu0 0.0
        %1295 = vmatpush1.xpose.msra.mxu0 0.0
        %1296 = vmatprep.subr.mxu0 0.0
        %1297 = vmatpush1.xpose.msra.mxu0 0.0
        %1298 = vmatprep.subr.mxu0 0.0
        %1299 = vmatpush1.xpose.msra.mxu0 0.0
        %1300 = vmatprep.subr.mxu0 0.0
        %1301 = vmatpush1.xpose.msra.mxu0 0.0
        %1302 = vmatprep.subr.mxu0 0.0
        %1303 = vmatpush1.xpose.msra.mxu0 0.0
        %1304 = vmatprep.subr.mxu0 0.0
        %1305 = vmatpush1.xpose.msra.mxu0 0.0
        %1306 = vmatprep.subr.mxu0 0.0
        %1307 = vmatpush1.xpose.msra.mxu0 0.0
        %1308 = vmatprep.subr.mxu0 0.0
        %1309 = vmatpush1.xpose.msra.mxu0 0.0
        %1310 = vmatprep.subr.mxu0 0.0
        %1311 = vmatpush1.xpose.msra.mxu0 0.0
        %1312 = vmatprep.mubr.f32.mxu0 0.0
        %1313 = vmatmul.mubr.f32.gmra.mrb[0].mxu0 %v1244
        %v1314 = vpop.f32.mrb[0].mxu0
        %v1315 = vadd.f32 %v718, %v1314
        %v1316 = vpop.f32.mrb[0].mxu0
        %1317 = vdwg.mxu0
        %v1318 = vsel %vm836, %v1237, -inf
        %1319 = vmax.xlane.f32.xlu0 %v1318
        %v1320 = vpop.xlane.xlu0 %1319
        %v1321 = vsel %vm836, %v1315, -inf
        %1322 = vmax.xlane.f32.xlu0 %v1321
        %v1323 = vpop.xlane.xlu0 %1322
        %v1324 = vsub.f32 %v1237, %v1320
        %v1325 = vsub.f32 %v1315, %v1323
        %v1326 = vmul.f32 %v1324, 1.442695
        %v1327 = vpow.pop %v1326
        %v1328 = vmul.f32 %v1325, 1.442695
        %v1329 = vpow.pop %v1328
        %v1330 = vsel %vm836, %v1327, 0.0
        %1331 = vadd.xlane.f32.xlu0 %v1330
        %v1332 = vpop.xlane.xlu0 %1331
        %v1333 = vsel %vm836, %v1329, 0.0
        %1334 = vadd.xlane.f32.xlu0 %v1333
        %v1335 = vpop.xlane.xlu0 %1334
        %v1336 = vrcp.pop %v1332
        %v1337 = vrcp.pop %v1335
        %v1338 = vmul.f32 %v1327, %v1336
        %v1339 = vmul.f32 %v1329, %v1337
        %1340 = vrot.lane.b32.xlu0 %v827, 56
        %v1341 = vpop.permute.xlu0 %1340
        %v1344 = vsel %vm836, %v1338, 0
        %1346 = vmatprep.subr.mxu0 0.0
        %1347 = vmatpush1.msra.mxu0 %v1341
        %1348 = vmatprep.subr.mxu0 0.0
        %1349 = vmatpush1.msra.mxu0 0.0
        %1350 = vmatprep.subr.mxu0 0.0
        %1351 = vmatpush1.msra.mxu0 0.0
        %1352 = vmatprep.subr.mxu0 0.0
        %1353 = vmatpush1.msra.mxu0 0.0
        %1354 = vmatprep.subr.mxu0 0.0
        %1355 = vmatpush1.msra.mxu0 0.0
        %1356 = vmatprep.subr.mxu0 0.0
        %1357 = vmatpush1.msra.mxu0 0.0
        %1358 = vmatprep.subr.mxu0 0.0
        %1359 = vmatpush1.msra.mxu0 0.0
        %1360 = vmatprep.subr.mxu0 0.0
        %1361 = vmatpush1.msra.mxu0 0.0
        %1362 = vmatprep.subr.mxu0 0.0
        %1363 = vmatpush1.msra.mxu0 0.0
        %1364 = vmatprep.subr.mxu0 0.0
        %1365 = vmatpush1.msra.mxu0 0.0
        %1366 = vmatprep.subr.mxu0 0.0
        %1367 = vmatpush1.msra.mxu0 0.0
        %1368 = vmatprep.subr.mxu0 0.0
        %1369 = vmatpush1.msra.mxu0 0.0
        %1370 = vmatprep.subr.mxu0 0.0
        %1371 = vmatpush1.msra.mxu0 0.0
        %1372 = vmatprep.subr.mxu0 0.0
        %1373 = vmatpush1.msra.mxu0 0.0
        %1374 = vmatprep.subr.mxu0 0.0
        %1375 = vmatpush1.msra.mxu0 0.0
        %1376 = vmatprep.subr.mxu0 0.0
        %1377 = vmatpush1.msra.mxu0 0.0
        %1378 = vmatprep.subr.mxu0 0.0
        %1379 = vmatpush1.msra.mxu0 0.0
        %1380 = vmatprep.subr.mxu0 0.0
        %1381 = vmatpush1.msra.mxu0 0.0
        %1382 = vmatprep.subr.mxu0 0.0
        %1383 = vmatpush1.msra.mxu0 0.0
        %1384 = vmatprep.subr.mxu0 0.0
        %1385 = vmatpush1.msra.mxu0 0.0
        %1386 = vmatprep.subr.mxu0 0.0
        %1387 = vmatpush1.msra.mxu0 0.0
        %1388 = vmatprep.subr.mxu0 0.0
        %1389 = vmatpush1.msra.mxu0 0.0
        %1390 = vmatprep.subr.mxu0 0.0
        %1391 = vmatpush1.msra.mxu0 0.0
        %1392 = vmatprep.subr.mxu0 0.0
        %1393 = vmatpush1.msra.mxu0 0.0
        %1394 = vmatprep.subr.mxu0 0.0
        %1395 = vmatpush1.msra.mxu0 0.0
        %1396 = vmatprep.subr.mxu0 0.0
        %1397 = vmatpush1.msra.mxu0 0.0
        %1398 = vmatprep.subr.mxu0 0.0
        %1399 = vmatpush1.msra.mxu0 0.0
        %1400 = vmatprep.subr.mxu0 0.0
        %1401 = vmatpush1.msra.mxu0 0.0
        %1402 = vmatprep.subr.mxu0 0.0
        %1403 = vmatpush1.msra.mxu0 0.0
        %1404 = vmatprep.subr.mxu0 0.0
        %1405 = vmatpush1.msra.mxu0 0.0
        %1406 = vmatprep.subr.mxu0 0.0
        %1407 = vmatpush1.msra.mxu0 0.0
        %1408 = vmatprep.subr.mxu0 0.0
        %1409 = vmatpush1.msra.mxu0 0.0
        %1410 = vmatprep.mubr.f32.mxu0 0.0
        %1411 = vmatmul.mubr.f32.gmra.mrb[0].mxu0 %v1344
        %v1412 = vpop.f32.mrb[0].mxu0
        %v1413 = vadd.f32 0.0, %v1412
        %v1414 = vpop.f32.mrb[0].mxu0
        %1415 = vdwg.mxu0
        %1416 = vrot.lane.b32.xlu0 %v830, 56
        %v1417 = vpop.permute.xlu0 %1416
        %v1420 = vsel %vm836, %v1339, 0
        %1422 = vmatprep.subr.mxu0 0.0
        %1423 = vmatpush1.msra.mxu0 %v1417
        %1424 = vmatprep.subr.mxu0 0.0
        %1425 = vmatpush1.msra.mxu0 0.0
        %1426 = vmatprep.subr.mxu0 0.0
        %1427 = vmatpush1.msra.mxu0 0.0
        %1428 = vmatprep.subr.mxu0 0.0
        %1429 = vmatpush1.msra.mxu0 0.0
        %1430 = vmatprep.subr.mxu0 0.0
        %1431 = vmatpush1.msra.mxu0 0.0
        %1432 = vmatprep.subr.mxu0 0.0
        %1433 = vmatpush1.msra.mxu0 0.0
        %1434 = vmatprep.subr.mxu0 0.0
        %1435 = vmatpush1.msra.mxu0 0.0
        %1436 = vmatprep.subr.mxu0 0.0
        %1437 = vmatpush1.msra.mxu0 0.0
        %1438 = vmatprep.subr.mxu0 0.0
        %1439 = vmatpush1.msra.mxu0 0.0
        %1440 = vmatprep.subr.mxu0 0.0
        %1441 = vmatpush1.msra.mxu0 0.0
        %1442 = vmatprep.subr.mxu0 0.0
        %1443 = vmatpush1.msra.mxu0 0.0
        %1444 = vmatprep.subr.mxu0 0.0
        %1445 = vmatpush1.msra.mxu0 0.0
        %1446 = vmatprep.subr.mxu0 0.0
        %1447 = vmatpush1.msra.mxu0 0.0
        %1448 = vmatprep.subr.mxu0 0.0
        %1449 = vmatpush1.msra.mxu0 0.0
        %1450 = vmatprep.subr.mxu0 0.0
        %1451 = vmatpush1.msra.mxu0 0.0
        %1452 = vmatprep.subr.mxu0 0.0
        %1453 = vmatpush1.msra.mxu0 0.0
        %1454 = vmatprep.subr.mxu0 0.0
        %1455 = vmatpush1.msra.mxu0 0.0
        %1456 = vmatprep.subr.mxu0 0.0
        %1457 = vmatpush1.msra.mxu0 0.0
        %1458 = vmatprep.subr.mxu0 0.0
        %1459 = vmatpush1.msra.mxu0 0.0
        %1460 = vmatprep.subr.mxu0 0.0
        %1461 = vmatpush1.msra.mxu0 0.0
        %1462 = vmatprep.subr.mxu0 0.0
        %1463 = vmatpush1.msra.mxu0 0.0
        %1464 = vmatprep.subr.mxu0 0.0
        %1465 = vmatpush1.msra.mxu0 0.0
        %1466 = vmatprep.subr.mxu0 0.0
        %1467 = vmatpush1.msra.mxu0 0.0
        %1468 = vmatprep.subr.mxu0 0.0
        %1469 = vmatpush1.msra.mxu0 0.0
        %1470 = vmatprep.subr.mxu0 0.0
        %1471 = vmatpush1.msra.mxu0 0.0
        %1472 = vmatprep.subr.mxu0 0.0
        %1473 = vmatpush1.msra.mxu0 0.0
        %1474 = vmatprep.subr.mxu0 0.0
        %1475 = vmatpush1.msra.mxu0 0.0
        %1476 = vmatprep.subr.mxu0 0.0
        %1477 = vmatpush1.msra.mxu0 0.0
        %1478 = vmatprep.subr.mxu0 0.0
        %1479 = vmatpush1.msra.mxu0 0.0
        %1480 = vmatprep.subr.mxu0 0.0
        %1481 = vmatpush1.msra.mxu0 0.0
        %1482 = vmatprep.subr.mxu0 0.0
        %1483 = vmatpush1.msra.mxu0 0.0
        %1484 = vmatprep.subr.mxu0 0.0
        %1485 = vmatpush1.msra.mxu0 0.0
        %1486 = vmatprep.mubr.f32.mxu0 0.0
        %1487 = vmatmul.mubr.f32.gmra.mrb[0].mxu0 %v1420
        %v1488 = vpop.f32.mrb[0].mxu0
        %v1489 = vadd.f32 0.0, %v1488
        %v1490 = vpop.f32.mrb[0].mxu0
        %1491 = vdwg.mxu0
        %1492 = vrot.lane.b32.xlu0 %v827, 112
        %v1493 = vpop.permute.xlu0 %1492
        %1494 = vrot.lane.b32.xlu0 %v827, 80
        %v1495 = vpop.permute.xlu0 %1494
        %v1496 = vsel %vm836, %v1493, 0
        %v1498 = vsel %vm836, %v1495, 0
        %1500 = vmatprep.subr.mxu0 0.0
        %1501 = vmatpush1.xpose.msra.mxu0 %v1498
        %1502 = vmatprep.subr.mxu0 0.0
        %1503 = vmatpush1.xpose.msra.mxu0 0.0
        %1504 = vmatprep.subr.mxu0 0.0
        %1505 = vmatpush1.xpose.msra.mxu0 0.0
        %1506 = vmatprep.subr.mxu0 0.0
        %1507 = vmatpush1.xpose.msra.mxu0 0.0
        %1508 = vmatprep.subr.mxu0 0.0
        %1509 = vmatpush1.xpose.msra.mxu0 0.0
        %1510 = vmatprep.subr.mxu0 0.0
        %1511 = vmatpush1.xpose.msra.mxu0 0.0
        %1512 = vmatprep.subr.mxu0 0.0
        %1513 = vmatpush1.xpose.msra.mxu0 0.0
        %1514 = vmatprep.subr.mxu0 0.0
        %1515 = vmatpush1.xpose.msra.mxu0 0.0
        %1516 = vmatprep.subr.mxu0 0.0
        %1517 = vmatpush1.xpose.msra.mxu0 0.0
        %1518 = vmatprep.subr.mxu0 0.0
        %1519 = vmatpush1.xpose.msra.mxu0 0.0
        %1520 = vmatprep.subr.mxu0 0.0
        %1521 = vmatpush1.xpose.msra.mxu0 0.0
        %1522 = vmatprep.subr.mxu0 0.0
        %1523 = vmatpush1.xpose.msra.mxu0 0.0
        %1524 = vmatprep.subr.mxu0 0.0
        %1525 = vmatpush1.xpose.msra.mxu0 0.0
        %1526 = vmatprep.subr.mxu0 0.0
        %1527 = vmatpush1.xpose.msra.mxu0 0.0
        %1528 = vmatprep.subr.mxu0 0.0
        %1529 = vmatpush1.xpose.msra.mxu0 0.0
        %1530 = vmatprep.subr.mxu0 0.0
        %1531 = vmatpush1.xpose.msra.mxu0 0.0
        %1532 = vmatprep.subr.mxu0 0.0
        %1533 = vmatpush1.xpose.msra.mxu0 0.0
        %1534 = vmatprep.subr.mxu0 0.0
        %1535 = vmatpush1.xpose.msra.mxu0 0.0
        %1536 = vmatprep.subr.mxu0 0.0
        %1537 = vmatpush1.xpose.msra.mxu0 0.0
        %1538 = vmatprep.subr.mxu0 0.0
        %1539 = vmatpush1.xpose.msra.mxu0 0.0
        %1540 = vmatprep.subr.mxu0 0.0
        %1541 = vmatpush1.xpose.msra.mxu0 0.0
        %1542 = vmatprep.subr.mxu0 0.0
        %1543 = vmatpush1.xpose.msra.mxu0 0.0
        %1544 = vmatprep.subr.mxu0 0.0
        %1545 = vmatpush1.xpose.msra.mxu0 0.0
        %1546 = vmatprep.subr.mxu0 0.0
        %1547 = vmatpush1.xpose.msra.mxu0 0.0
        %1548 = vmatprep.subr.mxu0 0.0
        %1549 = vmatpush1.xpose.msra.mxu0 0.0
        %1550 = vmatprep.subr.mxu0 0.0
        %1551 = vmatpush1.xpose.msra.mxu0 0.0
        %1552 = vmatprep.subr.mxu0 0.0
        %1553 = vmatpush1.xpose.msra.mxu0 0.0
        %1554 = vmatprep.subr.mxu0 0.0
        %1555 = vmatpush1.xpose.msra.mxu0 0.0
        %1556 = vmatprep.subr.mxu0 0.0
        %1557 = vmatpush1.xpose.msra.mxu0 0.0
        %1558 = vmatprep.subr.mxu0 0.0
        %1559 = vmatpush1.xpose.msra.mxu0 0.0
        %1560 = vmatprep.subr.mxu0 0.0
        %1561 = vmatpush1.xpose.msra.mxu0 0.0
        %1562 = vmatprep.subr.mxu0 0.0
        %1563 = vmatpush1.xpose.msra.mxu0 0.0
        %1564 = vmatprep.mubr.f32.mxu0 0.0
        %1565 = vmatmul.mubr.f32.gmra.mrb[0].mxu0 %v1496
        %v1566 = vpop.f32.mrb[0].mxu0
        %v1567 = vadd.f32 %v717, %v1566
        %v1568 = vpop.f32.mrb[0].mxu0
        %1569 = vdwg.mxu0
        %1570 = vrot.lane.b32.xlu0 %v830, 112
        %v1571 = vpop.permute.xlu0 %1570
        %1572 = vrot.lane.b32.xlu0 %v830, 80
        %v1573 = vpop.permute.xlu0 %1572
        %v1574 = vsel %vm836, %v1571, 0
        %v1576 = vsel %vm836, %v1573, 0
        %1578 = vmatprep.subr.mxu0 0.0
        %1579 = vmatpush1.xpose.msra.mxu0 %v1576
        %1580 = vmatprep.subr.mxu0 0.0
        %1581 = vmatpush1.xpose.msra.mxu0 0.0
        %1582 = vmatprep.subr.mxu0 0.0
        %1583 = vmatpush1.xpose.msra.mxu0 0.0
        %1584 = vmatprep.subr.mxu0 0.0
        %1585 = vmatpush1.xpose.msra.mxu0 0.0
        %1586 = vmatprep.subr.mxu0 0.0
        %1587 = vmatpush1.xpose.msra.mxu0 0.0
        %1588 = vmatprep.subr.mxu0 0.0
        %1589 = vmatpush1.xpose.msra.mxu0 0.0
        %1590 = vmatprep.subr.mxu0 0.0
        %1591 = vmatpush1.xpose.msra.mxu0 0.0
        %1592 = vmatprep.subr.mxu0 0.0
        %1593 = vmatpush1.xpose.msra.mxu0 0.0
        %1594 = vmatprep.subr.mxu0 0.0
        %1595 = vmatpush1.xpose.msra.mxu0 0.0
        %1596 = vmatprep.subr.mxu0 0.0
        %1597 = vmatpush1.xpose.msra.mxu0 0.0
        %1598 = vmatprep.subr.mxu0 0.0
        %1599 = vmatpush1.xpose.msra.mxu0 0.0
        %1600 = vmatprep.subr.mxu0 0.0
        %1601 = vmatpush1.xpose.msra.mxu0 0.0
        %1602 = vmatprep.subr.mxu0 0.0
        %1603 = vmatpush1.xpose.msra.mxu0 0.0
        %1604 = vmatprep.subr.mxu0 0.0
        %1605 = vmatpush1.xpose.msra.mxu0 0.0
        %1606 = vmatprep.subr.mxu0 0.0
        %1607 = vmatpush1.xpose.msra.mxu0 0.0
        %1608 = vmatprep.subr.mxu0 0.0
        %1609 = vmatpush1.xpose.msra.mxu0 0.0
        %1610 = vmatprep.subr.mxu0 0.0
        %1611 = vmatpush1.xpose.msra.mxu0 0.0
        %1612 = vmatprep.subr.mxu0 0.0
        %1613 = vmatpush1.xpose.msra.mxu0 0.0
        %1614 = vmatprep.subr.mxu0 0.0
        %1615 = vmatpush1.xpose.msra.mxu0 0.0
        %1616 = vmatprep.subr.mxu0 0.0
        %1617 = vmatpush1.xpose.msra.mxu0 0.0
        %1618 = vmatprep.subr.mxu0 0.0
        %1619 = vmatpush1.xpose.msra.mxu0 0.0
        %1620 = vmatprep.subr.mxu0 0.0
        %1621 = vmatpush1.xpose.msra.mxu0 0.0
        %1622 = vmatprep.subr.mxu0 0.0
        %1623 = vmatpush1.xpose.msra.mxu0 0.0
        %1624 = vmatprep.subr.mxu0 0.0
        %1625 = vmatpush1.xpose.msra.mxu0 0.0
        %1626 = vmatprep.subr.mxu0 0.0
        %1627 = vmatpush1.xpose.msra.mxu0 0.0
        %1628 = vmatprep.subr.mxu0 0.0
        %1629 = vmatpush1.xpose.msra.mxu0 0.0
        %1630 = vmatprep.subr.mxu0 0.0
        %1631 = vmatpush1.xpose.msra.mxu0 0.0
        %1632 = vmatprep.subr.mxu0 0.0
        %1633 = vmatpush1.xpose.msra.mxu0 0.0
        %1634 = vmatprep.subr.mxu0 0.0
        %1635 = vmatpush1.xpose.msra.mxu0 0.0
        %1636 = vmatprep.subr.mxu0 0.0
        %1637 = vmatpush1.xpose.msra.mxu0 0.0
        %1638 = vmatprep.subr.mxu0 0.0
        %1639 = vmatpush1.xpose.msra.mxu0 0.0
        %1640 = vmatprep.subr.mxu0 0.0
        %1641 = vmatpush1.xpose.msra.mxu0 0.0
        %1642 = vmatprep.mubr.f32.mxu0 0.0
        %1643 = vmatmul.mubr.f32.gmra.mrb[0].mxu0 %v1574
        %v1644 = vpop.f32.mrb[0].mxu0
        %v1645 = vadd.f32 %v718, %v1644
        %v1646 = vpop.f32.mrb[0].mxu0
        %1647 = vdwg.mxu0
        %v1648 = vsel %vm836, %v1567, -inf
        %1649 = vmax.xlane.f32.xlu0 %v1648
        %v1650 = vpop.xlane.xlu0 %1649
        %v1651 = vsel %vm836, %v1645, -inf
        %1652 = vmax.xlane.f32.xlu0 %v1651
        %v1653 = vpop.xlane.xlu0 %1652
        %v1654 = vsub.f32 %v1567, %v1650
        %v1655 = vsub.f32 %v1645, %v1653
        %v1656 = vmul.f32 %v1654, 1.442695
        %v1657 = vpow.pop %v1656
        %v1658 = vmul.f32 %v1655, 1.442695
        %v1659 = vpow.pop %v1658
        %v1660 = vsel %vm836, %v1657, 0.0
        %1661 = vadd.xlane.f32.xlu0 %v1660
        %v1662 = vpop.xlane.xlu0 %1661
        %v1663 = vsel %vm836, %v1659, 0.0
        %1664 = vadd.xlane.f32.xlu0 %v1663
        %v1665 = vpop.xlane.xlu0 %1664
        %v1666 = vrcp.pop %v1662
        %v1667 = vrcp.pop %v1665
        %v1668 = vmul.f32 %v1657, %v1666
        %v1669 = vmul.f32 %v1659, %v1667
        %1670 = vrot.lane.b32.xlu0 %v827, 48
        %v1671 = vpop.permute.xlu0 %1670
        %v1674 = vsel %vm836, %v1668, 0
        %1676 = vmatprep.subr.mxu0 0.0
        %1677 = vmatpush1.msra.mxu0 %v1671
        %1678 = vmatprep.subr.mxu0 0.0
        %1679 = vmatpush1.msra.mxu0 0.0
        %1680 = vmatprep.subr.mxu0 0.0
        %1681 = vmatpush1.msra.mxu0 0.0
        %1682 = vmatprep.subr.mxu0 0.0
        %1683 = vmatpush1.msra.mxu0 0.0
        %1684 = vmatprep.subr.mxu0 0.0
        %1685 = vmatpush1.msra.mxu0 0.0
        %1686 = vmatprep.subr.mxu0 0.0
        %1687 = vmatpush1.msra.mxu0 0.0
        %1688 = vmatprep.subr.mxu0 0.0
        %1689 = vmatpush1.msra.mxu0 0.0
        %1690 = vmatprep.subr.mxu0 0.0
        %1691 = vmatpush1.msra.mxu0 0.0
        %1692 = vmatprep.subr.mxu0 0.0
        %1693 = vmatpush1.msra.mxu0 0.0
        %1694 = vmatprep.subr.mxu0 0.0
        %1695 = vmatpush1.msra.mxu0 0.0
        %1696 = vmatprep.subr.mxu0 0.0
        %1697 = vmatpush1.msra.mxu0 0.0
        %1698 = vmatprep.subr.mxu0 0.0
        %1699 = vmatpush1.msra.mxu0 0.0
        %1700 = vmatprep.subr.mxu0 0.0
        %1701 = vmatpush1.msra.mxu0 0.0
        %1702 = vmatprep.subr.mxu0 0.0
        %1703 = vmatpush1.msra.mxu0 0.0
        %1704 = vmatprep.subr.mxu0 0.0
        %1705 = vmatpush1.msra.mxu0 0.0
        %1706 = vmatprep.subr.mxu0 0.0
        %1707 = vmatpush1.msra.mxu0 0.0
        %1708 = vmatprep.subr.mxu0 0.0
        %1709 = vmatpush1.msra.mxu0 0.0
        %1710 = vmatprep.subr.mxu0 0.0
        %1711 = vmatpush1.msra.mxu0 0.0
        %1712 = vmatprep.subr.mxu0 0.0
        %1713 = vmatpush1.msra.mxu0 0.0
        %1714 = vmatprep.subr.mxu0 0.0
        %1715 = vmatpush1.msra.mxu0 0.0
        %1716 = vmatprep.subr.mxu0 0.0
        %1717 = vmatpush1.msra.mxu0 0.0
        %1718 = vmatprep.subr.mxu0 0.0
        %1719 = vmatpush1.msra.mxu0 0.0
        %1720 = vmatprep.subr.mxu0 0.0
        %1721 = vmatpush1.msra.mxu0 0.0
        %1722 = vmatprep.subr.mxu0 0.0
        %1723 = vmatpush1.msra.mxu0 0.0
        %1724 = vmatprep.subr.mxu0 0.0
        %1725 = vmatpush1.msra.mxu0 0.0
        %1726 = vmatprep.subr.mxu0 0.0
        %1727 = vmatpush1.msra.mxu0 0.0
        %1728 = vmatprep.subr.mxu0 0.0
        %1729 = vmatpush1.msra.mxu0 0.0
        %1730 = vmatprep.subr.mxu0 0.0
        %1731 = vmatpush1.msra.mxu0 0.0
        %1732 = vmatprep.subr.mxu0 0.0
        %1733 = vmatpush1.msra.mxu0 0.0
        %1734 = vmatprep.subr.mxu0 0.0
        %1735 = vmatpush1.msra.mxu0 0.0
        %1736 = vmatprep.subr.mxu0 0.0
        %1737 = vmatpush1.msra.mxu0 0.0
        %1738 = vmatprep.subr.mxu0 0.0
        %1739 = vmatpush1.msra.mxu0 0.0
        %1740 = vmatprep.mubr.f32.mxu0 0.0
        %1741 = vmatmul.mubr.f32.gmra.mrb[0].mxu0 %v1674
        %v1742 = vpop.f32.mrb[0].mxu0
        %v1743 = vadd.f32 0.0, %v1742
        %v1744 = vpop.f32.mrb[0].mxu0
        %1745 = vdwg.mxu0
        %1746 = vrot.lane.b32.xlu0 %v830, 48
        %v1747 = vpop.permute.xlu0 %1746
        %v1750 = vsel %vm836, %v1669, 0
        %1752 = vmatprep.subr.mxu0 0.0
        %1753 = vmatpush1.msra.mxu0 %v1747
        %1754 = vmatprep.subr.mxu0 0.0
        %1755 = vmatpush1.msra.mxu0 0.0
        %1756 = vmatprep.subr.mxu0 0.0
        %1757 = vmatpush1.msra.mxu0 0.0
        %1758 = vmatprep.subr.mxu0 0.0
        %1759 = vmatpush1.msra.mxu0 0.0
        %1760 = vmatprep.subr.mxu0 0.0
        %1761 = vmatpush1.msra.mxu0 0.0
        %1762 = vmatprep.subr.mxu0 0.0
        %1763 = vmatpush1.msra.mxu0 0.0
        %1764 = vmatprep.subr.mxu0 0.0
        %1765 = vmatpush1.msra.mxu0 0.0
        %1766 = vmatprep.subr.mxu0 0.0
        %1767 = vmatpush1.msra.mxu0 0.0
        %1768 = vmatprep.subr.mxu0 0.0
        %1769 = vmatpush1.msra.mxu0 0.0
        %1770 = vmatprep.subr.mxu0 0.0
        %1771 = vmatpush1.msra.mxu0 0.0
        %1772 = vmatprep.subr.mxu0 0.0
        %1773 = vmatpush1.msra.mxu0 0.0
        %1774 = vmatprep.subr.mxu0 0.0
        %1775 = vmatpush1.msra.mxu0 0.0
        %1776 = vmatprep.subr.mxu0 0.0
        %1777 = vmatpush1.msra.mxu0 0.0
        %1778 = vmatprep.subr.mxu0 0.0
        %1779 = vmatpush1.msra.mxu0 0.0
        %1780 = vmatprep.subr.mxu0 0.0
        %1781 = vmatpush1.msra.mxu0 0.0
        %1782 = vmatprep.subr.mxu0 0.0
        %1783 = vmatpush1.msra.mxu0 0.0
        %1784 = vmatprep.subr.mxu0 0.0
        %1785 = vmatpush1.msra.mxu0 0.0
        %1786 = vmatprep.subr.mxu0 0.0
        %1787 = vmatpush1.msra.mxu0 0.0
        %1788 = vmatprep.subr.mxu0 0.0
        %1789 = vmatpush1.msra.mxu0 0.0
        %1790 = vmatprep.subr.mxu0 0.0
        %1791 = vmatpush1.msra.mxu0 0.0
        %1792 = vmatprep.subr.mxu0 0.0
        %1793 = vmatpush1.msra.mxu0 0.0
        %1794 = vmatprep.subr.mxu0 0.0
        %1795 = vmatpush1.msra.mxu0 0.0
        %1796 = vmatprep.subr.mxu0 0.0
        %1797 = vmatpush1.msra.mxu0 0.0
        %1798 = vmatprep.subr.mxu0 0.0
        %1799 = vmatpush1.msra.mxu0 0.0
        %1800 = vmatprep.subr.mxu0 0.0
        %1801 = vmatpush1.msra.mxu0 0.0
        %1802 = vmatprep.subr.mxu0 0.0
        %1803 = vmatpush1.msra.mxu0 0.0
        %1804 = vmatprep.subr.mxu0 0.0
        %1805 = vmatpush1.msra.mxu0 0.0
        %1806 = vmatprep.subr.mxu0 0.0
        %1807 = vmatpush1.msra.mxu0 0.0
        %1808 = vmatprep.subr.mxu0 0.0
        %1809 = vmatpush1.msra.mxu0 0.0
        %1810 = vmatprep.subr.mxu0 0.0
        %1811 = vmatpush1.msra.mxu0 0.0
        %1812 = vmatprep.subr.mxu0 0.0
        %1813 = vmatpush1.msra.mxu0 0.0
        %1814 = vmatprep.subr.mxu0 0.0
        %1815 = vmatpush1.msra.mxu0 0.0
        %1816 = vmatprep.mubr.f32.mxu0 0.0
        %1817 = vmatmul.mubr.f32.gmra.mrb[0].mxu0 %v1750
        %v1818 = vpop.f32.mrb[0].mxu0
        %v1819 = vadd.f32 0.0, %v1818
        %v1820 = vpop.f32.mrb[0].mxu0
        %1821 = vdwg.mxu0
        %1822 = vrot.lane.b32.xlu0 %v827, 104
        %v1823 = vpop.permute.xlu0 %1822
        %1824 = vrot.lane.b32.xlu0 %v827, 72
        %v1825 = vpop.permute.xlu0 %1824
        %v1826 = vsel %vm836, %v1823, 0
        %v1828 = vsel %vm836, %v1825, 0
        %1830 = vmatprep.subr.mxu0 0.0
        %1831 = vmatpush1.xpose.msra.mxu0 %v1828
        %1832 = vmatprep.subr.mxu0 0.0
        %1833 = vmatpush1.xpose.msra.mxu0 0.0
        %1834 = vmatprep.subr.mxu0 0.0
        %1835 = vmatpush1.xpose.msra.mxu0 0.0
        %1836 = vmatprep.subr.mxu0 0.0
        %1837 = vmatpush1.xpose.msra.mxu0 0.0
        %1838 = vmatprep.subr.mxu0 0.0
        %1839 = vmatpush1.xpose.msra.mxu0 0.0
        %1840 = vmatprep.subr.mxu0 0.0
        %1841 = vmatpush1.xpose.msra.mxu0 0.0
        %1842 = vmatprep.subr.mxu0 0.0
        %1843 = vmatpush1.xpose.msra.mxu0 0.0
        %1844 = vmatprep.subr.mxu0 0.0
        %1845 = vmatpush1.xpose.msra.mxu0 0.0
        %1846 = vmatprep.subr.mxu0 0.0
        %1847 = vmatpush1.xpose.msra.mxu0 0.0
        %1848 = vmatprep.subr.mxu0 0.0
        %1849 = vmatpush1.xpose.msra.mxu0 0.0
        %1850 = vmatprep.subr.mxu0 0.0
        %1851 = vmatpush1.xpose.msra.mxu0 0.0
        %1852 = vmatprep.subr.mxu0 0.0
        %1853 = vmatpush1.xpose.msra.mxu0 0.0
        %1854 = vmatprep.subr.mxu0 0.0
        %1855 = vmatpush1.xpose.msra.mxu0 0.0
        %1856 = vmatprep.subr.mxu0 0.0
        %1857 = vmatpush1.xpose.msra.mxu0 0.0
        %1858 = vmatprep.subr.mxu0 0.0
        %1859 = vmatpush1.xpose.msra.mxu0 0.0
        %1860 = vmatprep.subr.mxu0 0.0
        %1861 = vmatpush1.xpose.msra.mxu0 0.0
        %1862 = vmatprep.subr.mxu0 0.0
        %1863 = vmatpush1.xpose.msra.mxu0 0.0
        %1864 = vmatprep.subr.mxu0 0.0
        %1865 = vmatpush1.xpose.msra.mxu0 0.0
        %1866 = vmatprep.subr.mxu0 0.0
        %1867 = vmatpush1.xpose.msra.mxu0 0.0
        %1868 = vmatprep.subr.mxu0 0.0
        %1869 = vmatpush1.xpose.msra.mxu0 0.0
        %1870 = vmatprep.subr.mxu0 0.0
        %1871 = vmatpush1.xpose.msra.mxu0 0.0
        %1872 = vmatprep.subr.mxu0 0.0
        %1873 = vmatpush1.xpose.msra.mxu0 0.0
        %1874 = vmatprep.subr.mxu0 0.0
        %1875 = vmatpush1.xpose.msra.mxu0 0.0
        %1876 = vmatprep.subr.mxu0 0.0
        %1877 = vmatpush1.xpose.msra.mxu0 0.0
        %1878 = vmatprep.subr.mxu0 0.0
        %1879 = vmatpush1.xpose.msra.mxu0 0.0
        %1880 = vmatprep.subr.mxu0 0.0
        %1881 = vmatpush1.xpose.msra.mxu0 0.0
        %1882 = vmatprep.subr.mxu0 0.0
        %1883 = vmatpush1.xpose.msra.mxu0 0.0
        %1884 = vmatprep.subr.mxu0 0.0
        %1885 = vmatpush1.xpose.msra.mxu0 0.0
        %1886 = vmatprep.subr.mxu0 0.0
        %1887 = vmatpush1.xpose.msra.mxu0 0.0
        %1888 = vmatprep.subr.mxu0 0.0
        %1889 = vmatpush1.xpose.msra.mxu0 0.0
        %1890 = vmatprep.subr.mxu0 0.0
        %1891 = vmatpush1.xpose.msra.mxu0 0.0
        %1892 = vmatprep.subr.mxu0 0.0
        %1893 = vmatpush1.xpose.msra.mxu0 0.0
        %1894 = vmatprep.mubr.f32.mxu0 0.0
        %1895 = vmatmul.mubr.f32.gmra.mrb[0].mxu0 %v1826
        %v1896 = vpop.f32.mrb[0].mxu0
        %v1897 = vadd.f32 %v717, %v1896
        %v1898 = vpop.f32.mrb[0].mxu0
        %1899 = vdwg.mxu0
        %1900 = vrot.lane.b32.xlu0 %v830, 104
        %v1901 = vpop.permute.xlu0 %1900
        %1902 = vrot.lane.b32.xlu0 %v830, 72
        %v1903 = vpop.permute.xlu0 %1902
        %v1904 = vsel %vm836, %v1901, 0
        %v1906 = vsel %vm836, %v1903, 0
        %1908 = vmatprep.subr.mxu0 0.0
        %1909 = vmatpush1.xpose.msra.mxu0 %v1906
        %1910 = vmatprep.subr.mxu0 0.0
        %1911 = vmatpush1.xpose.msra.mxu0 0.0
        %1912 = vmatprep.subr.mxu0 0.0
        %1913 = vmatpush1.xpose.msra.mxu0 0.0
        %1914 = vmatprep.subr.mxu0 0.0
        %1915 = vmatpush1.xpose.msra.mxu0 0.0
        %1916 = vmatprep.subr.mxu0 0.0
        %1917 = vmatpush1.xpose.msra.mxu0 0.0
        %1918 = vmatprep.subr.mxu0 0.0
        %1919 = vmatpush1.xpose.msra.mxu0 0.0
        %1920 = vmatprep.subr.mxu0 0.0
        %1921 = vmatpush1.xpose.msra.mxu0 0.0
        %1922 = vmatprep.subr.mxu0 0.0
        %1923 = vmatpush1.xpose.msra.mxu0 0.0
        %1924 = vmatprep.subr.mxu0 0.0
        %1925 = vmatpush1.xpose.msra.mxu0 0.0
        %1926 = vmatprep.subr.mxu0 0.0
        %1927 = vmatpush1.xpose.msra.mxu0 0.0
        %1928 = vmatprep.subr.mxu0 0.0
        %1929 = vmatpush1.xpose.msra.mxu0 0.0
        %1930 = vmatprep.subr.mxu0 0.0
        %1931 = vmatpush1.xpose.msra.mxu0 0.0
        %1932 = vmatprep.subr.mxu0 0.0
        %1933 = vmatpush1.xpose.msra.mxu0 0.0
        %1934 = vmatprep.subr.mxu0 0.0
        %1935 = vmatpush1.xpose.msra.mxu0 0.0
        %1936 = vmatprep.subr.mxu0 0.0
        %1937 = vmatpush1.xpose.msra.mxu0 0.0
        %1938 = vmatprep.subr.mxu0 0.0
        %1939 = vmatpush1.xpose.msra.mxu0 0.0
        %1940 = vmatprep.subr.mxu0 0.0
        %1941 = vmatpush1.xpose.msra.mxu0 0.0
        %1942 = vmatprep.subr.mxu0 0.0
        %1943 = vmatpush1.xpose.msra.mxu0 0.0
        %1944 = vmatprep.subr.mxu0 0.0
        %1945 = vmatpush1.xpose.msra.mxu0 0.0
        %1946 = vmatprep.subr.mxu0 0.0
        %1947 = vmatpush1.xpose.msra.mxu0 0.0
        %1948 = vmatprep.subr.mxu0 0.0
        %1949 = vmatpush1.xpose.msra.mxu0 0.0
        %1950 = vmatprep.subr.mxu0 0.0
        %1951 = vmatpush1.xpose.msra.mxu0 0.0
        %1952 = vmatprep.subr.mxu0 0.0
        %1953 = vmatpush1.xpose.msra.mxu0 0.0
        %1954 = vmatprep.subr.mxu0 0.0
        %1955 = vmatpush1.xpose.msra.mxu0 0.0
        %1956 = vmatprep.subr.mxu0 0.0
        %1957 = vmatpush1.xpose.msra.mxu0 0.0
        %1958 = vmatprep.subr.mxu0 0.0
        %1959 = vmatpush1.xpose.msra.mxu0 0.0
        %1960 = vmatprep.subr.mxu0 0.0
        %1961 = vmatpush1.xpose.msra.mxu0 0.0
        %1962 = vmatprep.subr.mxu0 0.0
        %1963 = vmatpush1.xpose.msra.mxu0 0.0
        %1964 = vmatprep.subr.mxu0 0.0
        %1965 = vmatpush1.xpose.msra.mxu0 0.0
        %1966 = vmatprep.subr.mxu0 0.0
        %1967 = vmatpush1.xpose.msra.mxu0 0.0
        %1968 = vmatprep.subr.mxu0 0.0
        %1969 = vmatpush1.xpose.msra.mxu0 0.0
        %1970 = vmatprep.subr.mxu0 0.0
        %1971 = vmatpush1.xpose.msra.mxu0 0.0
        %1972 = vmatprep.mubr.f32.mxu0 0.0
        %1973 = vmatmul.mubr.f32.gmra.mrb[0].mxu0 %v1904
        %v1974 = vpop.f32.mrb[0].mxu0
        %v1975 = vadd.f32 %v718, %v1974
        %v1976 = vpop.f32.mrb[0].mxu0
        %1977 = vdwg.mxu0
        %v1978 = vsel %vm836, %v1897, -inf
        %1979 = vmax.xlane.f32.xlu0 %v1978
        %v1980 = vpop.xlane.xlu0 %1979
        %v1981 = vsel %vm836, %v1975, -inf
        %1982 = vmax.xlane.f32.xlu0 %v1981
        %v1983 = vpop.xlane.xlu0 %1982
        %v1984 = vsub.f32 %v1897, %v1980
        %v1985 = vsub.f32 %v1975, %v1983
        %v1986 = vmul.f32 %v1984, 1.442695
        %v1987 = vpow.pop %v1986
        %v1988 = vmul.f32 %v1985, 1.442695
        %v1989 = vpow.pop %v1988
        %v1990 = vsel %vm836, %v1987, 0.0
        %1991 = vadd.xlane.f32.xlu0 %v1990
        %v1992 = vpop.xlane.xlu0 %1991
        %v1993 = vsel %vm836, %v1989, 0.0
        %1994 = vadd.xlane.f32.xlu0 %v1993
        %v1995 = vpop.xlane.xlu0 %1994
        %v1996 = vrcp.pop %v1992
        %v1997 = vrcp.pop %v1995
        %v1998 = vmul.f32 %v1987, %v1996
        %v1999 = vmul.f32 %v1989, %v1997
        %2000 = vrot.lane.b32.xlu0 %v827, 40
        %v2001 = vpop.permute.xlu0 %2000
        %v2004 = vsel %vm836, %v1998, 0
        %2006 = vmatprep.subr.mxu0 0.0
        %2007 = vmatpush1.msra.mxu0 %v2001
        %2008 = vmatprep.subr.mxu0 0.0
        %2009 = vmatpush1.msra.mxu0 0.0
        %2010 = vmatprep.subr.mxu0 0.0
        %2011 = vmatpush1.msra.mxu0 0.0
        %2012 = vmatprep.subr.mxu0 0.0
        %2013 = vmatpush1.msra.mxu0 0.0
        %2014 = vmatprep.subr.mxu0 0.0
        %2015 = vmatpush1.msra.mxu0 0.0
        %2016 = vmatprep.subr.mxu0 0.0
        %2017 = vmatpush1.msra.mxu0 0.0
        %2018 = vmatprep.subr.mxu0 0.0
        %2019 = vmatpush1.msra.mxu0 0.0
        %2020 = vmatprep.subr.mxu0 0.0
        %2021 = vmatpush1.msra.mxu0 0.0
        %2022 = vmatprep.subr.mxu0 0.0
        %2023 = vmatpush1.msra.mxu0 0.0
        %2024 = vmatprep.subr.mxu0 0.0
        %2025 = vmatpush1.msra.mxu0 0.0
        %2026 = vmatprep.subr.mxu0 0.0
        %2027 = vmatpush1.msra.mxu0 0.0
        %2028 = vmatprep.subr.mxu0 0.0
        %2029 = vmatpush1.msra.mxu0 0.0
        %2030 = vmatprep.subr.mxu0 0.0
        %2031 = vmatpush1.msra.mxu0 0.0
        %2032 = vmatprep.subr.mxu0 0.0
        %2033 = vmatpush1.msra.mxu0 0.0
        %2034 = vmatprep.subr.mxu0 0.0
        %2035 = vmatpush1.msra.mxu0 0.0
        %2036 = vmatprep.subr.mxu0 0.0
        %2037 = vmatpush1.msra.mxu0 0.0
        %2038 = vmatprep.subr.mxu0 0.0
        %2039 = vmatpush1.msra.mxu0 0.0
        %2040 = vmatprep.subr.mxu0 0.0
        %2041 = vmatpush1.msra.mxu0 0.0
        %2042 = vmatprep.subr.mxu0 0.0
        %2043 = vmatpush1.msra.mxu0 0.0
        %2044 = vmatprep.subr.mxu0 0.0
        %2045 = vmatpush1.msra.mxu0 0.0
        %2046 = vmatprep.subr.mxu0 0.0
        %2047 = vmatpush1.msra.mxu0 0.0
        %2048 = vmatprep.subr.mxu0 0.0
        %2049 = vmatpush1.msra.mxu0 0.0
        %2050 = vmatprep.subr.mxu0 0.0
        %2051 = vmatpush1.msra.mxu0 0.0
        %2052 = vmatprep.subr.mxu0 0.0
        %2053 = vmatpush1.msra.mxu0 0.0
        %2054 = vmatprep.subr.mxu0 0.0
        %2055 = vmatpush1.msra.mxu0 0.0
        %2056 = vmatprep.subr.mxu0 0.0
        %2057 = vmatpush1.msra.mxu0 0.0
        %2058 = vmatprep.subr.mxu0 0.0
        %2059 = vmatpush1.msra.mxu0 0.0
        %2060 = vmatprep.subr.mxu0 0.0
        %2061 = vmatpush1.msra.mxu0 0.0
        %2062 = vmatprep.subr.mxu0 0.0
        %2063 = vmatpush1.msra.mxu0 0.0
        %2064 = vmatprep.subr.mxu0 0.0
        %2065 = vmatpush1.msra.mxu0 0.0
        %2066 = vmatprep.subr.mxu0 0.0
        %2067 = vmatpush1.msra.mxu0 0.0
        %2068 = vmatprep.subr.mxu0 0.0
        %2069 = vmatpush1.msra.mxu0 0.0
        %2070 = vmatprep.mubr.f32.mxu0 0.0
        %2071 = vmatmul.mubr.f32.gmra.mrb[0].mxu0 %v2004
        %v2072 = vpop.f32.mrb[0].mxu0
        %v2073 = vadd.f32 0.0, %v2072
        %v2074 = vpop.f32.mrb[0].mxu0
        %2075 = vdwg.mxu0
        %2076 = vrot.lane.b32.xlu0 %v830, 40
        %v2077 = vpop.permute.xlu0 %2076
        %v2080 = vsel %vm836, %v1999, 0
        %2082 = vmatprep.subr.mxu0 0.0
        %2083 = vmatpush1.msra.mxu0 %v2077
        %2084 = vmatprep.subr.mxu0 0.0
        %2085 = vmatpush1.msra.mxu0 0.0
        %2086 = vmatprep.subr.mxu0 0.0
        %2087 = vmatpush1.msra.mxu0 0.0
        %2088 = vmatprep.subr.mxu0 0.0
        %2089 = vmatpush1.msra.mxu0 0.0
        %2090 = vmatprep.subr.mxu0 0.0
        %2091 = vmatpush1.msra.mxu0 0.0
        %2092 = vmatprep.subr.mxu0 0.0
        %2093 = vmatpush1.msra.mxu0 0.0
        %2094 = vmatprep.subr.mxu0 0.0
        %2095 = vmatpush1.msra.mxu0 0.0
        %2096 = vmatprep.subr.mxu0 0.0
        %2097 = vmatpush1.msra.mxu0 0.0
        %2098 = vmatprep.subr.mxu0 0.0
        %2099 = vmatpush1.msra.mxu0 0.0
        %2100 = vmatprep.subr.mxu0 0.0
        %2101 = vmatpush1.msra.mxu0 0.0
        %2102 = vmatprep.subr.mxu0 0.0
        %2103 = vmatpush1.msra.mxu0 0.0
        %2104 = vmatprep.subr.mxu0 0.0
        %2105 = vmatpush1.msra.mxu0 0.0
        %2106 = vmatprep.subr.mxu0 0.0
        %2107 = vmatpush1.msra.mxu0 0.0
        %2108 = vmatprep.subr.mxu0 0.0
        %2109 = vmatpush1.msra.mxu0 0.0
        %2110 = vmatprep.subr.mxu0 0.0
        %2111 = vmatpush1.msra.mxu0 0.0
        %2112 = vmatprep.subr.mxu0 0.0
        %2113 = vmatpush1.msra.mxu0 0.0
        %2114 = vmatprep.subr.mxu0 0.0
        %2115 = vmatpush1.msra.mxu0 0.0
        %2116 = vmatprep.subr.mxu0 0.0
        %2117 = vmatpush1.msra.mxu0 0.0
        %2118 = vmatprep.subr.mxu0 0.0
        %2119 = vmatpush1.msra.mxu0 0.0
        %2120 = vmatprep.subr.mxu0 0.0
        %2121 = vmatpush1.msra.mxu0 0.0
        %2122 = vmatprep.subr.mxu0 0.0
        %2123 = vmatpush1.msra.mxu0 0.0
        %2124 = vmatprep.subr.mxu0 0.0
        %2125 = vmatpush1.msra.mxu0 0.0
        %2126 = vmatprep.subr.mxu0 0.0
        %2127 = vmatpush1.msra.mxu0 0.0
        %2128 = vmatprep.subr.mxu0 0.0
        %2129 = vmatpush1.msra.mxu0 0.0
        %2130 = vmatprep.subr.mxu0 0.0
        %2131 = vmatpush1.msra.mxu0 0.0
        %2132 = vmatprep.subr.mxu0 0.0
        %2133 = vmatpush1.msra.mxu0 0.0
        %2134 = vmatprep.subr.mxu0 0.0
        %2135 = vmatpush1.msra.mxu0 0.0
        %2136 = vmatprep.subr.mxu0 0.0
        %2137 = vmatpush1.msra.mxu0 0.0
        %2138 = vmatprep.subr.mxu0 0.0
        %2139 = vmatpush1.msra.mxu0 0.0
        %2140 = vmatprep.subr.mxu0 0.0
        %2141 = vmatpush1.msra.mxu0 0.0
        %2142 = vmatprep.subr.mxu0 0.0
        %2143 = vmatpush1.msra.mxu0 0.0
        %2144 = vmatprep.subr.mxu0 0.0
        %2145 = vmatpush1.msra.mxu0 0.0
        %2146 = vmatprep.mubr.f32.mxu0 0.0
        %2147 = vmatmul.mubr.f32.gmra.mrb[0].mxu0 %v2080
        %v2148 = vpop.f32.mrb[0].mxu0
        %v2149 = vadd.f32 0.0, %v2148
        %v2150 = vpop.f32.mrb[0].mxu0
        %2151 = vdwg.mxu0
        %2154 = vrot.lane.b32.xlu0 %v1413, 8
        %v2155 = vpop.permute.xlu0 %2154
        %2156 = vrot.lane.b32.xlu0 %v1489, 8
        %v2157 = vpop.permute.xlu0 %2156
        %2162 = vrot.lane.b32.xlu0 %v1743, 16
        %v2163 = vpop.permute.xlu0 %2162
        %2164 = vrot.lane.b32.xlu0 %v1819, 16
        %v2165 = vpop.permute.xlu0 %2164
        %2170 = vrot.lane.b32.xlu0 %v2073, 24
        %v2171 = vpop.permute.xlu0 %2170
        %2172 = vrot.lane.b32.xlu0 %v2149, 24
        %v2173 = vpop.permute.xlu0 %2172
        %v2176 = vsel %vm836, %v1083, %v2155
        %v2177 = vsel %vm836, %v1159, %v2157
        %vm2178 = vcmask 130048
        %v2179 = vsel %vm2178, %v2176, %v2163
        %v2180 = vsel %vm2178, %v2177, %v2165
        %vm2181 = vcmask 195584
        %v2182 = vsel %vm2181, %v2179, %v2171
        %v2183 = vsel %vm2181, %v2180, %v2173
        %v2184 = vpack.c.bf16 %v2183, %v2182
        %v2185 = vld [vmem:[%s673] sm:$0xf]
        %v2186 = vld [vmem:[%s673 + $0x4] sm:$0xf]
        %v2187 = vld [vmem:[%s673 + $0x8] sm:$0xf]
        %v2188 = vld [vmem:[%s673 + $0xc] sm:$0xf]
        %v2193 = vunpack.c.l.b16 %v2185
        %v2194 = vunpack.c.l.b16 %v2186
        %v2195 = vunpack.c.l.b16 %v2187
        %v2196 = vunpack.c.l.b16 %v2188
        %v2197 = vpack.c.b16 %v2194, %v2193
        %v2198 = vpack.c.b16 %v2196, %v2195
        %v2202 = vsel %vm721, %v2184, 0
        %2204 = vmatprep.subr.bf16.mxu0 0
        %2205 = vmatpush1.bf16.msra.mxu0 %v2197
        %2206 = vmatprep.subr.bf16.mxu0 0
        %2207 = vmatpush1.bf16.msra.mxu0 %v2198
        %2208 = vmatprep.subr.bf16.mxu0 0
        %2209 = vmatpush1.bf16.msra.mxu0 0
        %2210 = vmatprep.subr.bf16.mxu0 0
        %2211 = vmatpush1.bf16.msra.mxu0 0
        %2212 = vmatprep.subr.bf16.mxu0 0
        %2213 = vmatpush1.bf16.msra.mxu0 0
        %2214 = vmatprep.subr.bf16.mxu0 0
        %2215 = vmatpush1.bf16.msra.mxu0 0
        %2216 = vmatprep.subr.bf16.mxu0 0
        %2217 = vmatpush1.bf16.msra.mxu0 0
        %2218 = vmatprep.subr.bf16.mxu0 0
        %2219 = vmatpush1.bf16.msra.mxu0 0
        %2220 = vmatprep.subr.bf16.mxu0 0
        %2221 = vmatpush1.bf16.msra.mxu0 0
        %2222 = vmatprep.subr.bf16.mxu0 0
        %2223 = vmatpush1.bf16.msra.mxu0 0
        %2224 = vmatprep.subr.bf16.mxu0 0
        %2225 = vmatpush1.bf16.msra.mxu0 0
        %2226 = vmatprep.subr.bf16.mxu0 0
        %2227 = vmatpush1.bf16.msra.mxu0 0
        %2228 = vmatprep.subr.bf16.mxu0 0
        %2229 = vmatpush1.bf16.msra.mxu0 0
        %2230 = vmatprep.subr.bf16.mxu0 0
        %2231 = vmatpush1.bf16.msra.mxu0 0
        %2232 = vmatprep.subr.bf16.mxu0 0
        %2233 = vmatpush1.bf16.msra.mxu0 0
        %2234 = vmatprep.subr.bf16.mxu0 0
        %2235 = vmatpush1.bf16.msra.mxu0 0
        %2236 = vmatprep.mubr.bf16.mxu0 0
        %2237 = vmatmul.mubr.bf16.gmra.mrb[0].mxu0 %v2202
        %v2238 = vpop.f32.mrb[0].mxu0
        %v2239 = vadd.f32 0.0, %v2238
        %v2240 = vpop.f32.mrb[0].mxu0
        %v2241 = vpop.f32.mrb[0].mxu0
        %v2242 = vadd.f32 0.0, %v2241
        %v2243 = vpop.f32.mrb[0].mxu0
        %2244 = vdwg.mxu0
        %v2245 = vadd.f32 %v715, %v2239
        %v2246 = vadd.f32 %v716, %v2242
        %v2247 = vld [vmem:[%s676] sm:$0x1]
        %v2249 = vlaneseq
        %v2250 = vshrl.u32 %v2249, 7
        %v2251 = vsub.s32 0, %v2250
        %v2252 = vrot.slane %v2247, %v2251
        %v2254 = vadd.f32 %v2245, %v2252
        %v2255 = vadd.f32 %v2246, %v2252
        %v2256 = vld [vmem:[%s701] sm:$0x1]
        %v2257 = vld [vmem:[%s704] sm:$0x1]
        %v2258 = vsel %vm721, %v2254, 0.0
        %2259 = vadd.xlane.f32.xlu0 %v2258
        %v2260 = vpop.xlane.xlu0 %2259
        %v2261 = vsel %vm721, %v2255, 0.0
        %2262 = vadd.xlane.f32.xlu0 %v2261
        %v2263 = vpop.xlane.xlu0 %2262
        %v2264 = vmul.f32 %v2260, %v728
        %v2265 = vmul.f32 %v2263, %v728
        %v2266 = vsub.f32 %v2254, %v2264
        %v2267 = vsub.f32 %v2255, %v2265
        %v2268 = vmul.f32 %v2266, %v2266
        %v2269 = vmul.f32 %v2267, %v2267
        %v2270 = vsel %vm721, %v2268, 0.0
        %2271 = vadd.xlane.f32.xlu0 %v2270
        %v2272 = vpop.xlane.xlu0 %2271
        %v2273 = vsel %vm721, %v2269, 0.0
        %2274 = vadd.xlane.f32.xlu0 %v2273
        %v2275 = vpop.xlane.xlu0 %2274
        %v2276 = vmul.f32 %v2272, %v728
        %v2277 = vmul.f32 %v2275, %v728
        %v2278 = vadd.f32 %v2276, 1e-06
        %v2279 = vadd.f32 %v2277, 1e-06
        %v2280 = vrsqrt.pop %v2278
        %v2281 = vrsqrt.pop %v2279
        %v2282 = vmul.f32 %v2266, %v2280
        %v2283 = vmul.f32 %v2267, %v2281
        %v2285 = vlaneseq
        %v2286 = vshrl.u32 %v2285, 7
        %v2287 = vsub.s32 0, %v2286
        %v2288 = vrot.slane %v2256, %v2287
        %v2290 = vmul.f32 %v2282, %v2288
        %v2291 = vmul.f32 %v2283, %v2288
        %v2293 = vlaneseq
        %v2294 = vshrl.u32 %v2293, 7
        %v2295 = vsub.s32 0, %v2294
        %v2296 = vrot.slane %v2257, %v2295
        %v2298 = vadd.f32 %v2290, %v2296
        %v2299 = vadd.f32 %v2291, %v2296
        %v2300 = vpack.c.bf16 %v2299, %v2298
        %v2301 = vld [vmem:[%s687] sm:$0xf]
        %v2302 = vld [vmem:[%s687 + $0x4] sm:$0xf]
        %v2303 = vld [vmem:[%s687 + $0x8] sm:$0xf]
        %v2304 = vld [vmem:[%s687 + $0xc] sm:$0xf]
        %v2305 = vld [vmem:[%s690] sm:$0x1]
        %v2307 = vlaneseq
        %v2308 = vshrl.u32 %v2307, 7
        %v2309 = vsub.s32 0, %v2308
        %v2310 = vrot.slane %v2305, %v2309
        %v2316 = vunpack.c.l.b16 %v2301
        %v2317 = vunpack.c.l.b16 %v2302
        %v2318 = vunpack.c.l.b16 %v2303
        %v2319 = vunpack.c.l.b16 %v2304
        %v2320 = vpack.c.b16 %v2317, %v2316
        %v2321 = vpack.c.b16 %v2319, %v2318
        %v2325 = vsel %vm721, %v2300, 0
        %2327 = vmatprep.subr.bf16.mxu0 0
        %2328 = vmatpush1.bf16.msra.mxu0 %v2320
        %2329 = vmatprep.subr.bf16.mxu0 0
        %2330 = vmatpush1.bf16.msra.mxu0 %v2321
        %2331 = vmatprep.subr.bf16.mxu0 0
        %2332 = vmatpush1.bf16.msra.mxu0 0
        %2333 = vmatprep.subr.bf16.mxu0 0
        %2334 = vmatpush1.bf16.msra.mxu0 0
        %2335 = vmatprep.subr.bf16.mxu0 0
        %2336 = vmatpush1.bf16.msra.mxu0 0
        %2337 = vmatprep.subr.bf16.mxu0 0
        %2338 = vmatpush1.bf16.msra.mxu0 0
        %2339 = vmatprep.subr.bf16.mxu0 0
        %2340 = vmatpush1.bf16.msra.mxu0 0
        %2341 = vmatprep.subr.bf16.mxu0 0
        %2342 = vmatpush1.bf16.msra.mxu0 0
        %2343 = vmatprep.subr.bf16.mxu0 0
        %2344 = vmatpush1.bf16.msra.mxu0 0
        %2345 = vmatprep.subr.bf16.mxu0 0
        %2346 = vmatpush1.bf16.msra.mxu0 0
        %2347 = vmatprep.subr.bf16.mxu0 0
        %2348 = vmatpush1.bf16.msra.mxu0 0
        %2349 = vmatprep.subr.bf16.mxu0 0
        %2350 = vmatpush1.bf16.msra.mxu0 0
        %2351 = vmatprep.subr.bf16.mxu0 0
        %2352 = vmatpush1.bf16.msra.mxu0 0
        %2353 = vmatprep.subr.bf16.mxu0 0
        %2354 = vmatpush1.bf16.msra.mxu0 0
        %2355 = vmatprep.subr.bf16.mxu0 0
        %2356 = vmatpush1.bf16.msra.mxu0 0
        %2357 = vmatprep.subr.bf16.mxu0 0
        %2358 = vmatpush1.bf16.msra.mxu0 0
        %2359 = vmatprep.mubr.bf16.mxu0 0
        %2360 = vmatmul.mubr.bf16.gmra.mrb[0].mxu0 %v2325
        %v2361 = vpop.f32.mrb[0].mxu0
        %v2362 = vadd.f32 %v2310, %v2361
        %v2363 = vpop.f32.mrb[0].mxu0
        %v2364 = vpop.f32.mrb[0].mxu0
        %v2365 = vadd.f32 %v2310, %v2364
        %v2366 = vpop.f32.mrb[0].mxu0
        %2367 = vdwg.mxu0
        %v2368 = vmul.f32 %v2362, %v2362
        %v2369 = vmul.f32 %v2365, %v2365
        %v2370 = vmul.f32 %v2362, %v2368
        %v2371 = vmul.f32 %v2365, %v2369
        %v2372 = vmul.f32 %v2370, 0.044715
        %v2373 = vmul.f32 %v2371, 0.044715
        %v2374 = vadd.f32 %v2362, %v2372
        %v2375 = vadd.f32 %v2365, %v2373
        %v2376 = vmul.f32 %v2374, 0.7978846
        %v2377 = vmul.f32 %v2375, 0.7978846
        %v2378 = vtanh.pop %v2376
        %v2379 = vtanh.pop %v2377
        %v2380 = vadd.f32 %v2378, 1.0
        %v2381 = vadd.f32 %v2379, 1.0
        %v2382 = vmul.f32 %v2380, 0.5
        %v2383 = vmul.f32 %v2381, 0.5
        %v2384 = vmul.f32 %v2362, %v2382
        %v2385 = vmul.f32 %v2365, %v2383
        %v2386 = vpack.c.bf16 %v2385, %v2384
        %v2387 = vld [vmem:[%s695] sm:$0xf]
        %v2388 = vld [vmem:[%s695 + $0x4] sm:$0xf]
        %v2389 = vld [vmem:[%s695 + $0x8] sm:$0xf]
        %v2390 = vld [vmem:[%s695 + $0xc] sm:$0xf]
        %v2391 = vld [vmem:[%s695 + $0x10] sm:$0xf]
        %v2392 = vld [vmem:[%s695 + $0x14] sm:$0xf]
        %v2393 = vld [vmem:[%s695 + $0x18] sm:$0xf]
        %v2394 = vld [vmem:[%s695 + $0x1c] sm:$0xf]
        %v2395 = vld [vmem:[%s695 + $0x20] sm:$0xf]
        %v2396 = vld [vmem:[%s695 + $0x24] sm:$0xf]
        %v2397 = vld [vmem:[%s695 + $0x28] sm:$0xf]
        %v2398 = vld [vmem:[%s695 + $0x2c] sm:$0xf]
        %v2399 = vld [vmem:[%s695 + $0x30] sm:$0xf]
        %v2400 = vld [vmem:[%s695 + $0x34] sm:$0xf]
        %v2401 = vld [vmem:[%s695 + $0x38] sm:$0xf]
        %v2402 = vld [vmem:[%s695 + $0x3c] sm:$0xf]
        %v2419 = vunpack.c.l.b16 %v2387
        %v2420 = vunpack.c.l.b16 %v2388
        %v2421 = vunpack.c.l.b16 %v2389
        %v2422 = vunpack.c.l.b16 %v2390
        %v2423 = vunpack.c.l.b16 %v2391
        %v2424 = vunpack.c.l.b16 %v2392
        %v2425 = vunpack.c.l.b16 %v2393
        %v2426 = vunpack.c.l.b16 %v2394
        %v2427 = vunpack.c.l.b16 %v2395
        %v2428 = vunpack.c.l.b16 %v2396
        %v2429 = vunpack.c.l.b16 %v2397
        %v2430 = vunpack.c.l.b16 %v2398
        %v2431 = vunpack.c.l.b16 %v2399
        %v2432 = vunpack.c.l.b16 %v2400
        %v2433 = vunpack.c.l.b16 %v2401
        %v2434 = vunpack.c.l.b16 %v2402
        %v2435 = vpack.c.b16 %v2420, %v2419
        %v2436 = vpack.c.b16 %v2422, %v2421
        %v2437 = vpack.c.b16 %v2424, %v2423
        %v2438 = vpack.c.b16 %v2426, %v2425
        %v2439 = vpack.c.b16 %v2428, %v2427
        %v2440 = vpack.c.b16 %v2430, %v2429
        %v2441 = vpack.c.b16 %v2432, %v2431
        %v2442 = vpack.c.b16 %v2434, %v2433
        %2451 = vmatprep.subr.bf16.mxu0 0
        %2452 = vmatpush1.bf16.msra.mxu0 %v2435
        %2453 = vmatprep.subr.bf16.mxu0 0
        %2454 = vmatpush1.bf16.msra.mxu0 %v2436
        %2455 = vmatprep.subr.bf16.mxu0 0
        %2456 = vmatpush1.bf16.msra.mxu0 %v2437
        %2457 = vmatprep.subr.bf16.mxu0 0
        %2458 = vmatpush1.bf16.msra.mxu0 %v2438
        %2459 = vmatprep.subr.bf16.mxu0 0
        %2460 = vmatpush1.bf16.msra.mxu0 %v2439
        %2461 = vmatprep.subr.bf16.mxu0 0
        %2462 = vmatpush1.bf16.msra.mxu0 %v2440
        %2463 = vmatprep.subr.bf16.mxu0 0
        %2464 = vmatpush1.bf16.msra.mxu0 %v2441
        %2465 = vmatprep.subr.bf16.mxu0 0
        %2466 = vmatpush1.bf16.msra.mxu0 %v2442
        %2467 = vmatprep.subr.bf16.mxu0 0
        %2468 = vmatpush1.bf16.msra.mxu0 0
        %2469 = vmatprep.subr.bf16.mxu0 0
        %2470 = vmatpush1.bf16.msra.mxu0 0
        %2471 = vmatprep.subr.bf16.mxu0 0
        %2472 = vmatpush1.bf16.msra.mxu0 0
        %2473 = vmatprep.subr.bf16.mxu0 0
        %2474 = vmatpush1.bf16.msra.mxu0 0
        %2475 = vmatprep.subr.bf16.mxu0 0
        %2476 = vmatpush1.bf16.msra.mxu0 0
        %2477 = vmatprep.subr.bf16.mxu0 0
        %2478 = vmatpush1.bf16.msra.mxu0 0
        %2479 = vmatprep.subr.bf16.mxu0 0
        %2480 = vmatpush1.bf16.msra.mxu0 0
        %2481 = vmatprep.subr.bf16.mxu0 0
        %2482 = vmatpush1.bf16.msra.mxu0 0
        %2483 = vmatprep.mubr.bf16.mxu0 0
        %2484 = vmatmul.mubr.bf16.gmra.mrb[0].mxu0 %v2386
        %v2485 = vpop.f32.mrb[0].mxu0
        %v2486 = vadd.f32 0.0, %v2485
        %v2487 = vpop.f32.mrb[0].mxu0
        %v2488 = vpop.f32.mrb[0].mxu0
        %v2489 = vadd.f32 0.0, %v2488
        %v2490 = vpop.f32.mrb[0].mxu0
        %2491 = vdwg.mxu0
        %v2492 = vadd.f32 %v2254, %v2486
        %v2493 = vadd.f32 %v2255, %v2489
        %v2494 = vld [vmem:[%s698] sm:$0x1]
        %v2496 = vlaneseq
        %v2497 = vshrl.u32 %v2496, 7
        %v2498 = vsub.s32 0, %v2497
        %v2499 = vrot.slane %v2494, %v2498
        %v2501 = vadd.f32 %v2492, %v2499
        %v2502 = vadd.f32 %v2493, %v2499
        %2503 = vst.msk [vmem:[#allocation2] sm:$0xff] %vm721, %v2501
        %2504 = vst.msk [vmem:[#allocation2 + $0x8] sm:$0xff] %vm721, %v2502
        %p2505 = scmp.eq.s32.totalorder %s30, 1
        // Predicated region
        $region89: #{bert_lm_forward.1} parent=83 // pred_check
          %p2506 = pneg %p2505
        $region90: #{bert_lm_forward.1} parent=83 // pred_check_branch
          %2508 = sbr.rel (%p2506) target = $region92
        $region91: #{bert_lm_forward.1} parent=83 // pred_region
          %2509 = vst.msk [vmem:[%s16] sm:$0xff] %vm721, %v2501
          %2510 = vst.msk [vmem:[%s16 + $0x8] sm:$0xff] %vm721, %v2502
          %v2511 = vpack.c.bf16 %v2502, %v2501
          %v2512 = vld [vmem:[%s14] sm:$0xf]
          %v2513 = vld [vmem:[%s14 + $0x4] sm:$0xf]
          %v2514 = vld [vmem:[%s14 + $0x8] sm:$0xf]
          %v2515 = vld [vmem:[%s14 + $0xc] sm:$0xf]
          %v2516 = vld [vmem:[%s15] sm:$0x1]
          %v2518 = vlaneseq
          %v2519 = vshrl.u32 %v2518, 7
          %v2520 = vsub.s32 0, %v2519
          %v2521 = vrot.slane %v2516, %v2520
          %v2527 = vunpack.c.l.b16 %v2512
          %v2528 = vunpack.c.l.b16 %v2513
          %v2529 = vunpack.c.l.b16 %v2514
          %v2530 = vunpack.c.l.b16 %v2515
          %v2531 = vpack.c.b16 %v2528, %v2527
          %v2532 = vpack.c.b16 %v2530, %v2529
          %v2536 = vsel %vm721, %v2511, 0
          %2538 = vmatprep.subr.bf16.mxu0 0
          %2539 = vmatpush1.bf16.msra.mxu0 %v2531
          %2540 = vmatprep.subr.bf16.mxu0 0
          %2541 = vmatpush1.bf16.msra.mxu0 %v2532
          %2542 = vmatprep.subr.bf16.mxu0 0
          %2543 = vmatpush1.bf16.msra.mxu0 0
          %2544 = vmatprep.subr.bf16.mxu0 0
          %2545 = vmatpush1.bf16.msra.mxu0 0
          %2546 = vmatprep.subr.bf16.mxu0 0
          %2547 = vmatpush1.bf16.msra.mxu0 0
          %2548 = vmatprep.subr.bf16.mxu0 0
          %2549 = vmatpush1.bf16.msra.mxu0 0
          %2550 = vmatprep.subr.bf16.mxu0 0
          %2551 = vmatpush1.bf16.msra.mxu0 0
          %2552 = vmatprep.subr.bf16.mxu0 0
          %2553 = vmatpush1.bf16.msra.mxu0 0
          %2554 = vmatprep.subr.bf16.mxu0 0
          %2555 = vmatpush1.bf16.msra.mxu0 0
          %2556 = vmatprep.subr.bf16.mxu0 0
          %2557 = vmatpush1.bf16.msra.mxu0 0
          %2558 = vmatprep.subr.bf16.mxu0 0
          %2559 = vmatpush1.bf16.msra.mxu0 0
          %2560 = vmatprep.subr.bf16.mxu0 0
          %2561 = vmatpush1.bf16.msra.mxu0 0
          %2562 = vmatprep.subr.bf16.mxu0 0
          %2563 = vmatpush1.bf16.msra.mxu0 0
          %2564 = vmatprep.subr.bf16.mxu0 0
          %2565 = vmatpush1.bf16.msra.mxu0 0
          %2566 = vmatprep.subr.bf16.mxu0 0
          %2567 = vmatpush1.bf16.msra.mxu0 0
          %2568 = vmatprep.subr.bf16.mxu0 0
          %2569 = vmatpush1.bf16.msra.mxu0 0
          %2570 = vmatprep.mubr.bf16.mxu0 0
          %2571 = vmatmul.mubr.bf16.gmra.mrb[0].mxu0 %v2536
          %v2572 = vpop.f32.mrb[0].mxu0
          %v2573 = vadd.f32 %v2521, %v2572
          %v2574 = vpop.f32.mrb[0].mxu0
          %v2575 = vpop.f32.mrb[0].mxu0
          %v2576 = vadd.f32 %v2521, %v2575
          %v2577 = vpop.f32.mrb[0].mxu0
          %2578 = vdwg.mxu0
          %2579 = vmax.xlane.f32.xlu0 %v2573
          %v2580 = vpop.xlane.xlu0 %2579
          %2581 = vmax.xlane.f32.xlu0 %v2576
          %v2582 = vpop.xlane.xlu0 %2581
          %v2583 = vsub.f32 %v2573, %v2580
          %v2584 = vsub.f32 %v2576, %v2582
          %v2585 = vmul.f32 %v2583, 1.442695
          %v2586 = vpow.pop %v2585
          %v2587 = vmul.f32 %v2584, 1.442695
          %v2588 = vpow.pop %v2587
          %2589 = vadd.xlane.f32.xlu0 %v2586
          %v2590 = vpop.xlane.xlu0 %2589
          %2591 = vadd.xlane.f32.xlu0 %v2588
          %v2592 = vpop.xlane.xlu0 %2591
          %v2593 = vlog2.pop %v2590
          %v2594 = vmul.f32 %v2593, 0.6931472
          %v2595 = vlog2.pop %v2592
          %v2596 = vmul.f32 %v2595, 0.6931472
          %v2597 = vadd.f32 %v2594, %v2580
          %v2598 = vadd.f32 %v2596, %v2582
          %v2599 = vsub.f32 %v2573, %v2597
          %v2600 = vsub.f32 %v2576, %v2598
          %2601 = vst [vmem:[#allocation3] sm:$0xff] %v2599
          %2602 = vst [vmem:[#allocation3 + $0x8] sm:$0xff] %v2600
        $region92: #{bert_lm_forward.1} parent=83 // pred_fallthru
          _
        // Predicated region
        $region93: #{bert_lm_forward.1} parent=83 // pred_check
          %p2603 = pneg %p439
        $region94: #{bert_lm_forward.1} parent=83 // pred_check_branch
          %2605 = sbr.rel (%p2603) target = $region96
        $region95: #{bert_lm_forward.1} parent=83 // pred_region
          _
        $region96: #{bert_lm_forward.1} parent=83 // pred_fallthru
          _
        // Predicated region
        $region97: #{bert_lm_forward.1} parent=83 // pred_check
          %p2606 = pneg %p460
        $region98: #{bert_lm_forward.1} parent=83 // pred_check_branch
          %2608 = sbr.rel (%p2606) target = $region100
        $region99: #{bert_lm_forward.1} parent=83 // pred_region
          %s2610 = ssub.s32 256, 256
          %2611 = vsyncadd [#allocation4], %s2610
          %s2612 = sshll.u32 [#allocation3], 4
          %s2613 = int_to_ptr.vmem [resolvable:$true] %s2612
          %2618 = dma.vmem_to_hbm [thread:$0]  %s2613, 256, %s17, [#allocation4], 128, 128, 8
        $region100: #{bert_lm_forward.1} parent=83 // pred_fallthru
          _
        // Predicated region
        $region101: #{bert_lm_forward.1} parent=83 // pred_check
          %p2619 = pneg %p439
        $region102: #{bert_lm_forward.1} parent=83 // pred_check_branch
          %2621 = sbr.rel (%p2619) target = $region104
        $region103: #{bert_lm_forward.1} parent=83 // pred_region
          _
        $region104: #{bert_lm_forward.1} parent=83 // pred_fallthru
          _
        // Predicated region
        $region105: #{bert_lm_forward.1} parent=83 // pred_check
          %p2622 = pneg %p460
        $region106: #{bert_lm_forward.1} parent=83 // pred_check_branch
          %2624 = sbr.rel (%p2622) target = $region108
        $region107: #{bert_lm_forward.1} parent=83 // pred_region
          %2625 = dma.done [#allocation4], 256
        $region108: #{bert_lm_forward.1} parent=83 // pred_fallthru
          _
      $region84: #{bert_lm_forward.1} parent=5 // pred_fallthru
        _
      %p2626 = scmp.le.s32.totalorder 2, %s25
      // Predicated region
      $region109: #{bert_lm_forward.1} parent=5 // pred_check
        %p2627 = pneg %p2626
      $region110: #{bert_lm_forward.1} parent=5 // pred_check_branch
        %2629 = sbr.rel (%p2627) target = $region112
      $region111: #{bert_lm_forward.1} parent=5 // pred_region
        %s2630 = ssub.s32 %s25, 2
      $region112: #{bert_lm_forward.1} parent=5 // pred_fallthru
        _
    $region6: #{bert_lm_forward.1} parent=1 // loop_footer
      %s29 = sadd.s32 1, %s25
    $region7: #{bert_lm_forward.1} parent=1 // loop_footer_branch
      %24 = sbr.rel target = $region3
    $region8: #{bert_lm_forward.1} parent=1 // loop_exit
      _
    %2631 = vsyncpa [#allocation4], 1
    %s2632 = scalar_lea.sflag [#allocation4], 1
    %2633 = vsyncpa %s2632, 1

</llo_original>
